<compile_context>
chip_gen: v6e
topology: v6e:2x2x1
jax: 0.10.0
libtpu: 0.0.40
codegen_flags: <defaults>
</compile_context>

<pallas_src>
import functools
import math

import jax
import jax.numpy as jnp
from jax.experimental import pallas as pl
from jax.experimental.pallas import tpu as pltpu

BN_EPS = 1e-5
RELU_LEAK = 0.2
_VMEM_LIMIT_BYTES = 32 * 1024 * 1024  # safe on v5e/v6e/v7x; raise for big tiles on v6e


# ------------------------------- kernel bodies ------------------------------- #

def _conv3x3_act_stats_kernel(x_ref, w_ref, y_ref, stats_ref, *,
                              th, wd, cin, cout, gcu):
    """conv3x3 on one halo'd row tile -> activation -> raw output + partial BN stats.

    x_ref:     (th+2, wd+2, cin) bf16  zero-padded / halo'd input tile
    w_ref:     (9*cin, n_out)    bf16  (n_out = cout, or 2*cout for the fused GCU)
    y_ref:     (th, wd, cout)    f32   un-normalized activation
    stats_ref: (2, cout)         f32   per-tile [sum; sum of squares] over rows
    """
    x = x_ref[...].astype(jnp.float32)           # build patches in f32 layout
    # 9-tap im2col built entirely in VMEM (tap-major / channel-minor, matching the
    # (3,3,cin,cout) -> (9*cin,cout) weight layout).
    taps = [x[dy:dy + th, dx:dx + wd, :] for dy in range(3) for dx in range(3)]
    patches = jnp.concatenate(taps, axis=-1).reshape(th * wd, 9 * cin)
    y = jnp.dot(patches.astype(jnp.bfloat16), w_ref[...],
                preferred_element_type=jnp.float32)   # bf16 MXU, f32 accumulate
    if gcu:
        y = y[:, :cout] * jax.nn.sigmoid(y[:, cout:])  # conv * sigmoid(conv_gate)
    else:
        y = jnp.where(y > 0, y, RELU_LEAK * y)         # LeakyReLU(0.2)
    y_ref[...] = y.reshape(th, wd, cout).astype(y_ref.dtype)
    s = jnp.sum(y, axis=0, keepdims=True)
    ss = jnp.sum(y * y, axis=0, keepdims=True)
    stats_ref[...] = jnp.concatenate([s, ss], axis=0)


def _bn_apply_kernel(y_ref, scale_ref, shift_ref, o_ref):
    """Elementwise y*scale + shift (BatchNorm with precomputed global batch stats)."""
    y = y_ref[...].astype(jnp.float32)
    o_ref[...] = (y * scale_ref[...] + shift_ref[...]).astype(o_ref.dtype)


def _bn_apply_res_kernel(y_ref, scale_ref, shift_ref, res_ref, o_ref):
    """Same as above with the ResBlock residual add fused in."""
    y = y_ref[...].astype(jnp.float32)
    o_ref[...] = (res_ref[...].astype(jnp.float32)
                  + y * scale_ref[...] + shift_ref[...]).astype(o_ref.dtype)


# -------------------------------- host glue ---------------------------------- #

def _choose_tile_h(H, W, cin, cout):
    """Largest divisor of H whose per-tile working set (halo input + VMEM patches +
    f32 raw output, double buffered) fits a conservative budget, with rows per tile
    kept in the measured 512-2048 sweet spot."""
    budget = 6 * 1024 * 1024
    best = 1
    for th in range(1, H + 1):
        if H % th:
            continue
        rows = th * W
        need = (2 * (th + 2) * (W + 2) * cin * 2     # bf16 halo input, x2 buffers
                + rows * 9 * cin * 4                 # in-VMEM patch matrix (f32)
                + 2 * rows * cout * 4                # f32 raw output, x2 buffers
                + 2 * 2 * cout * 4)                  # stats
        if rows <= 2048 and need <= budget:
            best = th
    return best


def _pad_halo(x_nhwc, tile_h):
    """(N,H,W,C) -> (N, H//tile_h, tile_h+2, W+2, C) bf16: conv zero padding plus a
    1-row halo per tile (~(1+2/tile_h)x activation bytes instead of 9x im2col)."""
    N, H, W, C = x_nhwc.shape
    xp = jnp.pad(x_nhwc.astype(jnp.bfloat16), ((0, 0), (1, 1), (1, 1), (0, 0)))
    nt = H // tile_h
    rows = jnp.arange(nt)[:, None] * tile_h + jnp.arange(tile_h + 2)[None, :]
    return xp[:, rows]


def _conv_act_stats(x_halo, w, *, cout, gcu):
    """Pass A: tiled conv3x3 + activation; returns raw activations and partial stats."""
    N, nt, thp2, wp2, cin = x_halo.shape
    th, wd = thp2 - 2, wp2 - 2
    H = nt * th
    rows_total = N * H * wd
    n_out = w.shape[1]
    kernel = functools.partial(_conv3x3_act_stats_kernel,
                               th=th, wd=wd, cin=cin, cout=cout, gcu=gcu)
    cost = pl.CostEstimate(
        flops=2 * rows_total * 9 * cin * n_out + 4 * rows_total * cout,
        transcendentals=rows_total * cout if gcu else 0,
        bytes_accessed=(x_halo.size * 2 + w.size * 2
                        + rows_total * cout * 4 + N * nt * 2 * cout * 4))
    return pl.pallas_call(
        kernel,
        out_shape=(jax.ShapeDtypeStruct((N, H, wd, cout), jnp.float32),
                   jax.ShapeDtypeStruct((N, nt, 2, cout), jnp.float32)),
        grid=(N, nt),
        in_specs=[
            pl.BlockSpec((None, None, thp2, wp2, cin),
                         lambda n, i: (n, i, 0, 0, 0)),
            pl.BlockSpec(w.shape, lambda n, i: (0, 0)),      # grid-invariant weights
        ],
        out_specs=(
            pl.BlockSpec((None, th, wd, cout), lambda n, i: (n, i, 0, 0)),
            pl.BlockSpec((None, None, 2, cout), lambda n, i: (n, i, 0, 0)),
        ),
        compiler_params=pltpu.CompilerParams(
            dimension_semantics=("parallel", "parallel"),
            vmem_limit_bytes=_VMEM_LIMIT_BYTES),
        cost_estimate=cost,
    )(x_halo, w)


def _bn_scale_shift(stats, count, gamma, beta):
    """Tiny host reduction of the per-tile partial stats -> per-channel scale/shift."""
    total = jnp.sum(stats, axis=(0, 1))                 # (2, C) global sums
    mean = total[0] / count
    var = jnp.maximum(total[1] / count - mean * mean, 0.0)   # biased variance
    scale = gamma * jax.lax.rsqrt(var + BN_EPS)         # (1, C)
    shift = beta - mean * scale                         # (1, C)
    return scale.astype(jnp.float32), shift.astype(jnp.float32)


def _bn_apply(y_raw, scale, shift, *, tile_h, out_dtype, res=None):
    """Pass B: tiled elementwise normalize (+ fused residual add for the last stage)."""
    N, H, W, C = y_raw.shape
    nt = H // tile_h
    tile_spec = pl.BlockSpec((None, tile_h, W, C), lambda n, i: (n, i, 0, 0))
    vec_spec = pl.BlockSpec((1, C), lambda n, i: (0, 0))
    cp = pltpu.CompilerParams(dimension_semantics=("parallel", "parallel"),
                              vmem_limit_bytes=_VMEM_LIMIT_BYTES)
    out_shape = jax.ShapeDtypeStruct((N, H, W, C), out_dtype)
    rows_total = N * H * W
    out_bytes = rows_total * C * jnp.dtype(out_dtype).itemsize
    base_bytes = y_raw.size * 4 + 2 * 2 * C * 4
    if res is None:
        cost = pl.CostEstimate(flops=2 * rows_total * C, transcendentals=0,
                               bytes_accessed=base_bytes + out_bytes)
        return pl.pallas_call(
            _bn_apply_kernel, out_shape=out_shape, grid=(N, nt),
            in_specs=[tile_spec, vec_spec, vec_spec], out_specs=tile_spec,
            compiler_params=cp, cost_estimate=cost,
        )(y_raw, scale, shift)
    cost = pl.CostEstimate(flops=3 * rows_total * C, transcendentals=0,
                           bytes_accessed=base_bytes + res.size * 4 + out_bytes)
    return pl.pallas_call(
        _bn_apply_res_kernel, out_shape=out_shape, grid=(N, nt),
        in_specs=[tile_spec, vec_spec, vec_spec, tile_spec], out_specs=tile_spec,
        input_output_aliases={3: 0},            # output reuses the residual buffer
        compiler_params=cp, cost_estimate=cost,
    )(y_raw, scale, shift, res)


# -------------------------------- parameters --------------------------------- #

def init_params(key, in_ch):
    c, c2 = in_ch, 2 * in_ch
    ks = jax.random.split(key, 10)

    def conv_w(k, cin, cout):
        # torch nn.Conv2d weight (cout,cin,3,3) -> (3,3,cin,cout) -> (9*cin, cout),
        # matching the tap-major / channel-minor patch layout built in the kernel.
        std = 1.0 / math.sqrt(cin * 9)
        wt = jax.random.uniform(k, (cout, cin, 3, 3), jnp.float32, -std, std)
        return jnp.transpose(wt, (2, 3, 1, 0)).reshape(9 * cin, cout)

    def bn(kg, kb, ch):
        gamma = 1.0 + 0.1 * jax.random.normal(kg, (1, ch), jnp.float32)
        beta = 0.1 * jax.random.normal(kb, (1, ch), jnp.float32)
        return gamma, beta

    w_gcu = jnp.concatenate([conv_w(ks[3], c2, c), conv_w(ks[4], c2, c)], axis=1)
    return {
        "w1": conv_w(ks[0], c, c2).astype(jnp.bfloat16),
        "bn1": bn(ks[1], ks[2], c2),
        "w_gcu": w_gcu.astype(jnp.bfloat16),          # fused conv || conv_gate
        "bn_gcu": bn(ks[5], ks[6], c),
        "w3": conv_w(ks[7], c, c).astype(jnp.bfloat16),
        "bn3": bn(ks[8], ks[9], c),
    }


# ------------------------------- forward pass --------------------------------- #

def resblock_forward(x_nchw, params, tile_h=None):
    x = jnp.transpose(x_nchw, (0, 2, 3, 1)).astype(jnp.float32)   # NCHW -> NHWC
    N, H, W, C = x.shape
    th = tile_h if tile_h is not None else _choose_tile_h(H, W, 2 * C, 2 * C)
    assert H % th == 0, "tile_h must divide H"
    count = float(N * H * W)

    # --- block[0]: conv3x3 (C -> 2C) + LeakyReLU + BatchNorm ---
    y1, st1 = _conv_act_stats(_pad_halo(x, th), params["w1"], cout=2 * C, gcu=False)
    sc1, sh1 = _bn_scale_shift(st1, count, *params["bn1"])
    h1 = _bn_apply(y1, sc1, sh1, tile_h=th, out_dtype=jnp.bfloat16)

    # --- block[1]: GCU (2C -> C): fused conv/gate matmul, sigmoid gate, BatchNorm ---
    y2, st2 = _conv_act_stats(_pad_halo(h1, th), params["w_gcu"], cout=C, gcu=True)
    sc2, sh2 = _bn_scale_shift(st2, count, *params["bn_gcu"])
    h2 = _bn_apply(y2, sc2, sh2, tile_h=th, out_dtype=jnp.bfloat16)

    # --- block[2]: conv3x3 (C -> C) + LeakyReLU + BatchNorm, fused residual add ---
    y3, st3 = _conv_act_stats(_pad_halo(h2, th), params["w3"], cout=C, gcu=False)
    sc3, sh3 = _bn_scale_shift(st3, count, *params["bn3"])
    out = _bn_apply(y3, sc3, sh3, tile_h=th, out_dtype=jnp.float32, res=x)

    return jnp.transpose(out, (0, 3, 1, 2))                        # NHWC -> NCHW


if __name__ == "__main__":
    key = jax.random.PRNGKey(0)
    kx, kp = jax.random.split(key)

    in_ch = 4
    x = jax.random.normal(kx, (2, in_ch, 16, 16), jnp.float32)     # NCHW, like PyTorch
    params = init_params(kp, in_ch)

    # tile_h=8 -> a (N=2, H/8=2) grid per pass, exercising multi-tile BN stats.
    fwd = jax.jit(functools.partial(resblock_forward, tile_h=8))
    y = fwd(x, params)
    jax.block_until_ready(y)

    assert y.shape == x.shape and y.dtype == jnp.float32
    assert bool(jnp.all(jnp.isfinite(y)))
    print("KERNEL_OK")
</pallas_src>

<mosaic_0001>
module attributes {stable_mosaic.version = 11 : i64} {
  func.func @_bn_apply_kernel(%arg0: i32, %arg1: i32, %arg2: memref<1x8x16x8xf32, #tpu.memory_space<vmem>>, %arg3: memref<1x8xf32, #tpu.memory_space<vmem>>, %arg4: memref<1x8xf32, #tpu.memory_space<vmem>>, %arg5: memref<1x8x16x8xbf16, #tpu.memory_space<vmem>>) attributes {dimension_semantics = [#tpu.dimension_semantics<parallel>, #tpu.dimension_semantics<parallel>], iteration_bounds = array<i64: 2, 2>, scalar_prefetch = 0 : i64, scratch_operands = 0 : i64, tpu.core_type = #tpu.core_type<tc>, window_params = [{transform_indices = @transform_0, window_bounds = array<i64: 1, 8, 16, 8>}, {pipeline_mode = #tpu.pipeline_mode<synchronous>, transform_indices = @transform_1, window_bounds = array<i64: 1, 8>}, {pipeline_mode = #tpu.pipeline_mode<synchronous>, transform_indices = @transform_2, window_bounds = array<i64: 1, 8>}, {transform_indices = @transform_3, window_bounds = array<i64: 1, 8, 16, 8>}]} {
    %c0 = arith.constant 0 : index
    %c0_0 = arith.constant 0 : index
    %c0_1 = arith.constant 0 : index
    %c0_2 = arith.constant 0 : index
    %0 = vector.load %arg2[%c0, %c0_0, %c0_1, %c0_2] : memref<1x8x16x8xf32, #tpu.memory_space<vmem>>, vector<1x8x16x8xf32>
    %1 = vector.shape_cast %0 : vector<1x8x16x8xf32> to vector<8x16x8xf32>
    %c0_3 = arith.constant 0 : index
    %c0_4 = arith.constant 0 : index
    %2 = vector.load %arg3[%c0_3, %c0_4] : memref<1x8xf32, #tpu.memory_space<vmem>>, vector<1x8xf32>
    %3 = vector.shape_cast %2 : vector<1x8xf32> to vector<1x1x8xf32>
    %4 = vector.broadcast %3 : vector<1x1x8xf32> to vector<8x16x8xf32>
    %5 = arith.mulf %1, %4 : vector<8x16x8xf32>
    %c0_5 = arith.constant 0 : index
    %c0_6 = arith.constant 0 : index
    %6 = vector.load %arg4[%c0_5, %c0_6] : memref<1x8xf32, #tpu.memory_space<vmem>>, vector<1x8xf32>
    %7 = vector.shape_cast %6 : vector<1x8xf32> to vector<1x1x8xf32>
    %8 = vector.broadcast %7 : vector<1x1x8xf32> to vector<8x16x8xf32>
    %9 = arith.addf %5, %8 : vector<8x16x8xf32>
    %10 = arith.truncf %9 : vector<8x16x8xf32> to vector<8x16x8xbf16>
    %c0_7 = arith.constant 0 : index
    %c0_8 = arith.constant 0 : index
    %c0_9 = arith.constant 0 : index
    %c0_10 = arith.constant 0 : index
    %11 = vector.load %arg5[%c0_7, %c0_8, %c0_9, %c0_10] : memref<1x8x16x8xbf16, #tpu.memory_space<vmem>>, vector<1x8x16x8xbf16>
    %12 = vector.shape_cast %11 : vector<1x8x16x8xbf16> to vector<8x16x8xbf16>
    %13 = vector.shape_cast %10 : vector<8x16x8xbf16> to vector<1x8x16x8xbf16>
    tpu.vector_store %arg5[%c0_7, %c0_8, %c0_9, %c0_10], %13 {strides = array<i32>} : memref<1x8x16x8xbf16, #tpu.memory_space<vmem>>, vector<1x8x16x8xbf16>,
    return
  }
  func.func @transform_0(%arg0: i32, %arg1: i32) -> (i32, i32, i32, i32) {
    %c0_i32 = arith.constant 0 : i32
    %c0_i32_0 = arith.constant 0 : i32
    %c0_i32_1 = arith.constant 0 : i32
    return %arg0, %arg1, %c0_i32, %c0_i32_0 : i32, i32, i32, i32
  }
  func.func @transform_1(%arg0: i32, %arg1: i32) -> (i32, i32) {
    %c0_i32 = arith.constant 0 : i32
    %c0_i32_0 = arith.constant 0 : i32
    %c0_i32_1 = arith.constant 0 : i32
    return %c0_i32, %c0_i32_0 : i32, i32
  }
  func.func @transform_2(%arg0: i32, %arg1: i32) -> (i32, i32) {
    %c0_i32 = arith.constant 0 : i32
    %c0_i32_0 = arith.constant 0 : i32
    %c0_i32_1 = arith.constant 0 : i32
    return %c0_i32, %c0_i32_0 : i32, i32
  }
  func.func @transform_3(%arg0: i32, %arg1: i32) -> (i32, i32, i32, i32) {
    %c0_i32 = arith.constant 0 : i32
    %c0_i32_0 = arith.constant 0 : i32
    %c0_i32_1 = arith.constant 0 : i32
    return %arg0, %arg1, %c0_i32, %c0_i32_0 : i32, i32, i32, i32
  }
}

module attributes {stable_mosaic.version = 11 : i64} {
  func.func @_conv3x3_act_stats_kernel(%arg0: i32, %arg1: i32, %arg2: memref<1x1x10x18x4xbf16, #tpu.memory_space<vmem>>, %arg3: memref<36x8xbf16, #tpu.memory_space<vmem>>, %arg4: memref<1x8x16x8xf32, #tpu.memory_space<vmem>>, %arg5: memref<1x1x2x8xf32, #tpu.memory_space<vmem>>) attributes {dimension_semantics = [#tpu.dimension_semantics<parallel>, #tpu.dimension_semantics<parallel>], iteration_bounds = array<i64: 2, 2>, scalar_prefetch = 0 : i64, scratch_operands = 0 : i64, tpu.core_type = #tpu.core_type<tc>, window_params = [{transform_indices = @transform_0, window_bounds = array<i64: 1, 1, 10, 18, 4>}, {pipeline_mode = #tpu.pipeline_mode<synchronous>, transform_indices = @transform_1, window_bounds = array<i64: 36, 8>}, {transform_indices = @transform_2, window_bounds = array<i64: 1, 8, 16, 8>}, {transform_indices = @transform_3, window_bounds = array<i64: 1, 1, 2, 8>}]} {
    %c0 = arith.constant 0 : index
    %c0_0 = arith.constant 0 : index
    %c0_1 = arith.constant 0 : index
    %c0_2 = arith.constant 0 : index
    %c0_3 = arith.constant 0 : index
    %0 = vector.load %arg2[%c0, %c0_0, %c0_1, %c0_2, %c0_3] : memref<1x1x10x18x4xbf16, #tpu.memory_space<vmem>>, vector<1x1x10x18x4xbf16>
    %1 = vector.shape_cast %0 : vector<1x1x10x18x4xbf16> to vector<10x18x4xbf16>
    %2 = arith.extf %1 : vector<10x18x4xbf16> to vector<10x18x4xf32>
    %3 = vector.extract_strided_slice %2 {offsets = [0, 0, 0], sizes = [8, 16, 4], strides = [1, 1, 1]} : vector<10x18x4xf32> to vector<8x16x4xf32>
    %4 = vector.extract_strided_slice %2 {offsets = [0, 1, 0], sizes = [8, 16, 4], strides = [1, 1, 1]} : vector<10x18x4xf32> to vector<8x16x4xf32>
    %5 = vector.extract_strided_slice %2 {offsets = [0, 2, 0], sizes = [8, 16, 4], strides = [1, 1, 1]} : vector<10x18x4xf32> to vector<8x16x4xf32>
    %6 = vector.extract_strided_slice %2 {offsets = [1, 0, 0], sizes = [8, 16, 4], strides = [1, 1, 1]} : vector<10x18x4xf32> to vector<8x16x4xf32>
    %7 = vector.extract_strided_slice %2 {offsets = [1, 1, 0], sizes = [8, 16, 4], strides = [1, 1, 1]} : vector<10x18x4xf32> to vector<8x16x4xf32>
    %8 = vector.extract_strided_slice %2 {offsets = [1, 2, 0], sizes = [8, 16, 4], strides = [1, 1, 1]} : vector<10x18x4xf32> to vector<8x16x4xf32>
    %9 = vector.extract_strided_slice %2 {offsets = [2, 0, 0], sizes = [8, 16, 4], strides = [1, 1, 1]} : vector<10x18x4xf32> to vector<8x16x4xf32>
    %10 = vector.extract_strided_slice %2 {offsets = [2, 1, 0], sizes = [8, 16, 4], strides = [1, 1, 1]} : vector<10x18x4xf32> to vector<8x16x4xf32>
    %11 = vector.extract_strided_slice %2 {offsets = [2, 2, 0], sizes = [8, 16, 4], strides = [1, 1, 1]} : vector<10x18x4xf32> to vector<8x16x4xf32>
    %12 = tpu.concatenate %3, %4, %5, %6, %7, %8, %9, %10, %11 in 2 : vector<8x16x4xf32>, vector<8x16x4xf32>, vector<8x16x4xf32>, vector<8x16x4xf32>, vector<8x16x4xf32>, vector<8x16x4xf32>, vector<8x16x4xf32>, vector<8x16x4xf32>, vector<8x16x4xf32> -> vector<8x16x36xf32>
    %13 = vector.shape_cast %12 : vector<8x16x36xf32> to vector<128x36xf32>
    %14 = arith.truncf %13 : vector<128x36xf32> to vector<128x36xbf16>
    %c0_4 = arith.constant 0 : index
    %c0_5 = arith.constant 0 : index
    %15 = vector.load %arg3[%c0_4, %c0_5] : memref<36x8xbf16, #tpu.memory_space<vmem>>, vector<36x8xbf16>
    %cst = arith.constant dense<0.000000e+00> : vector<128x8xf32>
    %16 = tpu.matmul %14, %15, %cst {dimension_numbers = #tpu.dot_dimension_numbers<[1], [0], [0], [1], [0, 0, 1, 1], [], []>} : vector<128x36xbf16>, vector<36x8xbf16>, vector<128x8xf32> -> vector<128x8xf32>
    %cst_6 = arith.constant 0.000000e+00 : f32
    %17 = vector.broadcast %cst_6 : f32 to vector<128x8xf32>
    %18 = arith.cmpf ogt, %16, %17 : vector<128x8xf32>
    %cst_7 = arith.constant 2.000000e-01 : f32
    %19 = vector.broadcast %cst_7 : f32 to vector<128x8xf32>
    %20 = arith.mulf %19, %16 : vector<128x8xf32>
    %21 = arith.select %18, %16, %20 : vector<128x8xi1>, vector<128x8xf32>
    %22 = vector.shape_cast %21 : vector<128x8xf32> to vector<8x16x8xf32>
    %c0_8 = arith.constant 0 : index
    %c0_9 = arith.constant 0 : index
    %c0_10 = arith.constant 0 : index
    %c0_11 = arith.constant 0 : index
    %23 = vector.load %arg4[%c0_8, %c0_9, %c0_10, %c0_11] : memref<1x8x16x8xf32, #tpu.memory_space<vmem>>, vector<1x8x16x8xf32>
    %24 = vector.shape_cast %23 : vector<1x8x16x8xf32> to vector<8x16x8xf32>
    %25 = vector.shape_cast %22 : vector<8x16x8xf32> to vector<1x8x16x8xf32>
    tpu.vector_store %arg4[%c0_8, %c0_9, %c0_10, %c0_11], %25 {strides = array<i32>} : memref<1x8x16x8xf32, #tpu.memory_space<vmem>>, vector<1x8x16x8xf32>,
    %cst_12 = arith.constant dense<0.000000e+00> : vector<8xf32>
    %26 = vector.multi_reduction <add>, %21, %cst_12 [0] : vector<128x8xf32> to vector<8xf32>
    %27 = vector.shape_cast %26 : vector<8xf32> to vector<1x8xf32>
    %28 = arith.mulf %21, %21 : vector<128x8xf32>
    %cst_13 = arith.constant dense<0.000000e+00> : vector<8xf32>
    %29 = vector.multi_reduction <add>, %28, %cst_13 [0] : vector<128x8xf32> to vector<8xf32>
    %30 = vector.shape_cast %29 : vector<8xf32> to vector<1x8xf32>
    %31 = tpu.concatenate %27, %30 in 0 : vector<1x8xf32>, vector<1x8xf32> -> vector<2x8xf32>
    %c0_14 = arith.constant 0 : index
    %c0_15 = arith.constant 0 : index
    %c0_16 = arith.constant 0 : index
    %c0_17 = arith.constant 0 : index
    %32 = vector.load %arg5[%c0_14, %c0_15, %c0_16, %c0_17] : memref<1x1x2x8xf32, #tpu.memory_space<vmem>>, vector<1x1x2x8xf32>
    %33 = vector.shape_cast %32 : vector<1x1x2x8xf32> to vector<2x8xf32>
    %34 = vector.shape_cast %31 : vector<2x8xf32> to vector<1x1x2x8xf32>
    tpu.vector_store %arg5[%c0_14, %c0_15, %c0_16, %c0_17], %34 {strides = array<i32>} : memref<1x1x2x8xf32, #tpu.memory_space<vmem>>, vector<1x1x2x8xf32>,
    return
  }
  func.func @transform_0(%arg0: i32, %arg1: i32) -> (i32, i32, i32, i32, i32) {
    %c0_i32 = arith.constant 0 : i32
    %c0_i32_0 = arith.constant 0 : i32
    %c0_i32_1 = arith.constant 0 : i32
    %c0_i32_2 = arith.constant 0 : i32
    return %arg0, %arg1, %c0_i32, %c0_i32_0, %c0_i32_1 : i32, i32, i32, i32, i32
  }
  func.func @transform_1(%arg0: i32, %arg1: i32) -> (i32, i32) {
    %c0_i32 = arith.constant 0 : i32
    %c0_i32_0 = arith.constant 0 : i32
    %c0_i32_1 = arith.constant 0 : i32
    return %c0_i32, %c0_i32_0 : i32, i32
  }
  func.func @transform_2(%arg0: i32, %arg1: i32) -> (i32, i32, i32, i32) {
    %c0_i32 = arith.constant 0 : i32
    %c0_i32_0 = arith.constant 0 : i32
    %c0_i32_1 = arith.constant 0 : i32
    return %arg0, %arg1, %c0_i32, %c0_i32_0 : i32, i32, i32, i32
  }
  func.func @transform_3(%arg0: i32, %arg1: i32) -> (i32, i32, i32, i32) {
    %c0_i32 = arith.constant 0 : i32
    %c0_i32_0 = arith.constant 0 : i32
    %c0_i32_1 = arith.constant 0 : i32
    return %arg0, %arg1, %c0_i32, %c0_i32_0 : i32, i32, i32, i32
  }
}

module attributes {stable_mosaic.version = 11 : i64} {
  func.func @_conv3x3_act_stats_kernel(%arg0: i32, %arg1: i32, %arg2: memref<1x1x10x18x8xbf16, #tpu.memory_space<vmem>>, %arg3: memref<72x8xbf16, #tpu.memory_space<vmem>>, %arg4: memref<1x8x16x4xf32, #tpu.memory_space<vmem>>, %arg5: memref<1x1x2x4xf32, #tpu.memory_space<vmem>>) attributes {dimension_semantics = [#tpu.dimension_semantics<parallel>, #tpu.dimension_semantics<parallel>], iteration_bounds = array<i64: 2, 2>, scalar_prefetch = 0 : i64, scratch_operands = 0 : i64, tpu.core_type = #tpu.core_type<tc>, window_params = [{transform_indices = @transform_0, window_bounds = array<i64: 1, 1, 10, 18, 8>}, {pipeline_mode = #tpu.pipeline_mode<synchronous>, transform_indices = @transform_1, window_bounds = array<i64: 72, 8>}, {transform_indices = @transform_2, window_bounds = array<i64: 1, 8, 16, 4>}, {transform_indices = @transform_3, window_bounds = array<i64: 1, 1, 2, 4>}]} {
    %c0 = arith.constant 0 : index
    %c0_0 = arith.constant 0 : index
    %c0_1 = arith.constant 0 : index
    %c0_2 = arith.constant 0 : index
    %c0_3 = arith.constant 0 : index
    %0 = vector.load %arg2[%c0, %c0_0, %c0_1, %c0_2, %c0_3] : memref<1x1x10x18x8xbf16, #tpu.memory_space<vmem>>, vector<1x1x10x18x8xbf16>
    %1 = vector.shape_cast %0 : vector<1x1x10x18x8xbf16> to vector<10x18x8xbf16>
    %2 = arith.extf %1 : vector<10x18x8xbf16> to vector<10x18x8xf32>
    %3 = vector.extract_strided_slice %2 {offsets = [0, 0, 0], sizes = [8, 16, 8], strides = [1, 1, 1]} : vector<10x18x8xf32> to vector<8x16x8xf32>
    %4 = vector.extract_strided_slice %2 {offsets = [0, 1, 0], sizes = [8, 16, 8], strides = [1, 1, 1]} : vector<10x18x8xf32> to vector<8x16x8xf32>
    %5 = vector.extract_strided_slice %2 {offsets = [0, 2, 0], sizes = [8, 16, 8], strides = [1, 1, 1]} : vector<10x18x8xf32> to vector<8x16x8xf32>
    %6 = vector.extract_strided_slice %2 {offsets = [1, 0, 0], sizes = [8, 16, 8], strides = [1, 1, 1]} : vector<10x18x8xf32> to vector<8x16x8xf32>
    %7 = vector.extract_strided_slice %2 {offsets = [1, 1, 0], sizes = [8, 16, 8], strides = [1, 1, 1]} : vector<10x18x8xf32> to vector<8x16x8xf32>
    %8 = vector.extract_strided_slice %2 {offsets = [1, 2, 0], sizes = [8, 16, 8], strides = [1, 1, 1]} : vector<10x18x8xf32> to vector<8x16x8xf32>
    %9 = vector.extract_strided_slice %2 {offsets = [2, 0, 0], sizes = [8, 16, 8], strides = [1, 1, 1]} : vector<10x18x8xf32> to vector<8x16x8xf32>
    %10 = vector.extract_strided_slice %2 {offsets = [2, 1, 0], sizes = [8, 16, 8], strides = [1, 1, 1]} : vector<10x18x8xf32> to vector<8x16x8xf32>
    %11 = vector.extract_strided_slice %2 {offsets = [2, 2, 0], sizes = [8, 16, 8], strides = [1, 1, 1]} : vector<10x18x8xf32> to vector<8x16x8xf32>
    %12 = tpu.concatenate %3, %4, %5, %6, %7, %8, %9, %10, %11 in 2 : vector<8x16x8xf32>, vector<8x16x8xf32>, vector<8x16x8xf32>, vector<8x16x8xf32>, vector<8x16x8xf32>, vector<8x16x8xf32>, vector<8x16x8xf32>, vector<8x16x8xf32>, vector<8x16x8xf32> -> vector<8x16x72xf32>
    %13 = vector.shape_cast %12 : vector<8x16x72xf32> to vector<128x72xf32>
    %14 = arith.truncf %13 : vector<128x72xf32> to vector<128x72xbf16>
    %c0_4 = arith.constant 0 : index
    %c0_5 = arith.constant 0 : index
    %15 = vector.load %arg3[%c0_4, %c0_5] : memref<72x8xbf16, #tpu.memory_space<vmem>>, vector<72x8xbf16>
    %cst = arith.constant dense<0.000000e+00> : vector<128x8xf32>
    %16 = tpu.matmul %14, %15, %cst {dimension_numbers = #tpu.dot_dimension_numbers<[1], [0], [0], [1], [0, 0, 1, 1], [], []>} : vector<128x72xbf16>, vector<72x8xbf16>, vector<128x8xf32> -> vector<128x8xf32>
    %17 = vector.extract_strided_slice %16 {offsets = [0, 0], sizes = [128, 4], strides = [1, 1]} : vector<128x8xf32> to vector<128x4xf32>
    %18 = vector.extract_strided_slice %16 {offsets = [0, 4], sizes = [128, 4], strides = [1, 1]} : vector<128x8xf32> to vector<128x4xf32>
    %19 = arith.negf %18 : vector<128x4xf32>
    %20 = math.exp %19 : vector<128x4xf32>
    %cst_6 = arith.constant 1.000000e+00 : f32
    %21 = vector.broadcast %cst_6 : f32 to vector<128x4xf32>
    %22 = arith.addf %21, %20 : vector<128x4xf32>
    %23 = arith.divf %21, %22 : vector<128x4xf32>
    %24 = arith.mulf %17, %23 : vector<128x4xf32>
    %25 = vector.shape_cast %24 : vector<128x4xf32> to vector<8x16x4xf32>
    %c0_7 = arith.constant 0 : index
    %c0_8 = arith.constant 0 : index
    %c0_9 = arith.constant 0 : index
    %c0_10 = arith.constant 0 : index
    %26 = vector.load %arg4[%c0_7, %c0_8, %c0_9, %c0_10] : memref<1x8x16x4xf32, #tpu.memory_space<vmem>>, vector<1x8x16x4xf32>
    %27 = vector.shape_cast %26 : vector<1x8x16x4xf32> to vector<8x16x4xf32>
    %28 = vector.shape_cast %25 : vector<8x16x4xf32> to vector<1x8x16x4xf32>
    tpu.vector_store %arg4[%c0_7, %c0_8, %c0_9, %c0_10], %28 {strides = array<i32>} : memref<1x8x16x4xf32, #tpu.memory_space<vmem>>, vector<1x8x16x4xf32>,
    %cst_11 = arith.constant dense<0.000000e+00> : vector<4xf32>
    %29 = vector.multi_reduction <add>, %24, %cst_11 [0] : vector<128x4xf32> to vector<4xf32>
    %30 = vector.shape_cast %29 : vector<4xf32> to vector<1x4xf32>
    %31 = arith.mulf %24, %24 : vector<128x4xf32>
    %cst_12 = arith.constant dense<0.000000e+00> : vector<4xf32>
    %32 = vector.multi_reduction <add>, %31, %cst_12 [0] : vector<128x4xf32> to vector<4xf32>
    %33 = vector.shape_cast %32 : vector<4xf32> to vector<1x4xf32>
    %34 = tpu.concatenate %30, %33 in 0 : vector<1x4xf32>, vector<1x4xf32> -> vector<2x4xf32>
    %c0_13 = arith.constant 0 : index
    %c0_14 = arith.constant 0 : index
    %c0_15 = arith.constant 0 : index
    %c0_16 = arith.constant 0 : index
    %35 = vector.load %arg5[%c0_13, %c0_14, %c0_15, %c0_16] : memref<1x1x2x4xf32, #tpu.memory_space<vmem>>, vector<1x1x2x4xf32>
    %36 = vector.shape_cast %35 : vector<1x1x2x4xf32> to vector<2x4xf32>
    %37 = vector.shape_cast %34 : vector<2x4xf32> to vector<1x1x2x4xf32>
    tpu.vector_store %arg5[%c0_13, %c0_14, %c0_15, %c0_16], %37 {strides = array<i32>} : memref<1x1x2x4xf32, #tpu.memory_space<vmem>>, vector<1x1x2x4xf32>,
    return
  }
  func.func @transform_0(%arg0: i32, %arg1: i32) -> (i32, i32, i32, i32, i32) {
    %c0_i32 = arith.constant 0 : i32
    %c0_i32_0 = arith.constant 0 : i32
    %c0_i32_1 = arith.constant 0 : i32
    %c0_i32_2 = arith.constant 0 : i32
    return %arg0, %arg1, %c0_i32, %c0_i32_0, %c0_i32_1 : i32, i32, i32, i32, i32
  }
  func.func @transform_1(%arg0: i32, %arg1: i32) -> (i32, i32) {
    %c0_i32 = arith.constant 0 : i32
    %c0_i32_0 = arith.constant 0 : i32
    %c0_i32_1 = arith.constant 0 : i32
    return %c0_i32, %c0_i32_0 : i32, i32
  }
  func.func @transform_2(%arg0: i32, %arg1: i32) -> (i32, i32, i32, i32) {
    %c0_i32 = arith.constant 0 : i32
    %c0_i32_0 = arith.constant 0 : i32
    %c0_i32_1 = arith.constant 0 : i32
    return %arg0, %arg1, %c0_i32, %c0_i32_0 : i32, i32, i32, i32
  }
  func.func @transform_3(%arg0: i32, %arg1: i32) -> (i32, i32, i32, i32) {
    %c0_i32 = arith.constant 0 : i32
    %c0_i32_0 = arith.constant 0 : i32
    %c0_i32_1 = arith.constant 0 : i32
    return %arg0, %arg1, %c0_i32, %c0_i32_0 : i32, i32, i32, i32
  }
}

module attributes {stable_mosaic.version = 11 : i64} {
  func.func @_bn_apply_kernel(%arg0: i32, %arg1: i32, %arg2: memref<1x8x16x4xf32, #tpu.memory_space<vmem>>, %arg3: memref<1x4xf32, #tpu.memory_space<vmem>>, %arg4: memref<1x4xf32, #tpu.memory_space<vmem>>, %arg5: memref<1x8x16x4xbf16, #tpu.memory_space<vmem>>) attributes {dimension_semantics = [#tpu.dimension_semantics<parallel>, #tpu.dimension_semantics<parallel>], iteration_bounds = array<i64: 2, 2>, scalar_prefetch = 0 : i64, scratch_operands = 0 : i64, tpu.core_type = #tpu.core_type<tc>, window_params = [{transform_indices = @transform_0, window_bounds = array<i64: 1, 8, 16, 4>}, {pipeline_mode = #tpu.pipeline_mode<synchronous>, transform_indices = @transform_1, window_bounds = array<i64: 1, 4>}, {pipeline_mode = #tpu.pipeline_mode<synchronous>, transform_indices = @transform_2, window_bounds = array<i64: 1, 4>}, {transform_indices = @transform_3, window_bounds = array<i64: 1, 8, 16, 4>}]} {
    %c0 = arith.constant 0 : index
    %c0_0 = arith.constant 0 : index
    %c0_1 = arith.constant 0 : index
    %c0_2 = arith.constant 0 : index
    %0 = vector.load %arg2[%c0, %c0_0, %c0_1, %c0_2] : memref<1x8x16x4xf32, #tpu.memory_space<vmem>>, vector<1x8x16x4xf32>
    %1 = vector.shape_cast %0 : vector<1x8x16x4xf32> to vector<8x16x4xf32>
    %c0_3 = arith.constant 0 : index
    %c0_4 = arith.constant 0 : index
    %2 = vector.load %arg3[%c0_3, %c0_4] : memref<1x4xf32, #tpu.memory_space<vmem>>, vector<1x4xf32>
    %3 = vector.shape_cast %2 : vector<1x4xf32> to vector<1x1x4xf32>
    %4 = vector.broadcast %3 : vector<1x1x4xf32> to vector<8x16x4xf32>
    %5 = arith.mulf %1, %4 : vector<8x16x4xf32>
    %c0_5 = arith.constant 0 : index
    %c0_6 = arith.constant 0 : index
    %6 = vector.load %arg4[%c0_5, %c0_6] : memref<1x4xf32, #tpu.memory_space<vmem>>, vector<1x4xf32>
    %7 = vector.shape_cast %6 : vector<1x4xf32> to vector<1x1x4xf32>
    %8 = vector.broadcast %7 : vector<1x1x4xf32> to vector<8x16x4xf32>
    %9 = arith.addf %5, %8 : vector<8x16x4xf32>
    %10 = arith.truncf %9 : vector<8x16x4xf32> to vector<8x16x4xbf16>
    %c0_7 = arith.constant 0 : index
    %c0_8 = arith.constant 0 : index
    %c0_9 = arith.constant 0 : index
    %c0_10 = arith.constant 0 : index
    %11 = vector.load %arg5[%c0_7, %c0_8, %c0_9, %c0_10] : memref<1x8x16x4xbf16, #tpu.memory_space<vmem>>, vector<1x8x16x4xbf16>
    %12 = vector.shape_cast %11 : vector<1x8x16x4xbf16> to vector<8x16x4xbf16>
    %13 = vector.shape_cast %10 : vector<8x16x4xbf16> to vector<1x8x16x4xbf16>
    tpu.vector_store %arg5[%c0_7, %c0_8, %c0_9, %c0_10], %13 {strides = array<i32>} : memref<1x8x16x4xbf16, #tpu.memory_space<vmem>>, vector<1x8x16x4xbf16>,
    return
  }
  func.func @transform_0(%arg0: i32, %arg1: i32) -> (i32, i32, i32, i32) {
    %c0_i32 = arith.constant 0 : i32
    %c0_i32_0 = arith.constant 0 : i32
    %c0_i32_1 = arith.constant 0 : i32
    return %arg0, %arg1, %c0_i32, %c0_i32_0 : i32, i32, i32, i32
  }
  func.func @transform_1(%arg0: i32, %arg1: i32) -> (i32, i32) {
    %c0_i32 = arith.constant 0 : i32
    %c0_i32_0 = arith.constant 0 : i32
    %c0_i32_1 = arith.constant 0 : i32
    return %c0_i32, %c0_i32_0 : i32, i32
  }
  func.func @transform_2(%arg0: i32, %arg1: i32) -> (i32, i32) {
    %c0_i32 = arith.constant 0 : i32
    %c0_i32_0 = arith.constant 0 : i32
    %c0_i32_1 = arith.constant 0 : i32
    return %c0_i32, %c0_i32_0 : i32, i32
  }
  func.func @transform_3(%arg0: i32, %arg1: i32) -> (i32, i32, i32, i32) {
    %c0_i32 = arith.constant 0 : i32
    %c0_i32_0 = arith.constant 0 : i32
    %c0_i32_1 = arith.constant 0 : i32
    return %arg0, %arg1, %c0_i32, %c0_i32_0 : i32, i32, i32, i32
  }
}

module attributes {stable_mosaic.version = 11 : i64} {
  func.func @_conv3x3_act_stats_kernel(%arg0: i32, %arg1: i32, %arg2: memref<1x1x10x18x4xbf16, #tpu.memory_space<vmem>>, %arg3: memref<36x4xbf16, #tpu.memory_space<vmem>>, %arg4: memref<1x8x16x4xf32, #tpu.memory_space<vmem>>, %arg5: memref<1x1x2x4xf32, #tpu.memory_space<vmem>>) attributes {dimension_semantics = [#tpu.dimension_semantics<parallel>, #tpu.dimension_semantics<parallel>], iteration_bounds = array<i64: 2, 2>, scalar_prefetch = 0 : i64, scratch_operands = 0 : i64, tpu.core_type = #tpu.core_type<tc>, window_params = [{transform_indices = @transform_0, window_bounds = array<i64: 1, 1, 10, 18, 4>}, {pipeline_mode = #tpu.pipeline_mode<synchronous>, transform_indices = @transform_1, window_bounds = array<i64: 36, 4>}, {transform_indices = @transform_2, window_bounds = array<i64: 1, 8, 16, 4>}, {transform_indices = @transform_3, window_bounds = array<i64: 1, 1, 2, 4>}]} {
    %c0 = arith.constant 0 : index
    %c0_0 = arith.constant 0 : index
    %c0_1 = arith.constant 0 : index
    %c0_2 = arith.constant 0 : index
    %c0_3 = arith.constant 0 : index
    %0 = vector.load %arg2[%c0, %c0_0, %c0_1, %c0_2, %c0_3] : memref<1x1x10x18x4xbf16, #tpu.memory_space<vmem>>, vector<1x1x10x18x4xbf16>
    %1 = vector.shape_cast %0 : vector<1x1x10x18x4xbf16> to vector<10x18x4xbf16>
    %2 = arith.extf %1 : vector<10x18x4xbf16> to vector<10x18x4xf32>
    %3 = vector.extract_strided_slice %2 {offsets = [0, 0, 0], sizes = [8, 16, 4], strides = [1, 1, 1]} : vector<10x18x4xf32> to vector<8x16x4xf32>
    %4 = vector.extract_strided_slice %2 {offsets = [0, 1, 0], sizes = [8, 16, 4], strides = [1, 1, 1]} : vector<10x18x4xf32> to vector<8x16x4xf32>
    %5 = vector.extract_strided_slice %2 {offsets = [0, 2, 0], sizes = [8, 16, 4], strides = [1, 1, 1]} : vector<10x18x4xf32> to vector<8x16x4xf32>
    %6 = vector.extract_strided_slice %2 {offsets = [1, 0, 0], sizes = [8, 16, 4], strides = [1, 1, 1]} : vector<10x18x4xf32> to vector<8x16x4xf32>
    %7 = vector.extract_strided_slice %2 {offsets = [1, 1, 0], sizes = [8, 16, 4], strides = [1, 1, 1]} : vector<10x18x4xf32> to vector<8x16x4xf32>
    %8 = vector.extract_strided_slice %2 {offsets = [1, 2, 0], sizes = [8, 16, 4], strides = [1, 1, 1]} : vector<10x18x4xf32> to vector<8x16x4xf32>
    %9 = vector.extract_strided_slice %2 {offsets = [2, 0, 0], sizes = [8, 16, 4], strides = [1, 1, 1]} : vector<10x18x4xf32> to vector<8x16x4xf32>
    %10 = vector.extract_strided_slice %2 {offsets = [2, 1, 0], sizes = [8, 16, 4], strides = [1, 1, 1]} : vector<10x18x4xf32> to vector<8x16x4xf32>
    %11 = vector.extract_strided_slice %2 {offsets = [2, 2, 0], sizes = [8, 16, 4], strides = [1, 1, 1]} : vector<10x18x4xf32> to vector<8x16x4xf32>
    %12 = tpu.concatenate %3, %4, %5, %6, %7, %8, %9, %10, %11 in 2 : vector<8x16x4xf32>, vector<8x16x4xf32>, vector<8x16x4xf32>, vector<8x16x4xf32>, vector<8x16x4xf32>, vector<8x16x4xf32>, vector<8x16x4xf32>, vector<8x16x4xf32>, vector<8x16x4xf32> -> vector<8x16x36xf32>
    %13 = vector.shape_cast %12 : vector<8x16x36xf32> to vector<128x36xf32>
    %14 = arith.truncf %13 : vector<128x36xf32> to vector<128x36xbf16>
    %c0_4 = arith.constant 0 : index
    %c0_5 = arith.constant 0 : index
    %15 = vector.load %arg3[%c0_4, %c0_5] : memref<36x4xbf16, #tpu.memory_space<vmem>>, vector<36x4xbf16>
    %cst = arith.constant dense<0.000000e+00> : vector<128x4xf32>
    %16 = tpu.matmul %14, %15, %cst {dimension_numbers = #tpu.dot_dimension_numbers<[1], [0], [0], [1], [0, 0, 1, 1], [], []>} : vector<128x36xbf16>, vector<36x4xbf16>, vector<128x4xf32> -> vector<128x4xf32>
    %cst_6 = arith.constant 0.000000e+00 : f32
    %17 = vector.broadcast %cst_6 : f32 to vector<128x4xf32>
    %18 = arith.cmpf ogt, %16, %17 : vector<128x4xf32>
    %cst_7 = arith.constant 2.000000e-01 : f32
    %19 = vector.broadcast %cst_7 : f32 to vector<128x4xf32>
    %20 = arith.mulf %19, %16 : vector<128x4xf32>
    %21 = arith.select %18, %16, %20 : vector<128x4xi1>, vector<128x4xf32>
    %22 = vector.shape_cast %21 : vector<128x4xf32> to vector<8x16x4xf32>
    %c0_8 = arith.constant 0 : index
    %c0_9 = arith.constant 0 : index
    %c0_10 = arith.constant 0 : index
    %c0_11 = arith.constant 0 : index
    %23 = vector.load %arg4[%c0_8, %c0_9, %c0_10, %c0_11] : memref<1x8x16x4xf32, #tpu.memory_space<vmem>>, vector<1x8x16x4xf32>
    %24 = vector.shape_cast %23 : vector<1x8x16x4xf32> to vector<8x16x4xf32>
    %25 = vector.shape_cast %22 : vector<8x16x4xf32> to vector<1x8x16x4xf32>
    tpu.vector_store %arg4[%c0_8, %c0_9, %c0_10, %c0_11], %25 {strides = array<i32>} : memref<1x8x16x4xf32, #tpu.memory_space<vmem>>, vector<1x8x16x4xf32>,
    %cst_12 = arith.constant dense<0.000000e+00> : vector<4xf32>
    %26 = vector.multi_reduction <add>, %21, %cst_12 [0] : vector<128x4xf32> to vector<4xf32>
    %27 = vector.shape_cast %26 : vector<4xf32> to vector<1x4xf32>
    %28 = arith.mulf %21, %21 : vector<128x4xf32>
    %cst_13 = arith.constant dense<0.000000e+00> : vector<4xf32>
    %29 = vector.multi_reduction <add>, %28, %cst_13 [0] : vector<128x4xf32> to vector<4xf32>
    %30 = vector.shape_cast %29 : vector<4xf32> to vector<1x4xf32>
    %31 = tpu.concatenate %27, %30 in 0 : vector<1x4xf32>, vector<1x4xf32> -> vector<2x4xf32>
    %c0_14 = arith.constant 0 : index
    %c0_15 = arith.constant 0 : index
    %c0_16 = arith.constant 0 : index
    %c0_17 = arith.constant 0 : index
    %32 = vector.load %arg5[%c0_14, %c0_15, %c0_16, %c0_17] : memref<1x1x2x4xf32, #tpu.memory_space<vmem>>, vector<1x1x2x4xf32>
    %33 = vector.shape_cast %32 : vector<1x1x2x4xf32> to vector<2x4xf32>
    %34 = vector.shape_cast %31 : vector<2x4xf32> to vector<1x1x2x4xf32>
    tpu.vector_store %arg5[%c0_14, %c0_15, %c0_16, %c0_17], %34 {strides = array<i32>} : memref<1x1x2x4xf32, #tpu.memory_space<vmem>>, vector<1x1x2x4xf32>,
    return
  }
  func.func @transform_0(%arg0: i32, %arg1: i32) -> (i32, i32, i32, i32, i32) {
    %c0_i32 = arith.constant 0 : i32
    %c0_i32_0 = arith.constant 0 : i32
    %c0_i32_1 = arith.constant 0 : i32
    %c0_i32_2 = arith.constant 0 : i32
    return %arg0, %arg1, %c0_i32, %c0_i32_0, %c0_i32_1 : i32, i32, i32, i32, i32
  }
  func.func @transform_1(%arg0: i32, %arg1: i32) -> (i32, i32) {
    %c0_i32 = arith.constant 0 : i32
    %c0_i32_0 = arith.constant 0 : i32
    %c0_i32_1 = arith.constant 0 : i32
    return %c0_i32, %c0_i32_0 : i32, i32
  }
  func.func @transform_2(%arg0: i32, %arg1: i32) -> (i32, i32, i32, i32) {
    %c0_i32 = arith.constant 0 : i32
    %c0_i32_0 = arith.constant 0 : i32
    %c0_i32_1 = arith.constant 0 : i32
    return %arg0, %arg1, %c0_i32, %c0_i32_0 : i32, i32, i32, i32
  }
  func.func @transform_3(%arg0: i32, %arg1: i32) -> (i32, i32, i32, i32) {
    %c0_i32 = arith.constant 0 : i32
    %c0_i32_0 = arith.constant 0 : i32
    %c0_i32_1 = arith.constant 0 : i32
    return %arg0, %arg1, %c0_i32, %c0_i32_0 : i32, i32, i32, i32
  }
}

module attributes {stable_mosaic.version = 11 : i64} {
  func.func @_bn_apply_res_kernel(%arg0: i32, %arg1: i32, %arg2: memref<1x8x16x4xf32, #tpu.memory_space<vmem>>, %arg3: memref<1x4xf32, #tpu.memory_space<vmem>>, %arg4: memref<1x4xf32, #tpu.memory_space<vmem>>, %arg5: memref<1x8x16x4xf32, #tpu.memory_space<vmem>>, %arg6: memref<1x8x16x4xf32, #tpu.memory_space<vmem>>) attributes {dimension_semantics = [#tpu.dimension_semantics<parallel>, #tpu.dimension_semantics<parallel>], iteration_bounds = array<i64: 2, 2>, scalar_prefetch = 0 : i64, scratch_operands = 0 : i64, tpu.core_type = #tpu.core_type<tc>, window_params = [{transform_indices = @transform_0, window_bounds = array<i64: 1, 8, 16, 4>}, {pipeline_mode = #tpu.pipeline_mode<synchronous>, transform_indices = @transform_1, window_bounds = array<i64: 1, 4>}, {pipeline_mode = #tpu.pipeline_mode<synchronous>, transform_indices = @transform_2, window_bounds = array<i64: 1, 4>}, {transform_indices = @transform_3, window_bounds = array<i64: 1, 8, 16, 4>}, {transform_indices = @transform_4, window_bounds = array<i64: 1, 8, 16, 4>}]} {
    %c0 = arith.constant 0 : index
    %c0_0 = arith.constant 0 : index
    %c0_1 = arith.constant 0 : index
    %c0_2 = arith.constant 0 : index
    %0 = vector.load %arg2[%c0, %c0_0, %c0_1, %c0_2] : memref<1x8x16x4xf32, #tpu.memory_space<vmem>>, vector<1x8x16x4xf32>
    %1 = vector.shape_cast %0 : vector<1x8x16x4xf32> to vector<8x16x4xf32>
    %c0_3 = arith.constant 0 : index
    %c0_4 = arith.constant 0 : index
    %c0_5 = arith.constant 0 : index
    %c0_6 = arith.constant 0 : index
    %2 = vector.load %arg5[%c0_3, %c0_4, %c0_5, %c0_6] : memref<1x8x16x4xf32, #tpu.memory_space<vmem>>, vector<1x8x16x4xf32>
    %3 = vector.shape_cast %2 : vector<1x8x16x4xf32> to vector<8x16x4xf32>
    %c0_7 = arith.constant 0 : index
    %c0_8 = arith.constant 0 : index
    %4 = vector.load %arg3[%c0_7, %c0_8] : memref<1x4xf32, #tpu.memory_space<vmem>>, vector<1x4xf32>
    %5 = vector.shape_cast %4 : vector<1x4xf32> to vector<1x1x4xf32>
    %6 = vector.broadcast %5 : vector<1x1x4xf32> to vector<8x16x4xf32>
    %7 = arith.mulf %1, %6 : vector<8x16x4xf32>
    %8 = arith.addf %3, %7 : vector<8x16x4xf32>
    %c0_9 = arith.constant 0 : index
    %c0_10 = arith.constant 0 : index
    %9 = vector.load %arg4[%c0_9, %c0_10] : memref<1x4xf32, #tpu.memory_space<vmem>>, vector<1x4xf32>
    %10 = vector.shape_cast %9 : vector<1x4xf32> to vector<1x1x4xf32>
    %11 = vector.broadcast %10 : vector<1x1x4xf32> to vector<8x16x4xf32>
    %12 = arith.addf %8, %11 : vector<8x16x4xf32>
    %c0_11 = arith.constant 0 : index
    %c0_12 = arith.constant 0 : index
    %c0_13 = arith.constant 0 : index
    %c0_14 = arith.constant 0 : index
    %13 = vector.load %arg6[%c0_11, %c0_12, %c0_13, %c0_14] : memref<1x8x16x4xf32, #tpu.memory_space<vmem>>, vector<1x8x16x4xf32>
    %14 = vector.shape_cast %13 : vector<1x8x16x4xf32> to vector<8x16x4xf32>
    %15 = vector.shape_cast %12 : vector<8x16x4xf32> to vector<1x8x16x4xf32>
    tpu.vector_store %arg6[%c0_11, %c0_12, %c0_13, %c0_14], %15 {strides = array<i32>} : memref<1x8x16x4xf32, #tpu.memory_space<vmem>>, vector<1x8x16x4xf32>,
    return
  }
  func.func @transform_0(%arg0: i32, %arg1: i32) -> (i32, i32, i32, i32) {
    %c0_i32 = arith.constant 0 : i32
    %c0_i32_0 = arith.constant 0 : i32
    %c0_i32_1 = arith.constant 0 : i32
    return %arg0, %arg1, %c0_i32, %c0_i32_0 : i32, i32, i32, i32
  }
  func.func @transform_1(%arg0: i32, %arg1: i32) -> (i32, i32) {
    %c0_i32 = arith.constant 0 : i32
    %c0_i32_0 = arith.constant 0 : i32
    %c0_i32_1 = arith.constant 0 : i32
    return %c0_i32, %c0_i32_0 : i32, i32
  }
  func.func @transform_2(%arg0: i32, %arg1: i32) -> (i32, i32) {
    %c0_i32 = arith.constant 0 : i32
    %c0_i32_0 = arith.constant 0 : i32
    %c0_i32_1 = arith.constant 0 : i32
    return %c0_i32, %c0_i32_0 : i32, i32
  }
  func.func @transform_3(%arg0: i32, %arg1: i32) -> (i32, i32, i32, i32) {
    %c0_i32 = arith.constant 0 : i32
    %c0_i32_0 = arith.constant 0 : i32
    %c0_i32_1 = arith.constant 0 : i32
    return %arg0, %arg1, %c0_i32, %c0_i32_0 : i32, i32, i32, i32
  }
  func.func @transform_4(%arg0: i32, %arg1: i32) -> (i32, i32, i32, i32) {
    %c0_i32 = arith.constant 0 : i32
    %c0_i32_0 = arith.constant 0 : i32
    %c0_i32_1 = arith.constant 0 : i32
    return %arg0, %arg1, %c0_i32, %c0_i32_0 : i32, i32, i32, i32
  }
}

</mosaic_0001>

<llo_original>
// kernel: resblock_forward.7
$region0: #{resblock_forward.7}
  #allocation0 [shape = 'u32[]', space=smem, size = 0x4, offset = 0x4, fixed_abs, tag = 'smem constant byte address 0x4 - core index']
  #allocation1 [shape = 'u32[144,128]{1,0:T(1,128)}', space=vmem, size = 0x12000, scoped, tag = 'internal scratch']
  %s0 = inlined_call_operand.vmem [shape: f32[2,16,16,8], index: 0, kind: input, shape index: {}]
  %s1 = inlined_call_operand.vmem [shape: f32[1,8], index: 1, kind: input, shape index: {}]
  %s2 = inlined_call_operand.vmem [shape: f32[1,8], index: 2, kind: input, shape index: {}]
  %s3 = inlined_call_operand.vmem [shape: bf16[2,16,16,8], index: 3, kind: output, shape index: {}]
  %s4 = sld [smem:[#allocation0]]
  $region45: #{resblock_forward.7} parent=0
    _
  %s6 = ssub.s32 1, %s4
  %s7 = scalar_select 0, %s6, %s4
  loop: start=0, step=1, limit=6
  $region2: #{resblock_forward.7} parent=0 // loop_pre_header
    _
  $region3: #{resblock_forward.7} parent=0 // loop_header
    %s9 = sphi 0, %s13
    %p10 = scmp.ge.s32.totalorder %s9, 6
    %s16 = sphi 0, %s28
    %s17 = sphi 0, %s24
    %s18 = sphi 0, %s16
    %s19 = sphi 0, %s17
    %s20 = sphi 0, %s18
    %s21 = sphi 0, %s19
    %s33 = sphi 0, %s35
    %s36 = sphi 0, %s33
    %s37 = sphi 0, %s36
    %s53 = sphi 0, %s37
    %s57 = sphi 0, %s57
    %s59 = sphi 0, %s57
    %s60 = sphi 0, %s59
    %s74 = sphi 0, %s60
    %s78 = sphi 0, %s78
    %s80 = sphi 0, %s78
    %s81 = sphi 0, %s80
    %s95 = sphi 0, %s81
    %s103 = sphi 0, %s105
    %s106 = sphi 0, %s103
    %s107 = sphi 0, %s106
    %s123 = sphi 0, %s107
  $region4: #{resblock_forward.7} parent=0 // loop_header_branch
    %12 = sbr.rel (%p10) target = $region8
  $region5: #{resblock_forward.7} parent=0 // loop_body
    %s14 = ssub.s32 %s9, 1
    %s15 = ssub.s32 %s9, 2
    %s22 = sadd.s32 1, %s17
    %p23 = scmp.ge.s32.totalorder %s22, 2
    %s24 = scalar_select %p23, 0, %s22
    %s25 = sadd.s32 1, %s16
    %s26 = scalar_select %p23, %s25, %s16
    %p27 = scmp.ge.s32.totalorder %s26, 2
    %s28 = scalar_select %p27, 0, %s26
    %s29 = ssub.s32 %s16, %s28
    %s30 = ssub.s32 %s17, %s24
    %s31 = sor.u32 %s29, %s30
    %p32 = scmp.eq.s32.totalorder %s31, 0
    %s34 = sadd.s32 %s33, 1
    %s35 = scalar_select %p32, %s33, %s34
    %p38 = pneg %p32
    %p39 = scmp.eq.s32.totalorder %s9, 3
    %p40 = por %p38, %p39
    %p41 = scmp.ne.s32.totalorder %s33, %s36
    %p42 = scmp.eq.s32.totalorder %s9, 0
    %p43 = por %p41, %p42
    %p44 = scmp.ne.s32.totalorder %s33, %s36
    %p45 = scmp.eq.s32.totalorder %s14, 3
    %p46 = por %p44, %p45
    %p47 = scmp.ne.s32.totalorder %s36, %s37
    %p48 = scmp.eq.s32.totalorder %s14, 0
    %p49 = por %p47, %p48
    %p50 = scmp.ne.s32.totalorder %s36, %s37
    %p51 = scmp.eq.s32.totalorder %s15, 3
    %p52 = por %p50, %p51
    %p54 = scmp.ne.s32.totalorder %s37, %s53
    %p55 = scmp.eq.s32.totalorder %s15, 0
    %p56 = por %p54, %p55
    %s58 = sadd.s32 %s57, 1
    %p61 = scmp.eq.s32.totalorder %s9, 3
    %p62 = scmp.ne.s32.totalorder %s57, %s59
    %p63 = scmp.eq.s32.totalorder %s9, 0
    %p64 = por %p62, %p63
    %p65 = scmp.ne.s32.totalorder %s57, %s59
    %p66 = scmp.eq.s32.totalorder %s14, 3
    %p67 = por %p65, %p66
    %p68 = scmp.ne.s32.totalorder %s59, %s60
    %p69 = scmp.eq.s32.totalorder %s14, 0
    %p70 = por %p68, %p69
    %p71 = scmp.ne.s32.totalorder %s59, %s60
    %p72 = scmp.eq.s32.totalorder %s15, 3
    %p73 = por %p71, %p72
    %p75 = scmp.ne.s32.totalorder %s60, %s74
    %p76 = scmp.eq.s32.totalorder %s15, 0
    %p77 = por %p75, %p76
    %s79 = sadd.s32 %s78, 1
    %p82 = scmp.eq.s32.totalorder %s9, 3
    %p83 = scmp.ne.s32.totalorder %s78, %s80
    %p84 = scmp.eq.s32.totalorder %s9, 0
    %p85 = por %p83, %p84
    %p86 = scmp.ne.s32.totalorder %s78, %s80
    %p87 = scmp.eq.s32.totalorder %s14, 3
    %p88 = por %p86, %p87
    %p89 = scmp.ne.s32.totalorder %s80, %s81
    %p90 = scmp.eq.s32.totalorder %s14, 0
    %p91 = por %p89, %p90
    %p92 = scmp.ne.s32.totalorder %s80, %s81
    %p93 = scmp.eq.s32.totalorder %s15, 3
    %p94 = por %p92, %p93
    %p96 = scmp.ne.s32.totalorder %s81, %s95
    %p97 = scmp.eq.s32.totalorder %s15, 0
    %p98 = por %p96, %p97
    %s99 = ssub.s32 %s16, %s28
    %s100 = ssub.s32 %s17, %s24
    %s101 = sor.u32 %s99, %s100
    %p102 = scmp.eq.s32.totalorder %s101, 0
    %s104 = sadd.s32 %s103, 1
    %s105 = scalar_select %p102, %s103, %s104
    %p108 = pneg %p102
    %p109 = scmp.eq.s32.totalorder %s9, 3
    %p110 = por %p108, %p109
    %p111 = scmp.ne.s32.totalorder %s103, %s106
    %p112 = scmp.eq.s32.totalorder %s9, 0
    %p113 = por %p111, %p112
    %p114 = scmp.ne.s32.totalorder %s103, %s106
    %p115 = scmp.eq.s32.totalorder %s14, 3
    %p116 = por %p114, %p115
    %p117 = scmp.ne.s32.totalorder %s106, %s107
    %p118 = scmp.eq.s32.totalorder %s14, 0
    %p119 = por %p117, %p118
    %p120 = scmp.ne.s32.totalorder %s106, %s107
    %p121 = scmp.eq.s32.totalorder %s15, 3
    %p122 = por %p120, %p121
    %p124 = scmp.ne.s32.totalorder %s107, %s123
    %p125 = scmp.eq.s32.totalorder %s15, 0
    %p126 = por %p124, %p125
    %p127 = scmp.le.s32.totalorder 1, %s9
    %p128 = scmp.lt.s32.totalorder %s9, 5
    %p129 = pnand %p127, %p128
    %p130 = pneg %p129
    // Predicated region
    $region9: #{resblock_forward.7} parent=5 // pred_check
      _
    $region10: #{resblock_forward.7} parent=5 // pred_check_branch
      %132 = sbr.rel (%p129) target = $region12
    $region11: #{resblock_forward.7} parent=5 // pred_region
      %s133 = ssub.s32 %s9, 1
      // Predicated region
      $region13: #{resblock_forward.7} parent=11 // pred_check
        %p134 = pneg %p70
      $region14: #{resblock_forward.7} parent=11 // pred_check_branch
        %136 = sbr.rel (%p134) target = $region16
      $region15: #{resblock_forward.7} parent=11 // pred_region
        _
      $region16: #{resblock_forward.7} parent=11 // pred_fallthru
        _
      // Predicated region
      $region17: #{resblock_forward.7} parent=11 // pred_check
        %p137 = pneg %p91
      $region18: #{resblock_forward.7} parent=11 // pred_check_branch
        %139 = sbr.rel (%p137) target = $region20
      $region19: #{resblock_forward.7} parent=11 // pred_region
        _
      $region20: #{resblock_forward.7} parent=11 // pred_fallthru
        _
    $region12: #{resblock_forward.7} parent=5 // pred_fallthru
      _
    %p140 = scmp.lt.s32.totalorder %s9, 4
    // Predicated region
    $region21: #{resblock_forward.7} parent=5 // pred_check
      %p141 = pneg %p140
    $region22: #{resblock_forward.7} parent=5 // pred_check_branch
      %143 = sbr.rel (%p141) target = $region24
    $region23: #{resblock_forward.7} parent=5 // pred_region
      // Predicated region
      $region25: #{resblock_forward.7} parent=23 // pred_check
        %p144 = pneg %p43
      $region26: #{resblock_forward.7} parent=23 // pred_check_branch
        %146 = sbr.rel (%p144) target = $region28
      $region27: #{resblock_forward.7} parent=23 // pred_region
        %s147 = smul.u32 8, %s17
        %p148 = scmp.lt.s32.totalorder %s16, 1
        %s149 = scalar_select %p148, %s16, 1
        %p150 = scmp.lt.s32.totalorder %s147, 15
        %s151 = scalar_select %p150, %s147, 15
        %s152 = smul.addr %s151, 2
        %s153 = smul.addr %s149, 32
        %s154 = sadd.s32 %s152, %s153
        %s155 = smul.addr %s154, 8
        %s156 = scalar_lea.vmem %s0, %s155
        %s157 = smul.u32 8, %s17
      $region28: #{resblock_forward.7} parent=23 // pred_fallthru
        _
    $region24: #{resblock_forward.7} parent=5 // pred_fallthru
      _
    %p158 = scmp.le.s32.totalorder 1, %s9
    %p159 = scmp.lt.s32.totalorder %s9, 5
    %p160 = pnand %p158, %p159
    %p161 = pneg %p160
    // Predicated region
    $region29: #{resblock_forward.7} parent=5 // pred_check
      _
    $region30: #{resblock_forward.7} parent=5 // pred_check_branch
      %163 = sbr.rel (%p160) target = $region32
    $region31: #{resblock_forward.7} parent=5 // pred_region
      %s164 = ssub.s32 %s9, 1
      %s165 = smul.u32 8, %s19
      %p166 = scmp.lt.s32.totalorder %s18, 1
      %s167 = scalar_select %p166, %s18, 1
      %p168 = scmp.lt.s32.totalorder %s165, 15
      %s169 = scalar_select %p168, %s165, 15
      %s170 = smul.addr %s169, 2
      %s171 = smul.addr %s167, 32
      %s172 = sadd.s32 %s170, %s171
      %s173 = smul.addr %s172, 8
      %s174 = scalar_lea.vmem %s0, %s173
      %p175 = pneg %p49
      %p176 = pneg %p46
      %p177 = pneg %p70
      %p178 = pneg %p67
      %p179 = pneg %p91
      %p180 = pneg %p88
      %p181 = pneg %p119
      %p182 = pneg %p116
      %s183 = smul.u32 8, %s19
      %p184 = scmp.lt.s32.totalorder %s18, 1
      %s185 = scalar_select %p184, %s18, 1
      %p186 = scmp.lt.s32.totalorder %s183, 15
      %s187 = scalar_select %p186, %s183, 15
      %s188 = smul.addr %s187, 2
      %s189 = smul.addr %s185, 32
      %s190 = sadd.s32 %s188, %s189
      %s191 = smul.addr %s190, 4
      %s192 = scalar_lea.vmem %s3, %s191
      %s193 = smul.u32 8, %s19
      %p194 = scmp.lt.s32.totalorder %s18, 1
      %s195 = scalar_select %p194, %s18, 1
      %p196 = scmp.lt.s32.totalorder %s193, 15
      %s197 = scalar_select %p196, %s193, 15
      %s198 = smul.addr %s197, 2
      %s199 = smul.addr %s195, 32
      %s200 = sadd.s32 %s198, %s199
      %s201 = smul.addr %s200, 8
      %s202 = scalar_lea.vmem %s0, %s201
      %s203 = smul.u32 8, %s19
      %s204 = smul.u32 8, %s19
      %p205 = scmp.lt.s32.totalorder %s18, 1
      %s206 = scalar_select %p205, %s18, 1
      %p207 = scmp.lt.s32.totalorder %s204, 15
      %s208 = scalar_select %p207, %s204, 15
      %s209 = smul.addr %s208, 2
      %s210 = smul.addr %s206, 32
      %s211 = sadd.s32 %s209, %s210
      %s212 = smul.addr %s211, 4
      %s213 = scalar_lea.vmem %s3, %s212
      %s214 = smul.u32 8, %s19
      %v215 = vld [vmem:[%s202] sm:$0xff]
      %v216 = vld [vmem:[%s202 + $0x8] sm:$0xff]
      %v217 = vld [vmem:[%s202 + $0x10] sm:$0xff]
      %v218 = vld [vmem:[%s202 + $0x18] sm:$0xff]
      %v219 = vld [vmem:[%s202 + $0x20] sm:$0xff]
      %v220 = vld [vmem:[%s202 + $0x28] sm:$0xff]
      %v221 = vld [vmem:[%s202 + $0x30] sm:$0xff]
      %v222 = vld [vmem:[%s202 + $0x38] sm:$0xff]
      %v223 = vld [vmem:[%s202 + $0x40] sm:$0xff]
      %v224 = vld [vmem:[%s202 + $0x48] sm:$0xff]
      %v225 = vld [vmem:[%s202 + $0x50] sm:$0xff]
      %v226 = vld [vmem:[%s202 + $0x58] sm:$0xff]
      %v227 = vld [vmem:[%s202 + $0x60] sm:$0xff]
      %v228 = vld [vmem:[%s202 + $0x68] sm:$0xff]
      %v229 = vld [vmem:[%s202 + $0x70] sm:$0xff]
      %v230 = vld [vmem:[%s202 + $0x78] sm:$0xff]
      %v231 = vld [vmem:[%s1] sm:$0x1]
      %v233 = vlaneseq
      %v234 = vshrl.u32 %v233, 7
      %v235 = vsub.s32 0, %v234
      %v236 = vrot.slane %v231, %v235
      %v238 = vmul.f32 %v215, %v236
      %v239 = vmul.f32 %v216, %v236
      %v240 = vmul.f32 %v217, %v236
      %v241 = vmul.f32 %v218, %v236
      %v242 = vmul.f32 %v219, %v236
      %v243 = vmul.f32 %v220, %v236
      %v244 = vmul.f32 %v221, %v236
      %v245 = vmul.f32 %v222, %v236
      %v246 = vmul.f32 %v223, %v236
      %v247 = vmul.f32 %v224, %v236
      %v248 = vmul.f32 %v225, %v236
      %v249 = vmul.f32 %v226, %v236
      %v250 = vmul.f32 %v227, %v236
      %v251 = vmul.f32 %v228, %v236
      %v252 = vmul.f32 %v229, %v236
      %v253 = vmul.f32 %v230, %v236
      %v254 = vld [vmem:[%s2] sm:$0x1]
      %v256 = vlaneseq
      %v257 = vshrl.u32 %v256, 7
      %v258 = vsub.s32 0, %v257
      %v259 = vrot.slane %v254, %v258
      %v261 = vadd.f32 %v238, %v259
      %v262 = vadd.f32 %v239, %v259
      %v263 = vadd.f32 %v240, %v259
      %v264 = vadd.f32 %v241, %v259
      %v265 = vadd.f32 %v242, %v259
      %v266 = vadd.f32 %v243, %v259
      %v267 = vadd.f32 %v244, %v259
      %v268 = vadd.f32 %v245, %v259
      %v269 = vadd.f32 %v246, %v259
      %v270 = vadd.f32 %v247, %v259
      %v271 = vadd.f32 %v248, %v259
      %v272 = vadd.f32 %v249, %v259
      %v273 = vadd.f32 %v250, %v259
      %v274 = vadd.f32 %v251, %v259
      %v275 = vadd.f32 %v252, %v259
      %v276 = vadd.f32 %v253, %v259
      %v277 = vpack.c.bf16 %v262, %v261
      %v278 = vpack.c.bf16 %v264, %v263
      %v279 = vpack.c.bf16 %v266, %v265
      %v280 = vpack.c.bf16 %v268, %v267
      %v281 = vpack.c.bf16 %v270, %v269
      %v282 = vpack.c.bf16 %v272, %v271
      %v283 = vpack.c.bf16 %v274, %v273
      %v284 = vpack.c.bf16 %v276, %v275
      %v293 = vunpack.c.l.b16 %v277
      %v294 = vunpack.c.h.b16 %v277
      %v295 = vunpack.c.l.b16 %v278
      %v296 = vunpack.c.h.b16 %v278
      %v297 = vunpack.c.l.b16 %v279
      %v298 = vunpack.c.h.b16 %v279
      %v299 = vunpack.c.l.b16 %v280
      %v300 = vunpack.c.h.b16 %v280
      %v301 = vunpack.c.l.b16 %v281
      %v302 = vunpack.c.h.b16 %v281
      %v303 = vunpack.c.l.b16 %v282
      %v304 = vunpack.c.h.b16 %v282
      %v305 = vunpack.c.l.b16 %v283
      %v306 = vunpack.c.h.b16 %v283
      %v307 = vunpack.c.l.b16 %v284
      %v308 = vunpack.c.h.b16 %v284
      %v309 = vpack.c.b16 %v293, %v293
      %v310 = vpack.c.b16 %v294, %v294
      %v311 = vpack.c.b16 %v295, %v295
      %v312 = vpack.c.b16 %v296, %v296
      %v313 = vpack.c.b16 %v297, %v297
      %v314 = vpack.c.b16 %v298, %v298
      %v315 = vpack.c.b16 %v299, %v299
      %v316 = vpack.c.b16 %v300, %v300
      %v317 = vpack.c.b16 %v301, %v301
      %v318 = vpack.c.b16 %v302, %v302
      %v319 = vpack.c.b16 %v303, %v303
      %v320 = vpack.c.b16 %v304, %v304
      %v321 = vpack.c.b16 %v305, %v305
      %v322 = vpack.c.b16 %v306, %v306
      %v323 = vpack.c.b16 %v307, %v307
      %v324 = vpack.c.b16 %v308, %v308
      %vm341 = vcmask 60416
      %342 = vst.msk [vmem:[%s213] sm:$0xf] %vm341, %v309
      %343 = vst.msk [vmem:[%s213 + $0x4] sm:$0xf] %vm341, %v310
      %344 = vst.msk [vmem:[%s213 + $0x8] sm:$0xf] %vm341, %v311
      %345 = vst.msk [vmem:[%s213 + $0xc] sm:$0xf] %vm341, %v312
      %346 = vst.msk [vmem:[%s213 + $0x10] sm:$0xf] %vm341, %v313
      %347 = vst.msk [vmem:[%s213 + $0x14] sm:$0xf] %vm341, %v314
      %348 = vst.msk [vmem:[%s213 + $0x18] sm:$0xf] %vm341, %v315
      %349 = vst.msk [vmem:[%s213 + $0x1c] sm:$0xf] %vm341, %v316
      %350 = vst.msk [vmem:[%s213 + $0x20] sm:$0xf] %vm341, %v317
      %351 = vst.msk [vmem:[%s213 + $0x24] sm:$0xf] %vm341, %v318
      %352 = vst.msk [vmem:[%s213 + $0x28] sm:$0xf] %vm341, %v319
      %353 = vst.msk [vmem:[%s213 + $0x2c] sm:$0xf] %vm341, %v320
      %354 = vst.msk [vmem:[%s213 + $0x30] sm:$0xf] %vm341, %v321
      %355 = vst.msk [vmem:[%s213 + $0x34] sm:$0xf] %vm341, %v322
      %356 = vst.msk [vmem:[%s213 + $0x38] sm:$0xf] %vm341, %v323
      %357 = vst.msk [vmem:[%s213 + $0x3c] sm:$0xf] %vm341, %v324
      %s358 = smul.u32 8, %s19
      %p359 = scmp.lt.s32.totalorder %s18, 1
      %s360 = scalar_select %p359, %s18, 1
      %p361 = scmp.lt.s32.totalorder %s358, 15
      %s362 = scalar_select %p361, %s358, 15
      %s363 = smul.addr %s362, 2
      %s364 = smul.addr %s360, 32
      %s365 = sadd.s32 %s363, %s364
      %s366 = smul.addr %s365, 4
      %s367 = scalar_lea.vmem %s3, %s366
      // Predicated region
      $region33: #{resblock_forward.7} parent=31 // pred_check
        %p368 = pneg %p116
      $region34: #{resblock_forward.7} parent=31 // pred_check_branch
        %370 = sbr.rel (%p368) target = $region36
      $region35: #{resblock_forward.7} parent=31 // pred_region
        %s371 = smul.u32 8, %s19
      $region36: #{resblock_forward.7} parent=31 // pred_fallthru
        _
    $region32: #{resblock_forward.7} parent=5 // pred_fallthru
      _
    %p372 = scmp.le.s32.totalorder 2, %s9
    // Predicated region
    $region37: #{resblock_forward.7} parent=5 // pred_check
      %p373 = pneg %p372
    $region38: #{resblock_forward.7} parent=5 // pred_check_branch
      %375 = sbr.rel (%p373) target = $region40
    $region39: #{resblock_forward.7} parent=5 // pred_region
      %s376 = ssub.s32 %s9, 2
      // Predicated region
      $region41: #{resblock_forward.7} parent=39 // pred_check
        %p377 = pneg %p122
      $region42: #{resblock_forward.7} parent=39 // pred_check_branch
        %379 = sbr.rel (%p377) target = $region44
      $region43: #{resblock_forward.7} parent=39 // pred_region
        %s380 = smul.u32 8, %s21
        %p381 = scmp.lt.s32.totalorder %s20, 1
        %s382 = scalar_select %p381, %s20, 1
        %p383 = scmp.lt.s32.totalorder %s380, 15
        %s384 = scalar_select %p383, %s380, 15
        %s385 = smul.addr %s384, 2
        %s386 = smul.addr %s382, 32
        %s387 = sadd.s32 %s385, %s386
        %s388 = smul.addr %s387, 4
        %s389 = scalar_lea.vmem %s3, %s388
      $region44: #{resblock_forward.7} parent=39 // pred_fallthru
        _
    $region40: #{resblock_forward.7} parent=5 // pred_fallthru
      _
  $region6: #{resblock_forward.7} parent=0 // loop_footer
    %s13 = sadd.s32 1, %s9
  $region7: #{resblock_forward.7} parent=0 // loop_footer_branch
    %8 = sbr.rel target = $region3
  $region8: #{resblock_forward.7} parent=0 // loop_exit
    _

// kernel: resblock_forward.6
$region0: #{resblock_forward.6}
  #allocation0 [shape = 'u32[]', space=smem, size = 0x4, offset = 0x4, fixed_abs, tag = 'smem constant byte address 0x4 - core index']
  #allocation1 [shape = 'u32[144,128]{1,0:T(1,128)}', space=vmem, size = 0x12000, scoped, tag = 'internal scratch']
  %s0 = inlined_call_operand.vmem [shape: bf16[2,2,10,18,4], index: 0, kind: input, shape index: {}]
  %s1 = inlined_call_operand.vmem [shape: bf16[36,8], index: 1, kind: input, shape index: {}]
  %s2 = inlined_call_operand.vmem [shape: f32[2,16,16,8], index: 2, kind: output, shape index: {0}]
  %s3 = inlined_call_operand.vmem [shape: f32[2,2,2,8], index: 3, kind: output, shape index: {1}]
  %4 = xla_tuple %s2, %s3
  %s5 = sld [smem:[#allocation0]]
  $region49: #{resblock_forward.6} parent=0
    _
  %s7 = ssub.s32 1, %s5
  %s8 = scalar_select 0, %s7, %s5
  loop: start=0, step=1, limit=6
  $region2: #{resblock_forward.6} parent=0 // loop_pre_header
    _
  $region3: #{resblock_forward.6} parent=0 // loop_header
    %s10 = sphi 0, %s14
    %p11 = scmp.ge.s32.totalorder %s10, 6
    %s17 = sphi 0, %s29
    %s18 = sphi 0, %s25
    %s19 = sphi 0, %s17
    %s20 = sphi 0, %s18
    %s21 = sphi 0, %s19
    %s22 = sphi 0, %s20
    %s34 = sphi 0, %s36
    %s37 = sphi 0, %s34
    %s38 = sphi 0, %s37
    %s54 = sphi 0, %s38
    %s58 = sphi 0, %s58
    %s60 = sphi 0, %s58
    %s61 = sphi 0, %s60
    %s75 = sphi 0, %s61
    %s83 = sphi 0, %s85
    %s86 = sphi 0, %s83
    %s87 = sphi 0, %s86
    %s103 = sphi 0, %s87
    %s111 = sphi 0, %s113
    %s114 = sphi 0, %s111
    %s115 = sphi 0, %s114
    %s131 = sphi 0, %s115
  $region4: #{resblock_forward.6} parent=0 // loop_header_branch
    %13 = sbr.rel (%p11) target = $region8
  $region5: #{resblock_forward.6} parent=0 // loop_body
    %s15 = ssub.s32 %s10, 1
    %s16 = ssub.s32 %s10, 2
    %s23 = sadd.s32 1, %s18
    %p24 = scmp.ge.s32.totalorder %s23, 2
    %s25 = scalar_select %p24, 0, %s23
    %s26 = sadd.s32 1, %s17
    %s27 = scalar_select %p24, %s26, %s17
    %p28 = scmp.ge.s32.totalorder %s27, 2
    %s29 = scalar_select %p28, 0, %s27
    %s30 = ssub.s32 %s17, %s29
    %s31 = ssub.s32 %s18, %s25
    %s32 = sor.u32 %s30, %s31
    %p33 = scmp.eq.s32.totalorder %s32, 0
    %s35 = sadd.s32 %s34, 1
    %s36 = scalar_select %p33, %s34, %s35
    %p39 = pneg %p33
    %p40 = scmp.eq.s32.totalorder %s10, 3
    %p41 = por %p39, %p40
    %p42 = scmp.ne.s32.totalorder %s34, %s37
    %p43 = scmp.eq.s32.totalorder %s10, 0
    %p44 = por %p42, %p43
    %p45 = scmp.ne.s32.totalorder %s34, %s37
    %p46 = scmp.eq.s32.totalorder %s15, 3
    %p47 = por %p45, %p46
    %p48 = scmp.ne.s32.totalorder %s37, %s38
    %p49 = scmp.eq.s32.totalorder %s15, 0
    %p50 = por %p48, %p49
    %p51 = scmp.ne.s32.totalorder %s37, %s38
    %p52 = scmp.eq.s32.totalorder %s16, 3
    %p53 = por %p51, %p52
    %p55 = scmp.ne.s32.totalorder %s38, %s54
    %p56 = scmp.eq.s32.totalorder %s16, 0
    %p57 = por %p55, %p56
    %s59 = sadd.s32 %s58, 1
    %p62 = scmp.eq.s32.totalorder %s10, 3
    %p63 = scmp.ne.s32.totalorder %s58, %s60
    %p64 = scmp.eq.s32.totalorder %s10, 0
    %p65 = por %p63, %p64
    %p66 = scmp.ne.s32.totalorder %s58, %s60
    %p67 = scmp.eq.s32.totalorder %s15, 3
    %p68 = por %p66, %p67
    %p69 = scmp.ne.s32.totalorder %s60, %s61
    %p70 = scmp.eq.s32.totalorder %s15, 0
    %p71 = por %p69, %p70
    %p72 = scmp.ne.s32.totalorder %s60, %s61
    %p73 = scmp.eq.s32.totalorder %s16, 3
    %p74 = por %p72, %p73
    %p76 = scmp.ne.s32.totalorder %s61, %s75
    %p77 = scmp.eq.s32.totalorder %s16, 0
    %p78 = por %p76, %p77
    %s79 = ssub.s32 %s17, %s29
    %s80 = ssub.s32 %s18, %s25
    %s81 = sor.u32 %s79, %s80
    %p82 = scmp.eq.s32.totalorder %s81, 0
    %s84 = sadd.s32 %s83, 1
    %s85 = scalar_select %p82, %s83, %s84
    %p88 = pneg %p82
    %p89 = scmp.eq.s32.totalorder %s10, 3
    %p90 = por %p88, %p89
    %p91 = scmp.ne.s32.totalorder %s83, %s86
    %p92 = scmp.eq.s32.totalorder %s10, 0
    %p93 = por %p91, %p92
    %p94 = scmp.ne.s32.totalorder %s83, %s86
    %p95 = scmp.eq.s32.totalorder %s15, 3
    %p96 = por %p94, %p95
    %p97 = scmp.ne.s32.totalorder %s86, %s87
    %p98 = scmp.eq.s32.totalorder %s15, 0
    %p99 = por %p97, %p98
    %p100 = scmp.ne.s32.totalorder %s86, %s87
    %p101 = scmp.eq.s32.totalorder %s16, 3
    %p102 = por %p100, %p101
    %p104 = scmp.ne.s32.totalorder %s87, %s103
    %p105 = scmp.eq.s32.totalorder %s16, 0
    %p106 = por %p104, %p105
    %s107 = ssub.s32 %s17, %s29
    %s108 = ssub.s32 %s18, %s25
    %s109 = sor.u32 %s107, %s108
    %p110 = scmp.eq.s32.totalorder %s109, 0
    %s112 = sadd.s32 %s111, 1
    %s113 = scalar_select %p110, %s111, %s112
    %p116 = pneg %p110
    %p117 = scmp.eq.s32.totalorder %s10, 3
    %p118 = por %p116, %p117
    %p119 = scmp.ne.s32.totalorder %s111, %s114
    %p120 = scmp.eq.s32.totalorder %s10, 0
    %p121 = por %p119, %p120
    %p122 = scmp.ne.s32.totalorder %s111, %s114
    %p123 = scmp.eq.s32.totalorder %s15, 3
    %p124 = por %p122, %p123
    %p125 = scmp.ne.s32.totalorder %s114, %s115
    %p126 = scmp.eq.s32.totalorder %s15, 0
    %p127 = por %p125, %p126
    %p128 = scmp.ne.s32.totalorder %s114, %s115
    %p129 = scmp.eq.s32.totalorder %s16, 3
    %p130 = por %p128, %p129
    %p132 = scmp.ne.s32.totalorder %s115, %s131
    %p133 = scmp.eq.s32.totalorder %s16, 0
    %p134 = por %p132, %p133
    %p135 = scmp.le.s32.totalorder 1, %s10
    %p136 = scmp.lt.s32.totalorder %s10, 5
    %p137 = pnand %p135, %p136
    %p138 = pneg %p137
    // Predicated region
    $region9: #{resblock_forward.6} parent=5 // pred_check
      _
    $region10: #{resblock_forward.6} parent=5 // pred_check_branch
      %140 = sbr.rel (%p137) target = $region12
    $region11: #{resblock_forward.6} parent=5 // pred_region
      %s141 = ssub.s32 %s10, 1
      // Predicated region
      $region13: #{resblock_forward.6} parent=11 // pred_check
        %p142 = pneg %p71
      $region14: #{resblock_forward.6} parent=11 // pred_check_branch
        %144 = sbr.rel (%p142) target = $region16
      $region15: #{resblock_forward.6} parent=11 // pred_region
        _
      $region16: #{resblock_forward.6} parent=11 // pred_fallthru
        _
    $region12: #{resblock_forward.6} parent=5 // pred_fallthru
      _
    %p145 = scmp.lt.s32.totalorder %s10, 4
    // Predicated region
    $region17: #{resblock_forward.6} parent=5 // pred_check
      %p146 = pneg %p145
    $region18: #{resblock_forward.6} parent=5 // pred_check_branch
      %148 = sbr.rel (%p146) target = $region20
    $region19: #{resblock_forward.6} parent=5 // pred_region
      // Predicated region
      $region21: #{resblock_forward.6} parent=19 // pred_check
        %p149 = pneg %p44
      $region22: #{resblock_forward.6} parent=19 // pred_check_branch
        %151 = sbr.rel (%p149) target = $region24
      $region23: #{resblock_forward.6} parent=19 // pred_region
        %p152 = scmp.lt.s32.totalorder %s17, 1
        %s153 = scalar_select %p152, %s17, 1
        %p154 = scmp.lt.s32.totalorder %s18, 1
        %s155 = scalar_select %p154, %s18, 1
        %s156 = smul.addr %s155, 30
        %s157 = smul.addr %s153, 60
        %s158 = sadd.s32 %s156, %s157
        %s159 = smul.addr %s158, 4
        %s160 = scalar_lea.vmem %s0, %s159
      $region24: #{resblock_forward.6} parent=19 // pred_fallthru
        _
    $region20: #{resblock_forward.6} parent=5 // pred_fallthru
      _
    %p161 = scmp.le.s32.totalorder 1, %s10
    %p162 = scmp.lt.s32.totalorder %s10, 5
    %p163 = pnand %p161, %p162
    %p164 = pneg %p163
    // Predicated region
    $region25: #{resblock_forward.6} parent=5 // pred_check
      _
    $region26: #{resblock_forward.6} parent=5 // pred_check_branch
      %166 = sbr.rel (%p163) target = $region28
    $region27: #{resblock_forward.6} parent=5 // pred_region
      %s167 = ssub.s32 %s10, 1
      %p168 = scmp.lt.s32.totalorder %s19, 1
      %s169 = scalar_select %p168, %s19, 1
      %p170 = scmp.lt.s32.totalorder %s20, 1
      %s171 = scalar_select %p170, %s20, 1
      %s172 = smul.addr %s171, 30
      %s173 = smul.addr %s169, 60
      %s174 = sadd.s32 %s172, %s173
      %s175 = smul.addr %s174, 4
      %s176 = scalar_lea.vmem %s0, %s175
      %p177 = pneg %p50
      %p178 = pneg %p47
      %p179 = pneg %p71
      %p180 = pneg %p68
      %p181 = pneg %p99
      %p182 = pneg %p96
      %s183 = smul.u32 8, %s20
      %p184 = scmp.lt.s32.totalorder %s19, 1
      %s185 = scalar_select %p184, %s19, 1
      %p186 = scmp.lt.s32.totalorder %s183, 15
      %s187 = scalar_select %p186, %s183, 15
      %s188 = smul.addr %s187, 2
      %s189 = smul.addr %s185, 32
      %s190 = sadd.s32 %s188, %s189
      %s191 = smul.addr %s190, 8
      %s192 = scalar_lea.vmem %s2, %s191
      %p193 = pneg %p127
      %p194 = pneg %p124
      %p195 = scmp.lt.s32.totalorder %s19, 1
      %s196 = scalar_select %p195, %s19, 1
      %p197 = scmp.lt.s32.totalorder %s20, 1
      %s198 = scalar_select %p197, %s20, 1
      %s199 = smul.addr %s196, 2
      %s200 = sadd.s32 %s198, %s199
      %s201 = smul.addr %s200, 2
      %s202 = scalar_lea.vmem %s3, %s201
      %p203 = scmp.lt.s32.totalorder %s19, 1
      %s204 = scalar_select %p203, %s19, 1
      %p205 = scmp.lt.s32.totalorder %s20, 1
      %s206 = scalar_select %p205, %s20, 1
      %s207 = smul.addr %s206, 30
      %s208 = smul.addr %s204, 60
      %s209 = sadd.s32 %s207, %s208
      %s210 = smul.addr %s209, 4
      %s211 = scalar_lea.vmem %s0, %s210
      %s212 = smul.u32 8, %s20
      %p213 = scmp.lt.s32.totalorder %s19, 1
      %s214 = scalar_select %p213, %s19, 1
      %p215 = scmp.lt.s32.totalorder %s212, 15
      %s216 = scalar_select %p215, %s212, 15
      %s217 = smul.addr %s216, 2
      %s218 = smul.addr %s214, 32
      %s219 = sadd.s32 %s217, %s218
      %s220 = smul.addr %s219, 8
      %s221 = scalar_lea.vmem %s2, %s220
      %s222 = smul.u32 8, %s20
      %p223 = scmp.lt.s32.totalorder %s19, 1
      %s224 = scalar_select %p223, %s19, 1
      %p225 = scmp.lt.s32.totalorder %s20, 1
      %s226 = scalar_select %p225, %s20, 1
      %s227 = smul.addr %s224, 2
      %s228 = sadd.s32 %s226, %s227
      %s229 = smul.addr %s228, 2
      %s230 = scalar_lea.vmem %s3, %s229
      %v232 = vld [vmem:[%s211] sm:$0xf]
      %v233 = vld [vmem:[%s211 + $0x4] sm:$0xf]
      %v234 = vld [vmem:[%s211 + $0x8] sm:$0x1]
      %v235 = vld [vmem:[%s211 + $0xc] sm:$0xf]
      %v236 = vld [vmem:[%s211 + $0x10] sm:$0xf]
      %v237 = vld [vmem:[%s211 + $0x14] sm:$0x1]
      %v238 = vld [vmem:[%s211 + $0x18] sm:$0xf]
      %v239 = vld [vmem:[%s211 + $0x1c] sm:$0xf]
      %v240 = vld [vmem:[%s211 + $0x20] sm:$0x1]
      %v241 = vld [vmem:[%s211 + $0x24] sm:$0xf]
      %v242 = vld [vmem:[%s211 + $0x28] sm:$0xf]
      %v243 = vld [vmem:[%s211 + $0x2c] sm:$0x1]
      %v244 = vld [vmem:[%s211 + $0x30] sm:$0xf]
      %v245 = vld [vmem:[%s211 + $0x34] sm:$0xf]
      %v246 = vld [vmem:[%s211 + $0x38] sm:$0x1]
      %v247 = vld [vmem:[%s211 + $0x3c] sm:$0xf]
      %v248 = vld [vmem:[%s211 + $0x40] sm:$0xf]
      %v249 = vld [vmem:[%s211 + $0x44] sm:$0x1]
      %v250 = vld [vmem:[%s211 + $0x48] sm:$0xf]
      %v251 = vld [vmem:[%s211 + $0x4c] sm:$0xf]
      %v252 = vld [vmem:[%s211 + $0x50] sm:$0x1]
      %v253 = vld [vmem:[%s211 + $0x54] sm:$0xf]
      %v254 = vld [vmem:[%s211 + $0x58] sm:$0xf]
      %v255 = vld [vmem:[%s211 + $0x5c] sm:$0x1]
      %v256 = vld [vmem:[%s211 + $0x60] sm:$0xf]
      %v257 = vld [vmem:[%s211 + $0x64] sm:$0xf]
      %v258 = vld [vmem:[%s211 + $0x68] sm:$0x1]
      %v259 = vld [vmem:[%s211 + $0x6c] sm:$0xf]
      %v260 = vld [vmem:[%s211 + $0x70] sm:$0xf]
      %v261 = vld [vmem:[%s211 + $0x74] sm:$0x1]
      %v262 = vunpack.c.l.bf16 %v232
      %v263 = vunpack.c.l.bf16 %v233
      %v264 = vunpack.c.l.bf16 %v234
      %v265 = vunpack.c.l.bf16 %v235
      %v266 = vunpack.c.l.bf16 %v236
      %v267 = vunpack.c.l.bf16 %v237
      %v268 = vunpack.c.l.bf16 %v238
      %v269 = vunpack.c.l.bf16 %v239
      %v270 = vunpack.c.l.bf16 %v240
      %v271 = vunpack.c.l.bf16 %v241
      %v272 = vunpack.c.l.bf16 %v242
      %v273 = vunpack.c.l.bf16 %v243
      %v274 = vunpack.c.l.bf16 %v244
      %v275 = vunpack.c.l.bf16 %v245
      %v276 = vunpack.c.l.bf16 %v246
      %v277 = vunpack.c.l.bf16 %v247
      %v278 = vunpack.c.l.bf16 %v248
      %v279 = vunpack.c.l.bf16 %v249
      %v280 = vunpack.c.l.bf16 %v250
      %v281 = vunpack.c.l.bf16 %v251
      %v282 = vunpack.c.l.bf16 %v252
      %v283 = vunpack.c.l.bf16 %v253
      %v284 = vunpack.c.l.bf16 %v254
      %v285 = vunpack.c.l.bf16 %v255
      %v286 = vunpack.c.l.bf16 %v256
      %v287 = vunpack.c.l.bf16 %v257
      %v288 = vunpack.c.l.bf16 %v258
      %v289 = vunpack.c.l.bf16 %v259
      %v290 = vunpack.c.l.bf16 %v260
      %v291 = vunpack.c.l.bf16 %v261
      %vm316 = vcmask 1046528
      %v317 = vrot.slane %v262, 1
      %v318 = vrot.slane %v263, 1
      %v319 = vsel %vm316, %v317, %v318
      %v320 = vrot.slane %v264, 1
      %v321 = vsel %vm316, %v318, %v320
      %v322 = vrot.slane %v265, 1
      %v323 = vrot.slane %v266, 1
      %v324 = vsel %vm316, %v322, %v323
      %v325 = vrot.slane %v267, 1
      %v326 = vsel %vm316, %v323, %v325
      %v327 = vrot.slane %v268, 1
      %v328 = vrot.slane %v269, 1
      %v329 = vsel %vm316, %v327, %v328
      %v330 = vrot.slane %v270, 1
      %v331 = vsel %vm316, %v328, %v330
      %v332 = vrot.slane %v271, 1
      %v333 = vrot.slane %v272, 1
      %v334 = vsel %vm316, %v332, %v333
      %v335 = vrot.slane %v273, 1
      %v336 = vsel %vm316, %v333, %v335
      %v337 = vrot.slane %v274, 1
      %v338 = vrot.slane %v275, 1
      %v339 = vsel %vm316, %v337, %v338
      %v340 = vrot.slane %v276, 1
      %v341 = vsel %vm316, %v338, %v340
      %v342 = vrot.slane %v277, 1
      %v343 = vrot.slane %v278, 1
      %v344 = vsel %vm316, %v342, %v343
      %v345 = vrot.slane %v279, 1
      %v346 = vsel %vm316, %v343, %v345
      %v347 = vrot.slane %v280, 1
      %v348 = vrot.slane %v281, 1
      %v349 = vsel %vm316, %v347, %v348
      %v350 = vrot.slane %v282, 1
      %v351 = vsel %vm316, %v348, %v350
      %v352 = vrot.slane %v283, 1
      %v353 = vrot.slane %v284, 1
      %v354 = vsel %vm316, %v352, %v353
      %v355 = vrot.slane %v285, 1
      %v356 = vsel %vm316, %v353, %v355
      %357 = vrot.lane.b32.xlu0 %v319, 4
      %v358 = vpop.permute.xlu0 %357
      %359 = vrot.lane.b32.xlu0 %v321, 4
      %v360 = vpop.permute.xlu0 %359
      %361 = vrot.lane.b32.xlu0 %v324, 4
      %v362 = vpop.permute.xlu0 %361
      %363 = vrot.lane.b32.xlu0 %v326, 4
      %v364 = vpop.permute.xlu0 %363
      %365 = vrot.lane.b32.xlu0 %v329, 4
      %v366 = vpop.permute.xlu0 %365
      %367 = vrot.lane.b32.xlu0 %v331, 4
      %v368 = vpop.permute.xlu0 %367
      %369 = vrot.lane.b32.xlu0 %v334, 4
      %v370 = vpop.permute.xlu0 %369
      %371 = vrot.lane.b32.xlu0 %v336, 4
      %v372 = vpop.permute.xlu0 %371
      %373 = vrot.lane.b32.xlu0 %v339, 4
      %v374 = vpop.permute.xlu0 %373
      %375 = vrot.lane.b32.xlu0 %v341, 4
      %v376 = vpop.permute.xlu0 %375
      %377 = vrot.lane.b32.xlu0 %v344, 4
      %v378 = vpop.permute.xlu0 %377
      %379 = vrot.lane.b32.xlu0 %v346, 4
      %v380 = vpop.permute.xlu0 %379
      %381 = vrot.lane.b32.xlu0 %v349, 4
      %v382 = vpop.permute.xlu0 %381
      %383 = vrot.lane.b32.xlu0 %v351, 4
      %v384 = vpop.permute.xlu0 %383
      %385 = vrot.lane.b32.xlu0 %v354, 4
      %v386 = vpop.permute.xlu0 %385
      %387 = vrot.lane.b32.xlu0 %v356, 4
      %v388 = vpop.permute.xlu0 %387
      %vm405 = vcmask 1045504
      %v406 = vrot.slane %v262, 2
      %v407 = vrot.slane %v263, 2
      %v408 = vsel %vm405, %v406, %v407
      %v409 = vrot.slane %v264, 2
      %v410 = vsel %vm405, %v407, %v409
      %v411 = vrot.slane %v265, 2
      %v412 = vrot.slane %v266, 2
      %v413 = vsel %vm405, %v411, %v412
      %v414 = vrot.slane %v267, 2
      %v415 = vsel %vm405, %v412, %v414
      %v416 = vrot.slane %v268, 2
      %v417 = vrot.slane %v269, 2
      %v418 = vsel %vm405, %v416, %v417
      %v419 = vrot.slane %v270, 2
      %v420 = vsel %vm405, %v417, %v419
      %v421 = vrot.slane %v271, 2
      %v422 = vrot.slane %v272, 2
      %v423 = vsel %vm405, %v421, %v422
      %v424 = vrot.slane %v273, 2
      %v425 = vsel %vm405, %v422, %v424
      %v426 = vrot.slane %v274, 2
      %v427 = vrot.slane %v275, 2
      %v428 = vsel %vm405, %v426, %v427
      %v429 = vrot.slane %v276, 2
      %v430 = vsel %vm405, %v427, %v429
      %v431 = vrot.slane %v277, 2
      %v432 = vrot.slane %v278, 2
      %v433 = vsel %vm405, %v431, %v432
      %v434 = vrot.slane %v279, 2
      %v435 = vsel %vm405, %v432, %v434
      %v436 = vrot.slane %v280, 2
      %v437 = vrot.slane %v281, 2
      %v438 = vsel %vm405, %v436, %v437
      %v439 = vrot.slane %v282, 2
      %v440 = vsel %vm405, %v437, %v439
      %v441 = vrot.slane %v283, 2
      %v442 = vrot.slane %v284, 2
      %v443 = vsel %vm405, %v441, %v442
      %v444 = vrot.slane %v285, 2
      %v445 = vsel %vm405, %v442, %v444
      %446 = vrot.lane.b32.xlu0 %v408, 8
      %v447 = vpop.permute.xlu0 %446
      %448 = vrot.lane.b32.xlu0 %v410, 8
      %v449 = vpop.permute.xlu0 %448
      %450 = vrot.lane.b32.xlu0 %v413, 8
      %v451 = vpop.permute.xlu0 %450
      %452 = vrot.lane.b32.xlu0 %v415, 8
      %v453 = vpop.permute.xlu0 %452
      %454 = vrot.lane.b32.xlu0 %v418, 8
      %v455 = vpop.permute.xlu0 %454
      %456 = vrot.lane.b32.xlu0 %v420, 8
      %v457 = vpop.permute.xlu0 %456
      %458 = vrot.lane.b32.xlu0 %v423, 8
      %v459 = vpop.permute.xlu0 %458
      %460 = vrot.lane.b32.xlu0 %v425, 8
      %v461 = vpop.permute.xlu0 %460
      %462 = vrot.lane.b32.xlu0 %v428, 8
      %v463 = vpop.permute.xlu0 %462
      %464 = vrot.lane.b32.xlu0 %v430, 8
      %v465 = vpop.permute.xlu0 %464
      %466 = vrot.lane.b32.xlu0 %v433, 8
      %v467 = vpop.permute.xlu0 %466
      %468 = vrot.lane.b32.xlu0 %v435, 8
      %v469 = vpop.permute.xlu0 %468
      %470 = vrot.lane.b32.xlu0 %v438, 8
      %v471 = vpop.permute.xlu0 %470
      %472 = vrot.lane.b32.xlu0 %v440, 8
      %v473 = vpop.permute.xlu0 %472
      %474 = vrot.lane.b32.xlu0 %v443, 8
      %v475 = vpop.permute.xlu0 %474
      %476 = vrot.lane.b32.xlu0 %v445, 8
      %v477 = vpop.permute.xlu0 %476
      %496 = vrot.lane.b32.xlu0 %v265, 12
      %v497 = vpop.permute.xlu0 %496
      %498 = vrot.lane.b32.xlu0 %v266, 12
      %v499 = vpop.permute.xlu0 %498
      %500 = vrot.lane.b32.xlu0 %v268, 12
      %v501 = vpop.permute.xlu0 %500
      %502 = vrot.lane.b32.xlu0 %v269, 12
      %v503 = vpop.permute.xlu0 %502
      %504 = vrot.lane.b32.xlu0 %v271, 12
      %v505 = vpop.permute.xlu0 %504
      %506 = vrot.lane.b32.xlu0 %v272, 12
      %v507 = vpop.permute.xlu0 %506
      %508 = vrot.lane.b32.xlu0 %v274, 12
      %v509 = vpop.permute.xlu0 %508
      %510 = vrot.lane.b32.xlu0 %v275, 12
      %v511 = vpop.permute.xlu0 %510
      %512 = vrot.lane.b32.xlu0 %v277, 12
      %v513 = vpop.permute.xlu0 %512
      %514 = vrot.lane.b32.xlu0 %v278, 12
      %v515 = vpop.permute.xlu0 %514
      %516 = vrot.lane.b32.xlu0 %v280, 12
      %v517 = vpop.permute.xlu0 %516
      %518 = vrot.lane.b32.xlu0 %v281, 12
      %v519 = vpop.permute.xlu0 %518
      %520 = vrot.lane.b32.xlu0 %v283, 12
      %v521 = vpop.permute.xlu0 %520
      %522 = vrot.lane.b32.xlu0 %v284, 12
      %v523 = vpop.permute.xlu0 %522
      %524 = vrot.lane.b32.xlu0 %v286, 12
      %v525 = vpop.permute.xlu0 %524
      %526 = vrot.lane.b32.xlu0 %v287, 12
      %v527 = vpop.permute.xlu0 %526
      %v545 = vrot.slane %v286, 1
      %v546 = vrot.slane %v287, 1
      %v547 = vsel %vm316, %v545, %v546
      %v548 = vrot.slane %v288, 1
      %v549 = vsel %vm316, %v546, %v548
      %550 = vrot.lane.b32.xlu0 %v324, 16
      %v551 = vpop.permute.xlu0 %550
      %552 = vrot.lane.b32.xlu0 %v326, 16
      %v553 = vpop.permute.xlu0 %552
      %554 = vrot.lane.b32.xlu0 %v329, 16
      %v555 = vpop.permute.xlu0 %554
      %556 = vrot.lane.b32.xlu0 %v331, 16
      %v557 = vpop.permute.xlu0 %556
      %558 = vrot.lane.b32.xlu0 %v334, 16
      %v559 = vpop.permute.xlu0 %558
      %560 = vrot.lane.b32.xlu0 %v336, 16
      %v561 = vpop.permute.xlu0 %560
      %562 = vrot.lane.b32.xlu0 %v339, 16
      %v563 = vpop.permute.xlu0 %562
      %564 = vrot.lane.b32.xlu0 %v341, 16
      %v565 = vpop.permute.xlu0 %564
      %566 = vrot.lane.b32.xlu0 %v344, 16
      %v567 = vpop.permute.xlu0 %566
      %568 = vrot.lane.b32.xlu0 %v346, 16
      %v569 = vpop.permute.xlu0 %568
      %570 = vrot.lane.b32.xlu0 %v349, 16
      %v571 = vpop.permute.xlu0 %570
      %572 = vrot.lane.b32.xlu0 %v351, 16
      %v573 = vpop.permute.xlu0 %572
      %574 = vrot.lane.b32.xlu0 %v354, 16
      %v575 = vpop.permute.xlu0 %574
      %576 = vrot.lane.b32.xlu0 %v356, 16
      %v577 = vpop.permute.xlu0 %576
      %578 = vrot.lane.b32.xlu0 %v547, 16
      %v579 = vpop.permute.xlu0 %578
      %580 = vrot.lane.b32.xlu0 %v549, 16
      %v581 = vpop.permute.xlu0 %580
      %v598 = vrot.slane %v286, 2
      %v599 = vrot.slane %v287, 2
      %v600 = vsel %vm405, %v598, %v599
      %v601 = vrot.slane %v288, 2
      %v602 = vsel %vm405, %v599, %v601
      %603 = vrot.lane.b32.xlu0 %v413, 20
      %v604 = vpop.permute.xlu0 %603
      %605 = vrot.lane.b32.xlu0 %v415, 20
      %v606 = vpop.permute.xlu0 %605
      %607 = vrot.lane.b32.xlu0 %v418, 20
      %v608 = vpop.permute.xlu0 %607
      %609 = vrot.lane.b32.xlu0 %v420, 20
      %v610 = vpop.permute.xlu0 %609
      %611 = vrot.lane.b32.xlu0 %v423, 20
      %v612 = vpop.permute.xlu0 %611
      %613 = vrot.lane.b32.xlu0 %v425, 20
      %v614 = vpop.permute.xlu0 %613
      %615 = vrot.lane.b32.xlu0 %v428, 20
      %v616 = vpop.permute.xlu0 %615
      %617 = vrot.lane.b32.xlu0 %v430, 20
      %v618 = vpop.permute.xlu0 %617
      %619 = vrot.lane.b32.xlu0 %v433, 20
      %v620 = vpop.permute.xlu0 %619
      %621 = vrot.lane.b32.xlu0 %v435, 20
      %v622 = vpop.permute.xlu0 %621
      %623 = vrot.lane.b32.xlu0 %v438, 20
      %v624 = vpop.permute.xlu0 %623
      %625 = vrot.lane.b32.xlu0 %v440, 20
      %v626 = vpop.permute.xlu0 %625
      %627 = vrot.lane.b32.xlu0 %v443, 20
      %v628 = vpop.permute.xlu0 %627
      %629 = vrot.lane.b32.xlu0 %v445, 20
      %v630 = vpop.permute.xlu0 %629
      %631 = vrot.lane.b32.xlu0 %v600, 20
      %v632 = vpop.permute.xlu0 %631
      %633 = vrot.lane.b32.xlu0 %v602, 20
      %v634 = vpop.permute.xlu0 %633
      %653 = vrot.lane.b32.xlu0 %v268, 24
      %v654 = vpop.permute.xlu0 %653
      %655 = vrot.lane.b32.xlu0 %v269, 24
      %v656 = vpop.permute.xlu0 %655
      %657 = vrot.lane.b32.xlu0 %v271, 24
      %v658 = vpop.permute.xlu0 %657
      %659 = vrot.lane.b32.xlu0 %v272, 24
      %v660 = vpop.permute.xlu0 %659
      %661 = vrot.lane.b32.xlu0 %v274, 24
      %v662 = vpop.permute.xlu0 %661
      %663 = vrot.lane.b32.xlu0 %v275, 24
      %v664 = vpop.permute.xlu0 %663
      %665 = vrot.lane.b32.xlu0 %v277, 24
      %v666 = vpop.permute.xlu0 %665
      %667 = vrot.lane.b32.xlu0 %v278, 24
      %v668 = vpop.permute.xlu0 %667
      %669 = vrot.lane.b32.xlu0 %v280, 24
      %v670 = vpop.permute.xlu0 %669
      %671 = vrot.lane.b32.xlu0 %v281, 24
      %v672 = vpop.permute.xlu0 %671
      %673 = vrot.lane.b32.xlu0 %v283, 24
      %v674 = vpop.permute.xlu0 %673
      %675 = vrot.lane.b32.xlu0 %v284, 24
      %v676 = vpop.permute.xlu0 %675
      %677 = vrot.lane.b32.xlu0 %v286, 24
      %v678 = vpop.permute.xlu0 %677
      %679 = vrot.lane.b32.xlu0 %v287, 24
      %v680 = vpop.permute.xlu0 %679
      %681 = vrot.lane.b32.xlu0 %v289, 24
      %v682 = vpop.permute.xlu0 %681
      %683 = vrot.lane.b32.xlu0 %v290, 24
      %v684 = vpop.permute.xlu0 %683
      %v702 = vrot.slane %v289, 1
      %v703 = vrot.slane %v290, 1
      %v704 = vsel %vm316, %v702, %v703
      %v705 = vrot.slane %v291, 1
      %v706 = vsel %vm316, %v703, %v705
      %707 = vrot.lane.b32.xlu0 %v329, 28
      %v708 = vpop.permute.xlu0 %707
      %709 = vrot.lane.b32.xlu0 %v331, 28
      %v710 = vpop.permute.xlu0 %709
      %711 = vrot.lane.b32.xlu0 %v334, 28
      %v712 = vpop.permute.xlu0 %711
      %713 = vrot.lane.b32.xlu0 %v336, 28
      %v714 = vpop.permute.xlu0 %713
      %715 = vrot.lane.b32.xlu0 %v339, 28
      %v716 = vpop.permute.xlu0 %715
      %717 = vrot.lane.b32.xlu0 %v341, 28
      %v718 = vpop.permute.xlu0 %717
      %719 = vrot.lane.b32.xlu0 %v344, 28
      %v720 = vpop.permute.xlu0 %719
      %721 = vrot.lane.b32.xlu0 %v346, 28
      %v722 = vpop.permute.xlu0 %721
      %723 = vrot.lane.b32.xlu0 %v349, 28
      %v724 = vpop.permute.xlu0 %723
      %725 = vrot.lane.b32.xlu0 %v351, 28
      %v726 = vpop.permute.xlu0 %725
      %727 = vrot.lane.b32.xlu0 %v354, 28
      %v728 = vpop.permute.xlu0 %727
      %729 = vrot.lane.b32.xlu0 %v356, 28
      %v730 = vpop.permute.xlu0 %729
      %731 = vrot.lane.b32.xlu0 %v547, 28
      %v732 = vpop.permute.xlu0 %731
      %733 = vrot.lane.b32.xlu0 %v549, 28
      %v734 = vpop.permute.xlu0 %733
      %735 = vrot.lane.b32.xlu0 %v704, 28
      %v736 = vpop.permute.xlu0 %735
      %737 = vrot.lane.b32.xlu0 %v706, 28
      %v738 = vpop.permute.xlu0 %737
      %v755 = vrot.slane %v289, 2
      %v756 = vrot.slane %v290, 2
      %v757 = vsel %vm405, %v755, %v756
      %v758 = vrot.slane %v291, 2
      %v759 = vsel %vm405, %v756, %v758
      %760 = vrot.lane.b32.xlu0 %v418, 32
      %v761 = vpop.permute.xlu0 %760
      %762 = vrot.lane.b32.xlu0 %v420, 32
      %v763 = vpop.permute.xlu0 %762
      %764 = vrot.lane.b32.xlu0 %v423, 32
      %v765 = vpop.permute.xlu0 %764
      %766 = vrot.lane.b32.xlu0 %v425, 32
      %v767 = vpop.permute.xlu0 %766
      %768 = vrot.lane.b32.xlu0 %v428, 32
      %v769 = vpop.permute.xlu0 %768
      %770 = vrot.lane.b32.xlu0 %v430, 32
      %v771 = vpop.permute.xlu0 %770
      %772 = vrot.lane.b32.xlu0 %v433, 32
      %v773 = vpop.permute.xlu0 %772
      %774 = vrot.lane.b32.xlu0 %v435, 32
      %v775 = vpop.permute.xlu0 %774
      %776 = vrot.lane.b32.xlu0 %v438, 32
      %v777 = vpop.permute.xlu0 %776
      %778 = vrot.lane.b32.xlu0 %v440, 32
      %v779 = vpop.permute.xlu0 %778
      %780 = vrot.lane.b32.xlu0 %v443, 32
      %v781 = vpop.permute.xlu0 %780
      %782 = vrot.lane.b32.xlu0 %v445, 32
      %v783 = vpop.permute.xlu0 %782
      %784 = vrot.lane.b32.xlu0 %v600, 32
      %v785 = vpop.permute.xlu0 %784
      %786 = vrot.lane.b32.xlu0 %v602, 32
      %v787 = vpop.permute.xlu0 %786
      %788 = vrot.lane.b32.xlu0 %v757, 32
      %v789 = vpop.permute.xlu0 %788
      %790 = vrot.lane.b32.xlu0 %v759, 32
      %v791 = vpop.permute.xlu0 %790
      %vm808 = vcmask 31744
      %v809 = vsel %vm808, %v262, %v358
      %v810 = vsel %vm808, %v263, %v360
      %v811 = vsel %vm808, %v265, %v362
      %v812 = vsel %vm808, %v266, %v364
      %v813 = vsel %vm808, %v268, %v366
      %v814 = vsel %vm808, %v269, %v368
      %v815 = vsel %vm808, %v271, %v370
      %v816 = vsel %vm808, %v272, %v372
      %v817 = vsel %vm808, %v274, %v374
      %v818 = vsel %vm808, %v275, %v376
      %v819 = vsel %vm808, %v277, %v378
      %v820 = vsel %vm808, %v278, %v380
      %v821 = vsel %vm808, %v280, %v382
      %v822 = vsel %vm808, %v281, %v384
      %v823 = vsel %vm808, %v283, %v386
      %v824 = vsel %vm808, %v284, %v388
      %vm825 = vcmask 64512
      %v826 = vsel %vm825, %v809, %v447
      %v827 = vsel %vm825, %v810, %v449
      %v828 = vsel %vm825, %v811, %v451
      %v829 = vsel %vm825, %v812, %v453
      %v830 = vsel %vm825, %v813, %v455
      %v831 = vsel %vm825, %v814, %v457
      %v832 = vsel %vm825, %v815, %v459
      %v833 = vsel %vm825, %v816, %v461
      %v834 = vsel %vm825, %v817, %v463
      %v835 = vsel %vm825, %v818, %v465
      %v836 = vsel %vm825, %v819, %v467
      %v837 = vsel %vm825, %v820, %v469
      %v838 = vsel %vm825, %v821, %v471
      %v839 = vsel %vm825, %v822, %v473
      %v840 = vsel %vm825, %v823, %v475
      %v841 = vsel %vm825, %v824, %v477
      %vm842 = vcmask 97280
      %v843 = vsel %vm842, %v826, %v497
      %v844 = vsel %vm842, %v827, %v499
      %v845 = vsel %vm842, %v828, %v501
      %v846 = vsel %vm842, %v829, %v503
      %v847 = vsel %vm842, %v830, %v505
      %v848 = vsel %vm842, %v831, %v507
      %v849 = vsel %vm842, %v832, %v509
      %v850 = vsel %vm842, %v833, %v511
      %v851 = vsel %vm842, %v834, %v513
      %v852 = vsel %vm842, %v835, %v515
      %v853 = vsel %vm842, %v836, %v517
      %v854 = vsel %vm842, %v837, %v519
      %v855 = vsel %vm842, %v838, %v521
      %v856 = vsel %vm842, %v839, %v523
      %v857 = vsel %vm842, %v840, %v525
      %v858 = vsel %vm842, %v841, %v527
      %vm859 = vcmask 130048
      %v860 = vsel %vm859, %v843, %v551
      %v861 = vsel %vm859, %v844, %v553
      %v862 = vsel %vm859, %v845, %v555
      %v863 = vsel %vm859, %v846, %v557
      %v864 = vsel %vm859, %v847, %v559
      %v865 = vsel %vm859, %v848, %v561
      %v866 = vsel %vm859, %v849, %v563
      %v867 = vsel %vm859, %v850, %v565
      %v868 = vsel %vm859, %v851, %v567
      %v869 = vsel %vm859, %v852, %v569
      %v870 = vsel %vm859, %v853, %v571
      %v871 = vsel %vm859, %v854, %v573
      %v872 = vsel %vm859, %v855, %v575
      %v873 = vsel %vm859, %v856, %v577
      %v874 = vsel %vm859, %v857, %v579
      %v875 = vsel %vm859, %v858, %v581
      %vm876 = vcmask 162816
      %v877 = vsel %vm876, %v860, %v604
      %v878 = vsel %vm876, %v861, %v606
      %v879 = vsel %vm876, %v862, %v608
      %v880 = vsel %vm876, %v863, %v610
      %v881 = vsel %vm876, %v864, %v612
      %v882 = vsel %vm876, %v865, %v614
      %v883 = vsel %vm876, %v866, %v616
      %v884 = vsel %vm876, %v867, %v618
      %v885 = vsel %vm876, %v868, %v620
      %v886 = vsel %vm876, %v869, %v622
      %v887 = vsel %vm876, %v870, %v624
      %v888 = vsel %vm876, %v871, %v626
      %v889 = vsel %vm876, %v872, %v628
      %v890 = vsel %vm876, %v873, %v630
      %v891 = vsel %vm876, %v874, %v632
      %v892 = vsel %vm876, %v875, %v634
      %vm893 = vcmask 195584
      %v894 = vsel %vm893, %v877, %v654
      %v895 = vsel %vm893, %v878, %v656
      %v896 = vsel %vm893, %v879, %v658
      %v897 = vsel %vm893, %v880, %v660
      %v898 = vsel %vm893, %v881, %v662
      %v899 = vsel %vm893, %v882, %v664
      %v900 = vsel %vm893, %v883, %v666
      %v901 = vsel %vm893, %v884, %v668
      %v902 = vsel %vm893, %v885, %v670
      %v903 = vsel %vm893, %v886, %v672
      %v904 = vsel %vm893, %v887, %v674
      %v905 = vsel %vm893, %v888, %v676
      %v906 = vsel %vm893, %v889, %v678
      %v907 = vsel %vm893, %v890, %v680
      %v908 = vsel %vm893, %v891, %v682
      %v909 = vsel %vm893, %v892, %v684
      %vm910 = vcmask 228352
      %v911 = vsel %vm910, %v894, %v708
      %v912 = vsel %vm910, %v895, %v710
      %v913 = vsel %vm910, %v896, %v712
      %v914 = vsel %vm910, %v897, %v714
      %v915 = vsel %vm910, %v898, %v716
      %v916 = vsel %vm910, %v899, %v718
      %v917 = vsel %vm910, %v900, %v720
      %v918 = vsel %vm910, %v901, %v722
      %v919 = vsel %vm910, %v902, %v724
      %v920 = vsel %vm910, %v903, %v726
      %v921 = vsel %vm910, %v904, %v728
      %v922 = vsel %vm910, %v905, %v730
      %v923 = vsel %vm910, %v906, %v732
      %v924 = vsel %vm910, %v907, %v734
      %v925 = vsel %vm910, %v908, %v736
      %v926 = vsel %vm910, %v909, %v738
      %vm927 = vcmask 261120
      %v928 = vsel %vm927, %v911, %v761
      %v929 = vsel %vm927, %v912, %v763
      %v930 = vsel %vm927, %v913, %v765
      %v931 = vsel %vm927, %v914, %v767
      %v932 = vsel %vm927, %v915, %v769
      %v933 = vsel %vm927, %v916, %v771
      %v934 = vsel %vm927, %v917, %v773
      %v935 = vsel %vm927, %v918, %v775
      %v936 = vsel %vm927, %v919, %v777
      %v937 = vsel %vm927, %v920, %v779
      %v938 = vsel %vm927, %v921, %v781
      %v939 = vsel %vm927, %v922, %v783
      %v940 = vsel %vm927, %v923, %v785
      %v941 = vsel %vm927, %v924, %v787
      %v942 = vsel %vm927, %v925, %v789
      %v943 = vsel %vm927, %v926, %v791
      %v944 = vpack.c.bf16 %v929, %v928
      %v945 = vpack.c.bf16 %v931, %v930
      %v946 = vpack.c.bf16 %v933, %v932
      %v947 = vpack.c.bf16 %v935, %v934
      %v948 = vpack.c.bf16 %v937, %v936
      %v949 = vpack.c.bf16 %v939, %v938
      %v950 = vpack.c.bf16 %v941, %v940
      %v951 = vpack.c.bf16 %v943, %v942
      %v952 = vld [vmem:[%s1] sm:$0xf]
      %v953 = vld [vmem:[%s1 + $0x4] sm:$0xf]
      %v954 = vld [vmem:[%s1 + $0x8] sm:$0xf]
      %v955 = vld [vmem:[%s1 + $0xc] sm:$0xf]
      %v956 = vld [vmem:[%s1 + $0x10] sm:$0x3]
      %v962 = vunpack.c.l.b16 %v952
      %v963 = vunpack.c.l.b16 %v953
      %v964 = vunpack.c.l.b16 %v954
      %v965 = vunpack.c.l.b16 %v955
      %v966 = vunpack.c.l.b16 %v956
      %v967 = vpack.c.b16 %v963, %v962
      %v968 = vpack.c.b16 %v965, %v964
      %v969 = vpack.c.b16 %v966, %v966
      %vm972 = vcmask 293888
      %v974 = vsel %vm972, %v944, 0
      %v977 = vsel %vm972, %v945, 0
      %v980 = vsel %vm972, %v946, 0
      %v983 = vsel %vm972, %v947, 0
      %v986 = vsel %vm972, %v948, 0
      %v989 = vsel %vm972, %v949, 0
      %v992 = vsel %vm972, %v950, 0
      %v995 = vsel %vm972, %v951, 0
      %vm997 = vcmask 1041408
      %v999 = vsel %vm997, %v969, 0
      %1001 = vmatprep.subr.bf16.mxu0 0
      %1002 = vmatpush1.bf16.msra.mxu0 0
      %1003 = vmatprep.subr.bf16.mxu0 0
      %1004 = vmatpush1.bf16.msra.mxu0 0
      %1005 = vmatprep.subr.bf16.mxu0 0
      %1006 = vmatpush1.bf16.msra.mxu0 0
      %1007 = vmatprep.subr.bf16.mxu0 0
      %1008 = vmatpush1.bf16.msra.mxu0 0
      %1009 = vmatprep.subr.bf16.mxu0 0
      %1010 = vmatpush1.bf16.msra.mxu0 0
      %1011 = vmatprep.subr.bf16.mxu0 0
      %1012 = vmatpush1.bf16.msra.mxu0 %v999
      %1013 = vmatprep.subr.bf16.mxu0 0
      %1014 = vmatpush1.bf16.msra.mxu0 %v968
      %1015 = vmatprep.subr.bf16.mxu0 0
      %1016 = vmatpush1.bf16.msra.mxu0 %v967
      %1017 = vmatprep.subr.bf16.mxu0 0
      %1018 = vmatpush2.bf16.msra.mxu0 0
      %1019 = vmatprep.subr.bf16.mxu0 0
      %1020 = vmatpush2.bf16.msra.mxu0 0
      %1021 = vmatprep.subr.bf16.mxu0 0
      %1022 = vmatpush2.bf16.msra.mxu0 0
      %1023 = vmatprep.subr.bf16.mxu0 0
      %1024 = vmatpush2.bf16.msra.mxu0 0
      %1025 = vmatprep.subr.bf16.mxu0 0
      %1026 = vmatpush2.bf16.msra.mxu0 0
      %1027 = vmatprep.subr.bf16.mxu0 0
      %1028 = vmatpush2.bf16.msra.mxu0 0
      %1029 = vmatprep.subr.bf16.mxu0 0
      %1030 = vmatpush2.bf16.msra.mxu0 0
      %1031 = vmatprep.subr.bf16.mxu0 0
      %1032 = vmatpush2.bf16.msra.mxu0 0
      %1033 = vmatprep.mubr.bf16.mxu0 0
      %1034 = vmatmul.mubr.bf16.gmra.mxu0 %v974
      %v1035 = vpop.f32.mrf.mxu0
      %v1036 = vadd.f32 0.0, %v1035
      %v1037 = vpop.f32.mrf.mxu0
      %v1038 = vpop.f32.mrf.mxu0
      %v1039 = vadd.f32 0.0, %v1038
      %v1040 = vpop.f32.mrf.mxu0
      %1041 = vmatprep.mubr.bf16.mxu0 0
      %1042 = vmatmul.mubr.bf16.gmra.mxu0 %v977
      %v1043 = vpop.f32.mrf.mxu0
      %v1044 = vadd.f32 0.0, %v1043
      %v1045 = vpop.f32.mrf.mxu0
      %v1046 = vpop.f32.mrf.mxu0
      %v1047 = vadd.f32 0.0, %v1046
      %v1048 = vpop.f32.mrf.mxu0
      %1049 = vmatprep.mubr.bf16.mxu0 0
      %1050 = vmatmul.mubr.bf16.gmra.mxu0 %v980
      %v1051 = vpop.f32.mrf.mxu0
      %v1052 = vadd.f32 0.0, %v1051
      %v1053 = vpop.f32.mrf.mxu0
      %v1054 = vpop.f32.mrf.mxu0
      %v1055 = vadd.f32 0.0, %v1054
      %v1056 = vpop.f32.mrf.mxu0
      %1057 = vmatprep.mubr.bf16.mxu0 0
      %1058 = vmatmul.mubr.bf16.gmra.mxu0 %v983
      %v1059 = vpop.f32.mrf.mxu0
      %v1060 = vadd.f32 0.0, %v1059
      %v1061 = vpop.f32.mrf.mxu0
      %v1062 = vpop.f32.mrf.mxu0
      %v1063 = vadd.f32 0.0, %v1062
      %v1064 = vpop.f32.mrf.mxu0
      %1065 = vmatprep.mubr.bf16.mxu0 0
      %1066 = vmatmul.mubr.bf16.gmra.mxu0 %v986
      %v1067 = vpop.f32.mrf.mxu0
      %v1068 = vadd.f32 0.0, %v1067
      %v1069 = vpop.f32.mrf.mxu0
      %v1070 = vpop.f32.mrf.mxu0
      %v1071 = vadd.f32 0.0, %v1070
      %v1072 = vpop.f32.mrf.mxu0
      %1073 = vmatprep.mubr.bf16.mxu0 0
      %1074 = vmatmul.mubr.bf16.gmra.mxu0 %v989
      %v1075 = vpop.f32.mrf.mxu0
      %v1076 = vadd.f32 0.0, %v1075
      %v1077 = vpop.f32.mrf.mxu0
      %v1078 = vpop.f32.mrf.mxu0
      %v1079 = vadd.f32 0.0, %v1078
      %v1080 = vpop.f32.mrf.mxu0
      %1081 = vmatprep.mubr.bf16.mxu0 0
      %1082 = vmatmul.mubr.bf16.gmra.mxu0 %v992
      %v1083 = vpop.f32.mrf.mxu0
      %v1084 = vadd.f32 0.0, %v1083
      %v1085 = vpop.f32.mrf.mxu0
      %v1086 = vpop.f32.mrf.mxu0
      %v1087 = vadd.f32 0.0, %v1086
      %v1088 = vpop.f32.mrf.mxu0
      %1089 = vmatprep.mubr.bf16.mxu0 0
      %1090 = vmatmul.mubr.bf16.gmra.mxu0 %v995
      %v1091 = vpop.f32.mrf.mxu0
      %v1092 = vadd.f32 0.0, %v1091
      %v1093 = vpop.f32.mrf.mxu0
      %v1094 = vpop.f32.mrf.mxu0
      %v1095 = vadd.f32 0.0, %v1094
      %v1096 = vpop.f32.mrf.mxu0
      %1097 = vdwg.mxu0
      %vm1098 = vcmp.gt.f32.partialorder %v1036, 0.0
      %vm1099 = vcmp.gt.f32.partialorder %v1039, 0.0
      %vm1100 = vcmp.gt.f32.partialorder %v1044, 0.0
      %vm1101 = vcmp.gt.f32.partialorder %v1047, 0.0
      %vm1102 = vcmp.gt.f32.partialorder %v1052, 0.0
      %vm1103 = vcmp.gt.f32.partialorder %v1055, 0.0
      %vm1104 = vcmp.gt.f32.partialorder %v1060, 0.0
      %vm1105 = vcmp.gt.f32.partialorder %v1063, 0.0
      %vm1106 = vcmp.gt.f32.partialorder %v1068, 0.0
      %vm1107 = vcmp.gt.f32.partialorder %v1071, 0.0
      %vm1108 = vcmp.gt.f32.partialorder %v1076, 0.0
      %vm1109 = vcmp.gt.f32.partialorder %v1079, 0.0
      %vm1110 = vcmp.gt.f32.partialorder %v1084, 0.0
      %vm1111 = vcmp.gt.f32.partialorder %v1087, 0.0
      %vm1112 = vcmp.gt.f32.partialorder %v1092, 0.0
      %vm1113 = vcmp.gt.f32.partialorder %v1095, 0.0
      %v1114 = vmul.f32 %v1036, 0.2
      %v1115 = vmul.f32 %v1039, 0.2
      %v1116 = vmul.f32 %v1044, 0.2
      %v1117 = vmul.f32 %v1047, 0.2
      %v1118 = vmul.f32 %v1052, 0.2
      %v1119 = vmul.f32 %v1055, 0.2
      %v1120 = vmul.f32 %v1060, 0.2
      %v1121 = vmul.f32 %v1063, 0.2
      %v1122 = vmul.f32 %v1068, 0.2
      %v1123 = vmul.f32 %v1071, 0.2
      %v1124 = vmul.f32 %v1076, 0.2
      %v1125 = vmul.f32 %v1079, 0.2
      %v1126 = vmul.f32 %v1084, 0.2
      %v1127 = vmul.f32 %v1087, 0.2
      %v1128 = vmul.f32 %v1092, 0.2
      %v1129 = vmul.f32 %v1095, 0.2
      %v1130 = vsel %vm1098, %v1036, %v1114
      %v1131 = vsel %vm1099, %v1039, %v1115
      %v1132 = vsel %vm1100, %v1044, %v1116
      %v1133 = vsel %vm1101, %v1047, %v1117
      %v1134 = vsel %vm1102, %v1052, %v1118
      %v1135 = vsel %vm1103, %v1055, %v1119
      %v1136 = vsel %vm1104, %v1060, %v1120
      %v1137 = vsel %vm1105, %v1063, %v1121
      %v1138 = vsel %vm1106, %v1068, %v1122
      %v1139 = vsel %vm1107, %v1071, %v1123
      %v1140 = vsel %vm1108, %v1076, %v1124
      %v1141 = vsel %vm1109, %v1079, %v1125
      %v1142 = vsel %vm1110, %v1084, %v1126
      %v1143 = vsel %vm1111, %v1087, %v1127
      %v1144 = vsel %vm1112, %v1092, %v1128
      %v1145 = vsel %vm1113, %v1095, %v1129
      %1146 = vst.msk [vmem:[%s221] sm:$0xff] %vm825, %v1130
      %1147 = vst.msk [vmem:[%s221 + $0x8] sm:$0xff] %vm825, %v1131
      %1148 = vst.msk [vmem:[%s221 + $0x10] sm:$0xff] %vm825, %v1132
      %1149 = vst.msk [vmem:[%s221 + $0x18] sm:$0xff] %vm825, %v1133
      %1150 = vst.msk [vmem:[%s221 + $0x20] sm:$0xff] %vm825, %v1134
      %1151 = vst.msk [vmem:[%s221 + $0x28] sm:$0xff] %vm825, %v1135
      %1152 = vst.msk [vmem:[%s221 + $0x30] sm:$0xff] %vm825, %v1136
      %1153 = vst.msk [vmem:[%s221 + $0x38] sm:$0xff] %vm825, %v1137
      %1154 = vst.msk [vmem:[%s221 + $0x40] sm:$0xff] %vm825, %v1138
      %1155 = vst.msk [vmem:[%s221 + $0x48] sm:$0xff] %vm825, %v1139
      %1156 = vst.msk [vmem:[%s221 + $0x50] sm:$0xff] %vm825, %v1140
      %1157 = vst.msk [vmem:[%s221 + $0x58] sm:$0xff] %vm825, %v1141
      %1158 = vst.msk [vmem:[%s221 + $0x60] sm:$0xff] %vm825, %v1142
      %1159 = vst.msk [vmem:[%s221 + $0x68] sm:$0xff] %vm825, %v1143
      %1160 = vst.msk [vmem:[%s221 + $0x70] sm:$0xff] %vm825, %v1144
      %1161 = vst.msk [vmem:[%s221 + $0x78] sm:$0xff] %vm825, %v1145
      %v1162 = vsel %vm825, %v1130, 0.0
      %v1163 = vsel %vm825, %v1131, 0.0
      %v1164 = vadd.f32 %v1162, %v1163
      %v1165 = vsel %vm825, %v1132, 0.0
      %v1166 = vadd.f32 %v1164, %v1165
      %v1167 = vsel %vm825, %v1133, 0.0
      %v1168 = vadd.f32 %v1166, %v1167
      %v1169 = vsel %vm825, %v1134, 0.0
      %v1170 = vadd.f32 %v1168, %v1169
      %v1171 = vsel %vm825, %v1135, 0.0
      %v1172 = vadd.f32 %v1170, %v1171
      %v1173 = vsel %vm825, %v1136, 0.0
      %v1174 = vadd.f32 %v1172, %v1173
      %v1175 = vsel %vm825, %v1137, 0.0
      %v1176 = vadd.f32 %v1174, %v1175
      %v1177 = vsel %vm825, %v1138, 0.0
      %v1178 = vadd.f32 %v1176, %v1177
      %v1179 = vsel %vm825, %v1139, 0.0
      %v1180 = vadd.f32 %v1178, %v1179
      %v1181 = vsel %vm825, %v1140, 0.0
      %v1182 = vadd.f32 %v1180, %v1181
      %v1183 = vsel %vm825, %v1141, 0.0
      %v1184 = vadd.f32 %v1182, %v1183
      %v1185 = vsel %vm825, %v1142, 0.0
      %v1186 = vadd.f32 %v1184, %v1185
      %v1187 = vsel %vm825, %v1143, 0.0
      %v1188 = vadd.f32 %v1186, %v1187
      %v1189 = vsel %vm825, %v1144, 0.0
      %v1190 = vadd.f32 %v1188, %v1189
      %v1191 = vsel %vm825, %v1145, 0.0
      %v1192 = vadd.f32 %v1190, %v1191
      %v1193 = vrot.slane %v1192, 4
      %v1194 = vadd.f32 %v1192, %v1193
      %v1195 = vrot.slane %v1194, 2
      %v1196 = vadd.f32 %v1194, %v1195
      %v1197 = vrot.slane %v1196, 1
      %v1198 = vadd.f32 %v1196, %v1197
      %v1199 = vmul.f32 %v1130, %v1130
      %v1200 = vmul.f32 %v1131, %v1131
      %v1201 = vmul.f32 %v1132, %v1132
      %v1202 = vmul.f32 %v1133, %v1133
      %v1203 = vmul.f32 %v1134, %v1134
      %v1204 = vmul.f32 %v1135, %v1135
      %v1205 = vmul.f32 %v1136, %v1136
      %v1206 = vmul.f32 %v1137, %v1137
      %v1207 = vmul.f32 %v1138, %v1138
      %v1208 = vmul.f32 %v1139, %v1139
      %v1209 = vmul.f32 %v1140, %v1140
      %v1210 = vmul.f32 %v1141, %v1141
      %v1211 = vmul.f32 %v1142, %v1142
      %v1212 = vmul.f32 %v1143, %v1143
      %v1213 = vmul.f32 %v1144, %v1144
      %v1214 = vmul.f32 %v1145, %v1145
      %v1215 = vsel %vm825, %v1199, 0.0
      %v1216 = vsel %vm825, %v1200, 0.0
      %v1217 = vadd.f32 %v1215, %v1216
      %v1218 = vsel %vm825, %v1201, 0.0
      %v1219 = vadd.f32 %v1217, %v1218
      %v1220 = vsel %vm825, %v1202, 0.0
      %v1221 = vadd.f32 %v1219, %v1220
      %v1222 = vsel %vm825, %v1203, 0.0
      %v1223 = vadd.f32 %v1221, %v1222
      %v1224 = vsel %vm825, %v1204, 0.0
      %v1225 = vadd.f32 %v1223, %v1224
      %v1226 = vsel %vm825, %v1205, 0.0
      %v1227 = vadd.f32 %v1225, %v1226
      %v1228 = vsel %vm825, %v1206, 0.0
      %v1229 = vadd.f32 %v1227, %v1228
      %v1230 = vsel %vm825, %v1207, 0.0
      %v1231 = vadd.f32 %v1229, %v1230
      %v1232 = vsel %vm825, %v1208, 0.0
      %v1233 = vadd.f32 %v1231, %v1232
      %v1234 = vsel %vm825, %v1209, 0.0
      %v1235 = vadd.f32 %v1233, %v1234
      %v1236 = vsel %vm825, %v1210, 0.0
      %v1237 = vadd.f32 %v1235, %v1236
      %v1238 = vsel %vm825, %v1211, 0.0
      %v1239 = vadd.f32 %v1237, %v1238
      %v1240 = vsel %vm825, %v1212, 0.0
      %v1241 = vadd.f32 %v1239, %v1240
      %v1242 = vsel %vm825, %v1213, 0.0
      %v1243 = vadd.f32 %v1241, %v1242
      %v1244 = vsel %vm825, %v1214, 0.0
      %v1245 = vadd.f32 %v1243, %v1244
      %v1246 = vrot.slane %v1245, 4
      %v1247 = vadd.f32 %v1245, %v1246
      %v1248 = vrot.slane %v1247, 2
      %v1249 = vadd.f32 %v1247, %v1248
      %v1250 = vrot.slane %v1249, 1
      %v1251 = vadd.f32 %v1249, %v1250
      %vm1252 = vcmask 1040384
      %v1253 = vsel %vm1252, %v1198, %v1251
      %vm1254 = vcmask 58368
      %1255 = vst.msk [vmem:[%s230] sm:$0x3] %vm1254, %v1253
      %s1256 = smul.u32 8, %s20
      %p1257 = scmp.lt.s32.totalorder %s19, 1
      %s1258 = scalar_select %p1257, %s19, 1
      %p1259 = scmp.lt.s32.totalorder %s1256, 15
      %s1260 = scalar_select %p1259, %s1256, 15
      %s1261 = smul.addr %s1260, 2
      %s1262 = smul.addr %s1258, 32
      %s1263 = sadd.s32 %s1261, %s1262
      %s1264 = smul.addr %s1263, 8
      %s1265 = scalar_lea.vmem %s2, %s1264
      %p1266 = scmp.lt.s32.totalorder %s19, 1
      %s1267 = scalar_select %p1266, %s19, 1
      %p1268 = scmp.lt.s32.totalorder %s20, 1
      %s1269 = scalar_select %p1268, %s20, 1
      %s1270 = smul.addr %s1267, 2
      %s1271 = sadd.s32 %s1269, %s1270
      %s1272 = smul.addr %s1271, 2
      %s1273 = scalar_lea.vmem %s3, %s1272
      // Predicated region
      $region29: #{resblock_forward.6} parent=27 // pred_check
        %p1274 = pneg %p96
      $region30: #{resblock_forward.6} parent=27 // pred_check_branch
        %1276 = sbr.rel (%p1274) target = $region32
      $region31: #{resblock_forward.6} parent=27 // pred_region
        %s1277 = smul.u32 8, %s20
      $region32: #{resblock_forward.6} parent=27 // pred_fallthru
        _
      // Predicated region
      $region33: #{resblock_forward.6} parent=27 // pred_check
        %p1278 = pneg %p124
      $region34: #{resblock_forward.6} parent=27 // pred_check_branch
        %1280 = sbr.rel (%p1278) target = $region36
      $region35: #{resblock_forward.6} parent=27 // pred_region
        _
      $region36: #{resblock_forward.6} parent=27 // pred_fallthru
        _
    $region28: #{resblock_forward.6} parent=5 // pred_fallthru
      _
    %p1281 = scmp.le.s32.totalorder 2, %s10
    // Predicated region
    $region37: #{resblock_forward.6} parent=5 // pred_check
      %p1282 = pneg %p1281
    $region38: #{resblock_forward.6} parent=5 // pred_check_branch
      %1284 = sbr.rel (%p1282) target = $region40
    $region39: #{resblock_forward.6} parent=5 // pred_region
      %s1285 = ssub.s32 %s10, 2
      // Predicated region
      $region41: #{resblock_forward.6} parent=39 // pred_check
        %p1286 = pneg %p102
      $region42: #{resblock_forward.6} parent=39 // pred_check_branch
        %1288 = sbr.rel (%p1286) target = $region44
      $region43: #{resblock_forward.6} parent=39 // pred_region
        %s1289 = smul.u32 8, %s22
        %p1290 = scmp.lt.s32.totalorder %s21, 1
        %s1291 = scalar_select %p1290, %s21, 1
        %p1292 = scmp.lt.s32.totalorder %s1289, 15
        %s1293 = scalar_select %p1292, %s1289, 15
        %s1294 = smul.addr %s1293, 2
        %s1295 = smul.addr %s1291, 32
        %s1296 = sadd.s32 %s1294, %s1295
        %s1297 = smul.addr %s1296, 8
        %s1298 = scalar_lea.vmem %s2, %s1297
      $region44: #{resblock_forward.6} parent=39 // pred_fallthru
        _
      // Predicated region
      $region45: #{resblock_forward.6} parent=39 // pred_check
        %p1299 = pneg %p130
      $region46: #{resblock_forward.6} parent=39 // pred_check_branch
        %1301 = sbr.rel (%p1299) target = $region48
      $region47: #{resblock_forward.6} parent=39 // pred_region
        %p1302 = scmp.lt.s32.totalorder %s21, 1
        %s1303 = scalar_select %p1302, %s21, 1
        %p1304 = scmp.lt.s32.totalorder %s22, 1
        %s1305 = scalar_select %p1304, %s22, 1
        %s1306 = smul.addr %s1303, 2
        %s1307 = sadd.s32 %s1305, %s1306
        %s1308 = smul.addr %s1307, 2
        %s1309 = scalar_lea.vmem %s3, %s1308
      $region48: #{resblock_forward.6} parent=39 // pred_fallthru
        _
    $region40: #{resblock_forward.6} parent=5 // pred_fallthru
      _
  $region6: #{resblock_forward.6} parent=0 // loop_footer
    %s14 = sadd.s32 1, %s10
  $region7: #{resblock_forward.6} parent=0 // loop_footer_branch
    %9 = sbr.rel target = $region3
  $region8: #{resblock_forward.6} parent=0 // loop_exit
    _

// kernel: resblock_forward.9
$region0: #{resblock_forward.9}
  #allocation0 [shape = 'u32[]', space=smem, size = 0x4, offset = 0x4, fixed_abs, tag = 'smem constant byte address 0x4 - core index']
  #allocation1 [shape = 'u32[144,128]{1,0:T(1,128)}', space=vmem, size = 0x12000, scoped, tag = 'internal scratch']
  %s0 = inlined_call_operand.vmem [shape: f32[2,16,16,4], index: 0, kind: input, shape index: {}]
  %s1 = inlined_call_operand.vmem [shape: f32[1,4], index: 1, kind: input, shape index: {}]
  %s2 = inlined_call_operand.vmem [shape: f32[1,4], index: 2, kind: input, shape index: {}]
  %s3 = inlined_call_operand.vmem [shape: bf16[2,16,16,4], index: 3, kind: output, shape index: {}]
  %s4 = sld [smem:[#allocation0]]
  $region45: #{resblock_forward.9} parent=0
    _
  %s6 = ssub.s32 1, %s4
  %s7 = scalar_select 0, %s6, %s4
  loop: start=0, step=1, limit=6
  $region2: #{resblock_forward.9} parent=0 // loop_pre_header
    _
  $region3: #{resblock_forward.9} parent=0 // loop_header
    %s9 = sphi 0, %s13
    %p10 = scmp.ge.s32.totalorder %s9, 6
    %s16 = sphi 0, %s28
    %s17 = sphi 0, %s24
    %s18 = sphi 0, %s16
    %s19 = sphi 0, %s17
    %s20 = sphi 0, %s18
    %s21 = sphi 0, %s19
    %s33 = sphi 0, %s35
    %s36 = sphi 0, %s33
    %s37 = sphi 0, %s36
    %s53 = sphi 0, %s37
    %s57 = sphi 0, %s57
    %s59 = sphi 0, %s57
    %s60 = sphi 0, %s59
    %s74 = sphi 0, %s60
    %s78 = sphi 0, %s78
    %s80 = sphi 0, %s78
    %s81 = sphi 0, %s80
    %s95 = sphi 0, %s81
    %s103 = sphi 0, %s105
    %s106 = sphi 0, %s103
    %s107 = sphi 0, %s106
    %s123 = sphi 0, %s107
  $region4: #{resblock_forward.9} parent=0 // loop_header_branch
    %12 = sbr.rel (%p10) target = $region8
  $region5: #{resblock_forward.9} parent=0 // loop_body
    %s14 = ssub.s32 %s9, 1
    %s15 = ssub.s32 %s9, 2
    %s22 = sadd.s32 1, %s17
    %p23 = scmp.ge.s32.totalorder %s22, 2
    %s24 = scalar_select %p23, 0, %s22
    %s25 = sadd.s32 1, %s16
    %s26 = scalar_select %p23, %s25, %s16
    %p27 = scmp.ge.s32.totalorder %s26, 2
    %s28 = scalar_select %p27, 0, %s26
    %s29 = ssub.s32 %s16, %s28
    %s30 = ssub.s32 %s17, %s24
    %s31 = sor.u32 %s29, %s30
    %p32 = scmp.eq.s32.totalorder %s31, 0
    %s34 = sadd.s32 %s33, 1
    %s35 = scalar_select %p32, %s33, %s34
    %p38 = pneg %p32
    %p39 = scmp.eq.s32.totalorder %s9, 3
    %p40 = por %p38, %p39
    %p41 = scmp.ne.s32.totalorder %s33, %s36
    %p42 = scmp.eq.s32.totalorder %s9, 0
    %p43 = por %p41, %p42
    %p44 = scmp.ne.s32.totalorder %s33, %s36
    %p45 = scmp.eq.s32.totalorder %s14, 3
    %p46 = por %p44, %p45
    %p47 = scmp.ne.s32.totalorder %s36, %s37
    %p48 = scmp.eq.s32.totalorder %s14, 0
    %p49 = por %p47, %p48
    %p50 = scmp.ne.s32.totalorder %s36, %s37
    %p51 = scmp.eq.s32.totalorder %s15, 3
    %p52 = por %p50, %p51
    %p54 = scmp.ne.s32.totalorder %s37, %s53
    %p55 = scmp.eq.s32.totalorder %s15, 0
    %p56 = por %p54, %p55
    %s58 = sadd.s32 %s57, 1
    %p61 = scmp.eq.s32.totalorder %s9, 3
    %p62 = scmp.ne.s32.totalorder %s57, %s59
    %p63 = scmp.eq.s32.totalorder %s9, 0
    %p64 = por %p62, %p63
    %p65 = scmp.ne.s32.totalorder %s57, %s59
    %p66 = scmp.eq.s32.totalorder %s14, 3
    %p67 = por %p65, %p66
    %p68 = scmp.ne.s32.totalorder %s59, %s60
    %p69 = scmp.eq.s32.totalorder %s14, 0
    %p70 = por %p68, %p69
    %p71 = scmp.ne.s32.totalorder %s59, %s60
    %p72 = scmp.eq.s32.totalorder %s15, 3
    %p73 = por %p71, %p72
    %p75 = scmp.ne.s32.totalorder %s60, %s74
    %p76 = scmp.eq.s32.totalorder %s15, 0
    %p77 = por %p75, %p76
    %s79 = sadd.s32 %s78, 1
    %p82 = scmp.eq.s32.totalorder %s9, 3
    %p83 = scmp.ne.s32.totalorder %s78, %s80
    %p84 = scmp.eq.s32.totalorder %s9, 0
    %p85 = por %p83, %p84
    %p86 = scmp.ne.s32.totalorder %s78, %s80
    %p87 = scmp.eq.s32.totalorder %s14, 3
    %p88 = por %p86, %p87
    %p89 = scmp.ne.s32.totalorder %s80, %s81
    %p90 = scmp.eq.s32.totalorder %s14, 0
    %p91 = por %p89, %p90
    %p92 = scmp.ne.s32.totalorder %s80, %s81
    %p93 = scmp.eq.s32.totalorder %s15, 3
    %p94 = por %p92, %p93
    %p96 = scmp.ne.s32.totalorder %s81, %s95
    %p97 = scmp.eq.s32.totalorder %s15, 0
    %p98 = por %p96, %p97
    %s99 = ssub.s32 %s16, %s28
    %s100 = ssub.s32 %s17, %s24
    %s101 = sor.u32 %s99, %s100
    %p102 = scmp.eq.s32.totalorder %s101, 0
    %s104 = sadd.s32 %s103, 1
    %s105 = scalar_select %p102, %s103, %s104
    %p108 = pneg %p102
    %p109 = scmp.eq.s32.totalorder %s9, 3
    %p110 = por %p108, %p109
    %p111 = scmp.ne.s32.totalorder %s103, %s106
    %p112 = scmp.eq.s32.totalorder %s9, 0
    %p113 = por %p111, %p112
    %p114 = scmp.ne.s32.totalorder %s103, %s106
    %p115 = scmp.eq.s32.totalorder %s14, 3
    %p116 = por %p114, %p115
    %p117 = scmp.ne.s32.totalorder %s106, %s107
    %p118 = scmp.eq.s32.totalorder %s14, 0
    %p119 = por %p117, %p118
    %p120 = scmp.ne.s32.totalorder %s106, %s107
    %p121 = scmp.eq.s32.totalorder %s15, 3
    %p122 = por %p120, %p121
    %p124 = scmp.ne.s32.totalorder %s107, %s123
    %p125 = scmp.eq.s32.totalorder %s15, 0
    %p126 = por %p124, %p125
    %p127 = scmp.le.s32.totalorder 1, %s9
    %p128 = scmp.lt.s32.totalorder %s9, 5
    %p129 = pnand %p127, %p128
    %p130 = pneg %p129
    // Predicated region
    $region9: #{resblock_forward.9} parent=5 // pred_check
      _
    $region10: #{resblock_forward.9} parent=5 // pred_check_branch
      %132 = sbr.rel (%p129) target = $region12
    $region11: #{resblock_forward.9} parent=5 // pred_region
      %s133 = ssub.s32 %s9, 1
      // Predicated region
      $region13: #{resblock_forward.9} parent=11 // pred_check
        %p134 = pneg %p70
      $region14: #{resblock_forward.9} parent=11 // pred_check_branch
        %136 = sbr.rel (%p134) target = $region16
      $region15: #{resblock_forward.9} parent=11 // pred_region
        _
      $region16: #{resblock_forward.9} parent=11 // pred_fallthru
        _
      // Predicated region
      $region17: #{resblock_forward.9} parent=11 // pred_check
        %p137 = pneg %p91
      $region18: #{resblock_forward.9} parent=11 // pred_check_branch
        %139 = sbr.rel (%p137) target = $region20
      $region19: #{resblock_forward.9} parent=11 // pred_region
        _
      $region20: #{resblock_forward.9} parent=11 // pred_fallthru
        _
    $region12: #{resblock_forward.9} parent=5 // pred_fallthru
      _
    %p140 = scmp.lt.s32.totalorder %s9, 4
    // Predicated region
    $region21: #{resblock_forward.9} parent=5 // pred_check
      %p141 = pneg %p140
    $region22: #{resblock_forward.9} parent=5 // pred_check_branch
      %143 = sbr.rel (%p141) target = $region24
    $region23: #{resblock_forward.9} parent=5 // pred_region
      // Predicated region
      $region25: #{resblock_forward.9} parent=23 // pred_check
        %p144 = pneg %p43
      $region26: #{resblock_forward.9} parent=23 // pred_check_branch
        %146 = sbr.rel (%p144) target = $region28
      $region27: #{resblock_forward.9} parent=23 // pred_region
        %s147 = smul.u32 8, %s17
        %p148 = scmp.lt.s32.totalorder %s16, 1
        %s149 = scalar_select %p148, %s16, 1
        %p150 = scmp.lt.s32.totalorder %s147, 15
        %s151 = scalar_select %p150, %s147, 15
        %s152 = smul.addr %s151, 2
        %s153 = smul.addr %s149, 32
        %s154 = sadd.s32 %s152, %s153
        %s155 = smul.addr %s154, 8
        %s156 = scalar_lea.vmem %s0, %s155
        %s157 = smul.u32 8, %s17
      $region28: #{resblock_forward.9} parent=23 // pred_fallthru
        _
    $region24: #{resblock_forward.9} parent=5 // pred_fallthru
      _
    %p158 = scmp.le.s32.totalorder 1, %s9
    %p159 = scmp.lt.s32.totalorder %s9, 5
    %p160 = pnand %p158, %p159
    %p161 = pneg %p160
    // Predicated region
    $region29: #{resblock_forward.9} parent=5 // pred_check
      _
    $region30: #{resblock_forward.9} parent=5 // pred_check_branch
      %163 = sbr.rel (%p160) target = $region32
    $region31: #{resblock_forward.9} parent=5 // pred_region
      %s164 = ssub.s32 %s9, 1
      %s165 = smul.u32 8, %s19
      %p166 = scmp.lt.s32.totalorder %s18, 1
      %s167 = scalar_select %p166, %s18, 1
      %p168 = scmp.lt.s32.totalorder %s165, 15
      %s169 = scalar_select %p168, %s165, 15
      %s170 = smul.addr %s169, 2
      %s171 = smul.addr %s167, 32
      %s172 = sadd.s32 %s170, %s171
      %s173 = smul.addr %s172, 8
      %s174 = scalar_lea.vmem %s0, %s173
      %p175 = pneg %p49
      %p176 = pneg %p46
      %p177 = pneg %p70
      %p178 = pneg %p67
      %p179 = pneg %p91
      %p180 = pneg %p88
      %p181 = pneg %p119
      %p182 = pneg %p116
      %s183 = smul.u32 8, %s19
      %p184 = scmp.lt.s32.totalorder %s18, 1
      %s185 = scalar_select %p184, %s18, 1
      %p186 = scmp.lt.s32.totalorder %s183, 15
      %s187 = scalar_select %p186, %s183, 15
      %s188 = smul.addr %s187, 2
      %s189 = smul.addr %s185, 32
      %s190 = sadd.s32 %s188, %s189
      %s191 = smul.addr %s190, 4
      %s192 = scalar_lea.vmem %s3, %s191
      %s193 = smul.u32 8, %s19
      %p194 = scmp.lt.s32.totalorder %s18, 1
      %s195 = scalar_select %p194, %s18, 1
      %p196 = scmp.lt.s32.totalorder %s193, 15
      %s197 = scalar_select %p196, %s193, 15
      %s198 = smul.addr %s197, 2
      %s199 = smul.addr %s195, 32
      %s200 = sadd.s32 %s198, %s199
      %s201 = smul.addr %s200, 8
      %s202 = scalar_lea.vmem %s0, %s201
      %s203 = smul.u32 8, %s19
      %s204 = smul.u32 8, %s19
      %p205 = scmp.lt.s32.totalorder %s18, 1
      %s206 = scalar_select %p205, %s18, 1
      %p207 = scmp.lt.s32.totalorder %s204, 15
      %s208 = scalar_select %p207, %s204, 15
      %s209 = smul.addr %s208, 2
      %s210 = smul.addr %s206, 32
      %s211 = sadd.s32 %s209, %s210
      %s212 = smul.addr %s211, 4
      %s213 = scalar_lea.vmem %s3, %s212
      %s214 = smul.u32 8, %s19
      %v215 = vld [vmem:[%s202] sm:$0xff]
      %v216 = vld [vmem:[%s202 + $0x8] sm:$0xff]
      %v217 = vld [vmem:[%s202 + $0x10] sm:$0xff]
      %v218 = vld [vmem:[%s202 + $0x18] sm:$0xff]
      %v219 = vld [vmem:[%s202 + $0x20] sm:$0xff]
      %v220 = vld [vmem:[%s202 + $0x28] sm:$0xff]
      %v221 = vld [vmem:[%s202 + $0x30] sm:$0xff]
      %v222 = vld [vmem:[%s202 + $0x38] sm:$0xff]
      %v223 = vld [vmem:[%s202 + $0x40] sm:$0xff]
      %v224 = vld [vmem:[%s202 + $0x48] sm:$0xff]
      %v225 = vld [vmem:[%s202 + $0x50] sm:$0xff]
      %v226 = vld [vmem:[%s202 + $0x58] sm:$0xff]
      %v227 = vld [vmem:[%s202 + $0x60] sm:$0xff]
      %v228 = vld [vmem:[%s202 + $0x68] sm:$0xff]
      %v229 = vld [vmem:[%s202 + $0x70] sm:$0xff]
      %v230 = vld [vmem:[%s202 + $0x78] sm:$0xff]
      %v231 = vld [vmem:[%s1] sm:$0x1]
      %v233 = vlaneseq
      %v234 = vshrl.u32 %v233, 7
      %v235 = vsub.s32 0, %v234
      %v236 = vrot.slane %v231, %v235
      %v238 = vmul.f32 %v215, %v236
      %v239 = vmul.f32 %v216, %v236
      %v240 = vmul.f32 %v217, %v236
      %v241 = vmul.f32 %v218, %v236
      %v242 = vmul.f32 %v219, %v236
      %v243 = vmul.f32 %v220, %v236
      %v244 = vmul.f32 %v221, %v236
      %v245 = vmul.f32 %v222, %v236
      %v246 = vmul.f32 %v223, %v236
      %v247 = vmul.f32 %v224, %v236
      %v248 = vmul.f32 %v225, %v236
      %v249 = vmul.f32 %v226, %v236
      %v250 = vmul.f32 %v227, %v236
      %v251 = vmul.f32 %v228, %v236
      %v252 = vmul.f32 %v229, %v236
      %v253 = vmul.f32 %v230, %v236
      %v254 = vld [vmem:[%s2] sm:$0x1]
      %v256 = vlaneseq
      %v257 = vshrl.u32 %v256, 7
      %v258 = vsub.s32 0, %v257
      %v259 = vrot.slane %v254, %v258
      %v261 = vadd.f32 %v238, %v259
      %v262 = vadd.f32 %v239, %v259
      %v263 = vadd.f32 %v240, %v259
      %v264 = vadd.f32 %v241, %v259
      %v265 = vadd.f32 %v242, %v259
      %v266 = vadd.f32 %v243, %v259
      %v267 = vadd.f32 %v244, %v259
      %v268 = vadd.f32 %v245, %v259
      %v269 = vadd.f32 %v246, %v259
      %v270 = vadd.f32 %v247, %v259
      %v271 = vadd.f32 %v248, %v259
      %v272 = vadd.f32 %v249, %v259
      %v273 = vadd.f32 %v250, %v259
      %v274 = vadd.f32 %v251, %v259
      %v275 = vadd.f32 %v252, %v259
      %v276 = vadd.f32 %v253, %v259
      %v277 = vpack.c.bf16 %v262, %v261
      %v278 = vpack.c.bf16 %v264, %v263
      %v279 = vpack.c.bf16 %v266, %v265
      %v280 = vpack.c.bf16 %v268, %v267
      %v281 = vpack.c.bf16 %v270, %v269
      %v282 = vpack.c.bf16 %v272, %v271
      %v283 = vpack.c.bf16 %v274, %v273
      %v284 = vpack.c.bf16 %v276, %v275
      %v293 = vunpack.c.l.b16 %v277
      %v294 = vunpack.c.h.b16 %v277
      %v295 = vunpack.c.l.b16 %v278
      %v296 = vunpack.c.h.b16 %v278
      %v297 = vunpack.c.l.b16 %v279
      %v298 = vunpack.c.h.b16 %v279
      %v299 = vunpack.c.l.b16 %v280
      %v300 = vunpack.c.h.b16 %v280
      %v301 = vunpack.c.l.b16 %v281
      %v302 = vunpack.c.h.b16 %v281
      %v303 = vunpack.c.l.b16 %v282
      %v304 = vunpack.c.h.b16 %v282
      %v305 = vunpack.c.l.b16 %v283
      %v306 = vunpack.c.h.b16 %v283
      %v307 = vunpack.c.l.b16 %v284
      %v308 = vunpack.c.h.b16 %v284
      %v309 = vpack.c.b16 %v293, %v293
      %v310 = vpack.c.b16 %v294, %v294
      %v311 = vpack.c.b16 %v295, %v295
      %v312 = vpack.c.b16 %v296, %v296
      %v313 = vpack.c.b16 %v297, %v297
      %v314 = vpack.c.b16 %v298, %v298
      %v315 = vpack.c.b16 %v299, %v299
      %v316 = vpack.c.b16 %v300, %v300
      %v317 = vpack.c.b16 %v301, %v301
      %v318 = vpack.c.b16 %v302, %v302
      %v319 = vpack.c.b16 %v303, %v303
      %v320 = vpack.c.b16 %v304, %v304
      %v321 = vpack.c.b16 %v305, %v305
      %v322 = vpack.c.b16 %v306, %v306
      %v323 = vpack.c.b16 %v307, %v307
      %v324 = vpack.c.b16 %v308, %v308
      %vm341 = vcmask 27648
      %342 = vst.msk [vmem:[%s213] sm:$0xf] %vm341, %v309
      %343 = vst.msk [vmem:[%s213 + $0x4] sm:$0xf] %vm341, %v310
      %344 = vst.msk [vmem:[%s213 + $0x8] sm:$0xf] %vm341, %v311
      %345 = vst.msk [vmem:[%s213 + $0xc] sm:$0xf] %vm341, %v312
      %346 = vst.msk [vmem:[%s213 + $0x10] sm:$0xf] %vm341, %v313
      %347 = vst.msk [vmem:[%s213 + $0x14] sm:$0xf] %vm341, %v314
      %348 = vst.msk [vmem:[%s213 + $0x18] sm:$0xf] %vm341, %v315
      %349 = vst.msk [vmem:[%s213 + $0x1c] sm:$0xf] %vm341, %v316
      %350 = vst.msk [vmem:[%s213 + $0x20] sm:$0xf] %vm341, %v317
      %351 = vst.msk [vmem:[%s213 + $0x24] sm:$0xf] %vm341, %v318
      %352 = vst.msk [vmem:[%s213 + $0x28] sm:$0xf] %vm341, %v319
      %353 = vst.msk [vmem:[%s213 + $0x2c] sm:$0xf] %vm341, %v320
      %354 = vst.msk [vmem:[%s213 + $0x30] sm:$0xf] %vm341, %v321
      %355 = vst.msk [vmem:[%s213 + $0x34] sm:$0xf] %vm341, %v322
      %356 = vst.msk [vmem:[%s213 + $0x38] sm:$0xf] %vm341, %v323
      %357 = vst.msk [vmem:[%s213 + $0x3c] sm:$0xf] %vm341, %v324
      %s358 = smul.u32 8, %s19
      %p359 = scmp.lt.s32.totalorder %s18, 1
      %s360 = scalar_select %p359, %s18, 1
      %p361 = scmp.lt.s32.totalorder %s358, 15
      %s362 = scalar_select %p361, %s358, 15
      %s363 = smul.addr %s362, 2
      %s364 = smul.addr %s360, 32
      %s365 = sadd.s32 %s363, %s364
      %s366 = smul.addr %s365, 4
      %s367 = scalar_lea.vmem %s3, %s366
      // Predicated region
      $region33: #{resblock_forward.9} parent=31 // pred_check
        %p368 = pneg %p116
      $region34: #{resblock_forward.9} parent=31 // pred_check_branch
        %370 = sbr.rel (%p368) target = $region36
      $region35: #{resblock_forward.9} parent=31 // pred_region
        %s371 = smul.u32 8, %s19
      $region36: #{resblock_forward.9} parent=31 // pred_fallthru
        _
    $region32: #{resblock_forward.9} parent=5 // pred_fallthru
      _
    %p372 = scmp.le.s32.totalorder 2, %s9
    // Predicated region
    $region37: #{resblock_forward.9} parent=5 // pred_check
      %p373 = pneg %p372
    $region38: #{resblock_forward.9} parent=5 // pred_check_branch
      %375 = sbr.rel (%p373) target = $region40
    $region39: #{resblock_forward.9} parent=5 // pred_region
      %s376 = ssub.s32 %s9, 2
      // Predicated region
      $region41: #{resblock_forward.9} parent=39 // pred_check
        %p377 = pneg %p122
      $region42: #{resblock_forward.9} parent=39 // pred_check_branch
        %379 = sbr.rel (%p377) target = $region44
      $region43: #{resblock_forward.9} parent=39 // pred_region
        %s380 = smul.u32 8, %s21
        %p381 = scmp.lt.s32.totalorder %s20, 1
        %s382 = scalar_select %p381, %s20, 1
        %p383 = scmp.lt.s32.totalorder %s380, 15
        %s384 = scalar_select %p383, %s380, 15
        %s385 = smul.addr %s384, 2
        %s386 = smul.addr %s382, 32
        %s387 = sadd.s32 %s385, %s386
        %s388 = smul.addr %s387, 4
        %s389 = scalar_lea.vmem %s3, %s388
      $region44: #{resblock_forward.9} parent=39 // pred_fallthru
        _
    $region40: #{resblock_forward.9} parent=5 // pred_fallthru
      _
  $region6: #{resblock_forward.9} parent=0 // loop_footer
    %s13 = sadd.s32 1, %s9
  $region7: #{resblock_forward.9} parent=0 // loop_footer_branch
    %8 = sbr.rel target = $region3
  $region8: #{resblock_forward.9} parent=0 // loop_exit
    _

// kernel: resblock_forward.8
$region0: #{resblock_forward.8}
  #allocation0 [shape = 'u32[]', space=smem, size = 0x4, offset = 0x4, fixed_abs, tag = 'smem constant byte address 0x4 - core index']
  #allocation1 [shape = 'u32[144,128]{1,0:T(1,128)}', space=vmem, size = 0x12000, scoped, tag = 'internal scratch']
  %s0 = inlined_call_operand.vmem [shape: bf16[2,2,10,18,8], index: 0, kind: input, shape index: {}]
  %s1 = inlined_call_operand.vmem [shape: bf16[72,8], index: 1, kind: input, shape index: {}]
  %s2 = inlined_call_operand.vmem [shape: f32[2,16,16,4], index: 2, kind: output, shape index: {0}]
  %s3 = inlined_call_operand.vmem [shape: f32[2,2,2,4], index: 3, kind: output, shape index: {1}]
  %4 = xla_tuple %s2, %s3
  %s5 = sld [smem:[#allocation0]]
  $region49: #{resblock_forward.8} parent=0
    _
  %s7 = ssub.s32 1, %s5
  %s8 = scalar_select 0, %s7, %s5
  loop: start=0, step=1, limit=6
  $region2: #{resblock_forward.8} parent=0 // loop_pre_header
    _
  $region3: #{resblock_forward.8} parent=0 // loop_header
    %s10 = sphi 0, %s14
    %p11 = scmp.ge.s32.totalorder %s10, 6
    %s17 = sphi 0, %s29
    %s18 = sphi 0, %s25
    %s19 = sphi 0, %s17
    %s20 = sphi 0, %s18
    %s21 = sphi 0, %s19
    %s22 = sphi 0, %s20
    %s34 = sphi 0, %s36
    %s37 = sphi 0, %s34
    %s38 = sphi 0, %s37
    %s54 = sphi 0, %s38
    %s58 = sphi 0, %s58
    %s60 = sphi 0, %s58
    %s61 = sphi 0, %s60
    %s75 = sphi 0, %s61
    %s83 = sphi 0, %s85
    %s86 = sphi 0, %s83
    %s87 = sphi 0, %s86
    %s103 = sphi 0, %s87
    %s111 = sphi 0, %s113
    %s114 = sphi 0, %s111
    %s115 = sphi 0, %s114
    %s131 = sphi 0, %s115
  $region4: #{resblock_forward.8} parent=0 // loop_header_branch
    %13 = sbr.rel (%p11) target = $region8
  $region5: #{resblock_forward.8} parent=0 // loop_body
    %s15 = ssub.s32 %s10, 1
    %s16 = ssub.s32 %s10, 2
    %s23 = sadd.s32 1, %s18
    %p24 = scmp.ge.s32.totalorder %s23, 2
    %s25 = scalar_select %p24, 0, %s23
    %s26 = sadd.s32 1, %s17
    %s27 = scalar_select %p24, %s26, %s17
    %p28 = scmp.ge.s32.totalorder %s27, 2
    %s29 = scalar_select %p28, 0, %s27
    %s30 = ssub.s32 %s17, %s29
    %s31 = ssub.s32 %s18, %s25
    %s32 = sor.u32 %s30, %s31
    %p33 = scmp.eq.s32.totalorder %s32, 0
    %s35 = sadd.s32 %s34, 1
    %s36 = scalar_select %p33, %s34, %s35
    %p39 = pneg %p33
    %p40 = scmp.eq.s32.totalorder %s10, 3
    %p41 = por %p39, %p40
    %p42 = scmp.ne.s32.totalorder %s34, %s37
    %p43 = scmp.eq.s32.totalorder %s10, 0
    %p44 = por %p42, %p43
    %p45 = scmp.ne.s32.totalorder %s34, %s37
    %p46 = scmp.eq.s32.totalorder %s15, 3
    %p47 = por %p45, %p46
    %p48 = scmp.ne.s32.totalorder %s37, %s38
    %p49 = scmp.eq.s32.totalorder %s15, 0
    %p50 = por %p48, %p49
    %p51 = scmp.ne.s32.totalorder %s37, %s38
    %p52 = scmp.eq.s32.totalorder %s16, 3
    %p53 = por %p51, %p52
    %p55 = scmp.ne.s32.totalorder %s38, %s54
    %p56 = scmp.eq.s32.totalorder %s16, 0
    %p57 = por %p55, %p56
    %s59 = sadd.s32 %s58, 1
    %p62 = scmp.eq.s32.totalorder %s10, 3
    %p63 = scmp.ne.s32.totalorder %s58, %s60
    %p64 = scmp.eq.s32.totalorder %s10, 0
    %p65 = por %p63, %p64
    %p66 = scmp.ne.s32.totalorder %s58, %s60
    %p67 = scmp.eq.s32.totalorder %s15, 3
    %p68 = por %p66, %p67
    %p69 = scmp.ne.s32.totalorder %s60, %s61
    %p70 = scmp.eq.s32.totalorder %s15, 0
    %p71 = por %p69, %p70
    %p72 = scmp.ne.s32.totalorder %s60, %s61
    %p73 = scmp.eq.s32.totalorder %s16, 3
    %p74 = por %p72, %p73
    %p76 = scmp.ne.s32.totalorder %s61, %s75
    %p77 = scmp.eq.s32.totalorder %s16, 0
    %p78 = por %p76, %p77
    %s79 = ssub.s32 %s17, %s29
    %s80 = ssub.s32 %s18, %s25
    %s81 = sor.u32 %s79, %s80
    %p82 = scmp.eq.s32.totalorder %s81, 0
    %s84 = sadd.s32 %s83, 1
    %s85 = scalar_select %p82, %s83, %s84
    %p88 = pneg %p82
    %p89 = scmp.eq.s32.totalorder %s10, 3
    %p90 = por %p88, %p89
    %p91 = scmp.ne.s32.totalorder %s83, %s86
    %p92 = scmp.eq.s32.totalorder %s10, 0
    %p93 = por %p91, %p92
    %p94 = scmp.ne.s32.totalorder %s83, %s86
    %p95 = scmp.eq.s32.totalorder %s15, 3
    %p96 = por %p94, %p95
    %p97 = scmp.ne.s32.totalorder %s86, %s87
    %p98 = scmp.eq.s32.totalorder %s15, 0
    %p99 = por %p97, %p98
    %p100 = scmp.ne.s32.totalorder %s86, %s87
    %p101 = scmp.eq.s32.totalorder %s16, 3
    %p102 = por %p100, %p101
    %p104 = scmp.ne.s32.totalorder %s87, %s103
    %p105 = scmp.eq.s32.totalorder %s16, 0
    %p106 = por %p104, %p105
    %s107 = ssub.s32 %s17, %s29
    %s108 = ssub.s32 %s18, %s25
    %s109 = sor.u32 %s107, %s108
    %p110 = scmp.eq.s32.totalorder %s109, 0
    %s112 = sadd.s32 %s111, 1
    %s113 = scalar_select %p110, %s111, %s112
    %p116 = pneg %p110
    %p117 = scmp.eq.s32.totalorder %s10, 3
    %p118 = por %p116, %p117
    %p119 = scmp.ne.s32.totalorder %s111, %s114
    %p120 = scmp.eq.s32.totalorder %s10, 0
    %p121 = por %p119, %p120
    %p122 = scmp.ne.s32.totalorder %s111, %s114
    %p123 = scmp.eq.s32.totalorder %s15, 3
    %p124 = por %p122, %p123
    %p125 = scmp.ne.s32.totalorder %s114, %s115
    %p126 = scmp.eq.s32.totalorder %s15, 0
    %p127 = por %p125, %p126
    %p128 = scmp.ne.s32.totalorder %s114, %s115
    %p129 = scmp.eq.s32.totalorder %s16, 3
    %p130 = por %p128, %p129
    %p132 = scmp.ne.s32.totalorder %s115, %s131
    %p133 = scmp.eq.s32.totalorder %s16, 0
    %p134 = por %p132, %p133
    %p135 = scmp.le.s32.totalorder 1, %s10
    %p136 = scmp.lt.s32.totalorder %s10, 5
    %p137 = pnand %p135, %p136
    %p138 = pneg %p137
    // Predicated region
    $region9: #{resblock_forward.8} parent=5 // pred_check
      _
    $region10: #{resblock_forward.8} parent=5 // pred_check_branch
      %140 = sbr.rel (%p137) target = $region12
    $region11: #{resblock_forward.8} parent=5 // pred_region
      %s141 = ssub.s32 %s10, 1
      // Predicated region
      $region13: #{resblock_forward.8} parent=11 // pred_check
        %p142 = pneg %p71
      $region14: #{resblock_forward.8} parent=11 // pred_check_branch
        %144 = sbr.rel (%p142) target = $region16
      $region15: #{resblock_forward.8} parent=11 // pred_region
        _
      $region16: #{resblock_forward.8} parent=11 // pred_fallthru
        _
    $region12: #{resblock_forward.8} parent=5 // pred_fallthru
      _
    %p145 = scmp.lt.s32.totalorder %s10, 4
    // Predicated region
    $region17: #{resblock_forward.8} parent=5 // pred_check
      %p146 = pneg %p145
    $region18: #{resblock_forward.8} parent=5 // pred_check_branch
      %148 = sbr.rel (%p146) target = $region20
    $region19: #{resblock_forward.8} parent=5 // pred_region
      // Predicated region
      $region21: #{resblock_forward.8} parent=19 // pred_check
        %p149 = pneg %p44
      $region22: #{resblock_forward.8} parent=19 // pred_check_branch
        %151 = sbr.rel (%p149) target = $region24
      $region23: #{resblock_forward.8} parent=19 // pred_region
        %p152 = scmp.lt.s32.totalorder %s17, 1
        %s153 = scalar_select %p152, %s17, 1
        %p154 = scmp.lt.s32.totalorder %s18, 1
        %s155 = scalar_select %p154, %s18, 1
        %s156 = smul.addr %s155, 30
        %s157 = smul.addr %s153, 60
        %s158 = sadd.s32 %s156, %s157
        %s159 = smul.addr %s158, 4
        %s160 = scalar_lea.vmem %s0, %s159
      $region24: #{resblock_forward.8} parent=19 // pred_fallthru
        _
    $region20: #{resblock_forward.8} parent=5 // pred_fallthru
      _
    %p161 = scmp.le.s32.totalorder 1, %s10
    %p162 = scmp.lt.s32.totalorder %s10, 5
    %p163 = pnand %p161, %p162
    %p164 = pneg %p163
    // Predicated region
    $region25: #{resblock_forward.8} parent=5 // pred_check
      _
    $region26: #{resblock_forward.8} parent=5 // pred_check_branch
      %166 = sbr.rel (%p163) target = $region28
    $region27: #{resblock_forward.8} parent=5 // pred_region
      %s167 = ssub.s32 %s10, 1
      %p168 = scmp.lt.s32.totalorder %s19, 1
      %s169 = scalar_select %p168, %s19, 1
      %p170 = scmp.lt.s32.totalorder %s20, 1
      %s171 = scalar_select %p170, %s20, 1
      %s172 = smul.addr %s171, 30
      %s173 = smul.addr %s169, 60
      %s174 = sadd.s32 %s172, %s173
      %s175 = smul.addr %s174, 4
      %s176 = scalar_lea.vmem %s0, %s175
      %p177 = pneg %p50
      %p178 = pneg %p47
      %p179 = pneg %p71
      %p180 = pneg %p68
      %p181 = pneg %p99
      %p182 = pneg %p96
      %s183 = smul.u32 8, %s20
      %p184 = scmp.lt.s32.totalorder %s19, 1
      %s185 = scalar_select %p184, %s19, 1
      %p186 = scmp.lt.s32.totalorder %s183, 15
      %s187 = scalar_select %p186, %s183, 15
      %s188 = smul.addr %s187, 2
      %s189 = smul.addr %s185, 32
      %s190 = sadd.s32 %s188, %s189
      %s191 = smul.addr %s190, 8
      %s192 = scalar_lea.vmem %s2, %s191
      %p193 = pneg %p127
      %p194 = pneg %p124
      %p195 = scmp.lt.s32.totalorder %s19, 1
      %s196 = scalar_select %p195, %s19, 1
      %p197 = scmp.lt.s32.totalorder %s20, 1
      %s198 = scalar_select %p197, %s20, 1
      %s199 = smul.addr %s196, 2
      %s200 = sadd.s32 %s198, %s199
      %s201 = smul.addr %s200, 2
      %s202 = scalar_lea.vmem %s3, %s201
      %p203 = scmp.lt.s32.totalorder %s19, 1
      %s204 = scalar_select %p203, %s19, 1
      %p205 = scmp.lt.s32.totalorder %s20, 1
      %s206 = scalar_select %p205, %s20, 1
      %s207 = smul.addr %s206, 30
      %s208 = smul.addr %s204, 60
      %s209 = sadd.s32 %s207, %s208
      %s210 = smul.addr %s209, 4
      %s211 = scalar_lea.vmem %s0, %s210
      %s212 = smul.u32 8, %s20
      %p213 = scmp.lt.s32.totalorder %s19, 1
      %s214 = scalar_select %p213, %s19, 1
      %p215 = scmp.lt.s32.totalorder %s212, 15
      %s216 = scalar_select %p215, %s212, 15
      %s217 = smul.addr %s216, 2
      %s218 = smul.addr %s214, 32
      %s219 = sadd.s32 %s217, %s218
      %s220 = smul.addr %s219, 8
      %s221 = scalar_lea.vmem %s2, %s220
      %s222 = smul.u32 8, %s20
      %p223 = scmp.lt.s32.totalorder %s19, 1
      %s224 = scalar_select %p223, %s19, 1
      %p225 = scmp.lt.s32.totalorder %s20, 1
      %s226 = scalar_select %p225, %s20, 1
      %s227 = smul.addr %s224, 2
      %s228 = sadd.s32 %s226, %s227
      %s229 = smul.addr %s228, 2
      %s230 = scalar_lea.vmem %s3, %s229
      %v232 = vld [vmem:[%s211] sm:$0xf]
      %v233 = vld [vmem:[%s211 + $0x4] sm:$0xf]
      %v234 = vld [vmem:[%s211 + $0x8] sm:$0x1]
      %v235 = vld [vmem:[%s211 + $0xc] sm:$0xf]
      %v236 = vld [vmem:[%s211 + $0x10] sm:$0xf]
      %v237 = vld [vmem:[%s211 + $0x14] sm:$0x1]
      %v238 = vld [vmem:[%s211 + $0x18] sm:$0xf]
      %v239 = vld [vmem:[%s211 + $0x1c] sm:$0xf]
      %v240 = vld [vmem:[%s211 + $0x20] sm:$0x1]
      %v241 = vld [vmem:[%s211 + $0x24] sm:$0xf]
      %v242 = vld [vmem:[%s211 + $0x28] sm:$0xf]
      %v243 = vld [vmem:[%s211 + $0x2c] sm:$0x1]
      %v244 = vld [vmem:[%s211 + $0x30] sm:$0xf]
      %v245 = vld [vmem:[%s211 + $0x34] sm:$0xf]
      %v246 = vld [vmem:[%s211 + $0x38] sm:$0x1]
      %v247 = vld [vmem:[%s211 + $0x3c] sm:$0xf]
      %v248 = vld [vmem:[%s211 + $0x40] sm:$0xf]
      %v249 = vld [vmem:[%s211 + $0x44] sm:$0x1]
      %v250 = vld [vmem:[%s211 + $0x48] sm:$0xf]
      %v251 = vld [vmem:[%s211 + $0x4c] sm:$0xf]
      %v252 = vld [vmem:[%s211 + $0x50] sm:$0x1]
      %v253 = vld [vmem:[%s211 + $0x54] sm:$0xf]
      %v254 = vld [vmem:[%s211 + $0x58] sm:$0xf]
      %v255 = vld [vmem:[%s211 + $0x5c] sm:$0x1]
      %v256 = vld [vmem:[%s211 + $0x60] sm:$0xf]
      %v257 = vld [vmem:[%s211 + $0x64] sm:$0xf]
      %v258 = vld [vmem:[%s211 + $0x68] sm:$0x1]
      %v259 = vld [vmem:[%s211 + $0x6c] sm:$0xf]
      %v260 = vld [vmem:[%s211 + $0x70] sm:$0xf]
      %v261 = vld [vmem:[%s211 + $0x74] sm:$0x1]
      %v262 = vunpack.c.l.bf16 %v232
      %v263 = vunpack.c.l.bf16 %v233
      %v264 = vunpack.c.l.bf16 %v234
      %v265 = vunpack.c.l.bf16 %v235
      %v266 = vunpack.c.l.bf16 %v236
      %v267 = vunpack.c.l.bf16 %v237
      %v268 = vunpack.c.l.bf16 %v238
      %v269 = vunpack.c.l.bf16 %v239
      %v270 = vunpack.c.l.bf16 %v240
      %v271 = vunpack.c.l.bf16 %v241
      %v272 = vunpack.c.l.bf16 %v242
      %v273 = vunpack.c.l.bf16 %v243
      %v274 = vunpack.c.l.bf16 %v244
      %v275 = vunpack.c.l.bf16 %v245
      %v276 = vunpack.c.l.bf16 %v246
      %v277 = vunpack.c.l.bf16 %v247
      %v278 = vunpack.c.l.bf16 %v248
      %v279 = vunpack.c.l.bf16 %v249
      %v280 = vunpack.c.l.bf16 %v250
      %v281 = vunpack.c.l.bf16 %v251
      %v282 = vunpack.c.l.bf16 %v252
      %v283 = vunpack.c.l.bf16 %v253
      %v284 = vunpack.c.l.bf16 %v254
      %v285 = vunpack.c.l.bf16 %v255
      %v286 = vunpack.c.l.bf16 %v256
      %v287 = vunpack.c.l.bf16 %v257
      %v288 = vunpack.c.l.bf16 %v258
      %v289 = vunpack.c.l.bf16 %v259
      %v290 = vunpack.c.l.bf16 %v260
      %v291 = vunpack.c.l.bf16 %v261
      %vm316 = vcmask 1046528
      %v317 = vrot.slane %v262, 1
      %v318 = vrot.slane %v263, 1
      %v319 = vsel %vm316, %v317, %v318
      %v320 = vrot.slane %v264, 1
      %v321 = vsel %vm316, %v318, %v320
      %v322 = vrot.slane %v265, 1
      %v323 = vrot.slane %v266, 1
      %v324 = vsel %vm316, %v322, %v323
      %v325 = vrot.slane %v267, 1
      %v326 = vsel %vm316, %v323, %v325
      %v327 = vrot.slane %v268, 1
      %v328 = vrot.slane %v269, 1
      %v329 = vsel %vm316, %v327, %v328
      %v330 = vrot.slane %v270, 1
      %v331 = vsel %vm316, %v328, %v330
      %v332 = vrot.slane %v271, 1
      %v333 = vrot.slane %v272, 1
      %v334 = vsel %vm316, %v332, %v333
      %v335 = vrot.slane %v273, 1
      %v336 = vsel %vm316, %v333, %v335
      %v337 = vrot.slane %v274, 1
      %v338 = vrot.slane %v275, 1
      %v339 = vsel %vm316, %v337, %v338
      %v340 = vrot.slane %v276, 1
      %v341 = vsel %vm316, %v338, %v340
      %v342 = vrot.slane %v277, 1
      %v343 = vrot.slane %v278, 1
      %v344 = vsel %vm316, %v342, %v343
      %v345 = vrot.slane %v279, 1
      %v346 = vsel %vm316, %v343, %v345
      %v347 = vrot.slane %v280, 1
      %v348 = vrot.slane %v281, 1
      %v349 = vsel %vm316, %v347, %v348
      %v350 = vrot.slane %v282, 1
      %v351 = vsel %vm316, %v348, %v350
      %v352 = vrot.slane %v283, 1
      %v353 = vrot.slane %v284, 1
      %v354 = vsel %vm316, %v352, %v353
      %v355 = vrot.slane %v285, 1
      %v356 = vsel %vm316, %v353, %v355
      %357 = vrot.lane.b32.xlu0 %v319, 8
      %v358 = vpop.permute.xlu0 %357
      %359 = vrot.lane.b32.xlu0 %v321, 8
      %v360 = vpop.permute.xlu0 %359
      %361 = vrot.lane.b32.xlu0 %v324, 8
      %v362 = vpop.permute.xlu0 %361
      %363 = vrot.lane.b32.xlu0 %v326, 8
      %v364 = vpop.permute.xlu0 %363
      %365 = vrot.lane.b32.xlu0 %v329, 8
      %v366 = vpop.permute.xlu0 %365
      %367 = vrot.lane.b32.xlu0 %v331, 8
      %v368 = vpop.permute.xlu0 %367
      %369 = vrot.lane.b32.xlu0 %v334, 8
      %v370 = vpop.permute.xlu0 %369
      %371 = vrot.lane.b32.xlu0 %v336, 8
      %v372 = vpop.permute.xlu0 %371
      %373 = vrot.lane.b32.xlu0 %v339, 8
      %v374 = vpop.permute.xlu0 %373
      %375 = vrot.lane.b32.xlu0 %v341, 8
      %v376 = vpop.permute.xlu0 %375
      %377 = vrot.lane.b32.xlu0 %v344, 8
      %v378 = vpop.permute.xlu0 %377
      %379 = vrot.lane.b32.xlu0 %v346, 8
      %v380 = vpop.permute.xlu0 %379
      %381 = vrot.lane.b32.xlu0 %v349, 8
      %v382 = vpop.permute.xlu0 %381
      %383 = vrot.lane.b32.xlu0 %v351, 8
      %v384 = vpop.permute.xlu0 %383
      %385 = vrot.lane.b32.xlu0 %v354, 8
      %v386 = vpop.permute.xlu0 %385
      %387 = vrot.lane.b32.xlu0 %v356, 8
      %v388 = vpop.permute.xlu0 %387
      %vm405 = vcmask 1045504
      %v406 = vrot.slane %v262, 2
      %v407 = vrot.slane %v263, 2
      %v408 = vsel %vm405, %v406, %v407
      %v409 = vrot.slane %v264, 2
      %v410 = vsel %vm405, %v407, %v409
      %v411 = vrot.slane %v265, 2
      %v412 = vrot.slane %v266, 2
      %v413 = vsel %vm405, %v411, %v412
      %v414 = vrot.slane %v267, 2
      %v415 = vsel %vm405, %v412, %v414
      %v416 = vrot.slane %v268, 2
      %v417 = vrot.slane %v269, 2
      %v418 = vsel %vm405, %v416, %v417
      %v419 = vrot.slane %v270, 2
      %v420 = vsel %vm405, %v417, %v419
      %v421 = vrot.slane %v271, 2
      %v422 = vrot.slane %v272, 2
      %v423 = vsel %vm405, %v421, %v422
      %v424 = vrot.slane %v273, 2
      %v425 = vsel %vm405, %v422, %v424
      %v426 = vrot.slane %v274, 2
      %v427 = vrot.slane %v275, 2
      %v428 = vsel %vm405, %v426, %v427
      %v429 = vrot.slane %v276, 2
      %v430 = vsel %vm405, %v427, %v429
      %v431 = vrot.slane %v277, 2
      %v432 = vrot.slane %v278, 2
      %v433 = vsel %vm405, %v431, %v432
      %v434 = vrot.slane %v279, 2
      %v435 = vsel %vm405, %v432, %v434
      %v436 = vrot.slane %v280, 2
      %v437 = vrot.slane %v281, 2
      %v438 = vsel %vm405, %v436, %v437
      %v439 = vrot.slane %v282, 2
      %v440 = vsel %vm405, %v437, %v439
      %v441 = vrot.slane %v283, 2
      %v442 = vrot.slane %v284, 2
      %v443 = vsel %vm405, %v441, %v442
      %v444 = vrot.slane %v285, 2
      %v445 = vsel %vm405, %v442, %v444
      %446 = vrot.lane.b32.xlu0 %v408, 16
      %v447 = vpop.permute.xlu0 %446
      %448 = vrot.lane.b32.xlu0 %v410, 16
      %v449 = vpop.permute.xlu0 %448
      %450 = vrot.lane.b32.xlu0 %v413, 16
      %v451 = vpop.permute.xlu0 %450
      %452 = vrot.lane.b32.xlu0 %v415, 16
      %v453 = vpop.permute.xlu0 %452
      %454 = vrot.lane.b32.xlu0 %v418, 16
      %v455 = vpop.permute.xlu0 %454
      %456 = vrot.lane.b32.xlu0 %v420, 16
      %v457 = vpop.permute.xlu0 %456
      %458 = vrot.lane.b32.xlu0 %v423, 16
      %v459 = vpop.permute.xlu0 %458
      %460 = vrot.lane.b32.xlu0 %v425, 16
      %v461 = vpop.permute.xlu0 %460
      %462 = vrot.lane.b32.xlu0 %v428, 16
      %v463 = vpop.permute.xlu0 %462
      %464 = vrot.lane.b32.xlu0 %v430, 16
      %v465 = vpop.permute.xlu0 %464
      %466 = vrot.lane.b32.xlu0 %v433, 16
      %v467 = vpop.permute.xlu0 %466
      %468 = vrot.lane.b32.xlu0 %v435, 16
      %v469 = vpop.permute.xlu0 %468
      %470 = vrot.lane.b32.xlu0 %v438, 16
      %v471 = vpop.permute.xlu0 %470
      %472 = vrot.lane.b32.xlu0 %v440, 16
      %v473 = vpop.permute.xlu0 %472
      %474 = vrot.lane.b32.xlu0 %v443, 16
      %v475 = vpop.permute.xlu0 %474
      %476 = vrot.lane.b32.xlu0 %v445, 16
      %v477 = vpop.permute.xlu0 %476
      %496 = vrot.lane.b32.xlu0 %v265, 24
      %v497 = vpop.permute.xlu0 %496
      %498 = vrot.lane.b32.xlu0 %v266, 24
      %v499 = vpop.permute.xlu0 %498
      %500 = vrot.lane.b32.xlu0 %v268, 24
      %v501 = vpop.permute.xlu0 %500
      %502 = vrot.lane.b32.xlu0 %v269, 24
      %v503 = vpop.permute.xlu0 %502
      %504 = vrot.lane.b32.xlu0 %v271, 24
      %v505 = vpop.permute.xlu0 %504
      %506 = vrot.lane.b32.xlu0 %v272, 24
      %v507 = vpop.permute.xlu0 %506
      %508 = vrot.lane.b32.xlu0 %v274, 24
      %v509 = vpop.permute.xlu0 %508
      %510 = vrot.lane.b32.xlu0 %v275, 24
      %v511 = vpop.permute.xlu0 %510
      %512 = vrot.lane.b32.xlu0 %v277, 24
      %v513 = vpop.permute.xlu0 %512
      %514 = vrot.lane.b32.xlu0 %v278, 24
      %v515 = vpop.permute.xlu0 %514
      %516 = vrot.lane.b32.xlu0 %v280, 24
      %v517 = vpop.permute.xlu0 %516
      %518 = vrot.lane.b32.xlu0 %v281, 24
      %v519 = vpop.permute.xlu0 %518
      %520 = vrot.lane.b32.xlu0 %v283, 24
      %v521 = vpop.permute.xlu0 %520
      %522 = vrot.lane.b32.xlu0 %v284, 24
      %v523 = vpop.permute.xlu0 %522
      %524 = vrot.lane.b32.xlu0 %v286, 24
      %v525 = vpop.permute.xlu0 %524
      %526 = vrot.lane.b32.xlu0 %v287, 24
      %v527 = vpop.permute.xlu0 %526
      %v545 = vrot.slane %v286, 1
      %v546 = vrot.slane %v287, 1
      %v547 = vsel %vm316, %v545, %v546
      %v548 = vrot.slane %v288, 1
      %v549 = vsel %vm316, %v546, %v548
      %550 = vrot.lane.b32.xlu0 %v324, 32
      %v551 = vpop.permute.xlu0 %550
      %552 = vrot.lane.b32.xlu0 %v326, 32
      %v553 = vpop.permute.xlu0 %552
      %554 = vrot.lane.b32.xlu0 %v329, 32
      %v555 = vpop.permute.xlu0 %554
      %556 = vrot.lane.b32.xlu0 %v331, 32
      %v557 = vpop.permute.xlu0 %556
      %558 = vrot.lane.b32.xlu0 %v334, 32
      %v559 = vpop.permute.xlu0 %558
      %560 = vrot.lane.b32.xlu0 %v336, 32
      %v561 = vpop.permute.xlu0 %560
      %562 = vrot.lane.b32.xlu0 %v339, 32
      %v563 = vpop.permute.xlu0 %562
      %564 = vrot.lane.b32.xlu0 %v341, 32
      %v565 = vpop.permute.xlu0 %564
      %566 = vrot.lane.b32.xlu0 %v344, 32
      %v567 = vpop.permute.xlu0 %566
      %568 = vrot.lane.b32.xlu0 %v346, 32
      %v569 = vpop.permute.xlu0 %568
      %570 = vrot.lane.b32.xlu0 %v349, 32
      %v571 = vpop.permute.xlu0 %570
      %572 = vrot.lane.b32.xlu0 %v351, 32
      %v573 = vpop.permute.xlu0 %572
      %574 = vrot.lane.b32.xlu0 %v354, 32
      %v575 = vpop.permute.xlu0 %574
      %576 = vrot.lane.b32.xlu0 %v356, 32
      %v577 = vpop.permute.xlu0 %576
      %578 = vrot.lane.b32.xlu0 %v547, 32
      %v579 = vpop.permute.xlu0 %578
      %580 = vrot.lane.b32.xlu0 %v549, 32
      %v581 = vpop.permute.xlu0 %580
      %v598 = vrot.slane %v286, 2
      %v599 = vrot.slane %v287, 2
      %v600 = vsel %vm405, %v598, %v599
      %v601 = vrot.slane %v288, 2
      %v602 = vsel %vm405, %v599, %v601
      %603 = vrot.lane.b32.xlu0 %v413, 40
      %v604 = vpop.permute.xlu0 %603
      %605 = vrot.lane.b32.xlu0 %v415, 40
      %v606 = vpop.permute.xlu0 %605
      %607 = vrot.lane.b32.xlu0 %v418, 40
      %v608 = vpop.permute.xlu0 %607
      %609 = vrot.lane.b32.xlu0 %v420, 40
      %v610 = vpop.permute.xlu0 %609
      %611 = vrot.lane.b32.xlu0 %v423, 40
      %v612 = vpop.permute.xlu0 %611
      %613 = vrot.lane.b32.xlu0 %v425, 40
      %v614 = vpop.permute.xlu0 %613
      %615 = vrot.lane.b32.xlu0 %v428, 40
      %v616 = vpop.permute.xlu0 %615
      %617 = vrot.lane.b32.xlu0 %v430, 40
      %v618 = vpop.permute.xlu0 %617
      %619 = vrot.lane.b32.xlu0 %v433, 40
      %v620 = vpop.permute.xlu0 %619
      %621 = vrot.lane.b32.xlu0 %v435, 40
      %v622 = vpop.permute.xlu0 %621
      %623 = vrot.lane.b32.xlu0 %v438, 40
      %v624 = vpop.permute.xlu0 %623
      %625 = vrot.lane.b32.xlu0 %v440, 40
      %v626 = vpop.permute.xlu0 %625
      %627 = vrot.lane.b32.xlu0 %v443, 40
      %v628 = vpop.permute.xlu0 %627
      %629 = vrot.lane.b32.xlu0 %v445, 40
      %v630 = vpop.permute.xlu0 %629
      %631 = vrot.lane.b32.xlu0 %v600, 40
      %v632 = vpop.permute.xlu0 %631
      %633 = vrot.lane.b32.xlu0 %v602, 40
      %v634 = vpop.permute.xlu0 %633
      %653 = vrot.lane.b32.xlu0 %v268, 48
      %v654 = vpop.permute.xlu0 %653
      %655 = vrot.lane.b32.xlu0 %v269, 48
      %v656 = vpop.permute.xlu0 %655
      %657 = vrot.lane.b32.xlu0 %v271, 48
      %v658 = vpop.permute.xlu0 %657
      %659 = vrot.lane.b32.xlu0 %v272, 48
      %v660 = vpop.permute.xlu0 %659
      %661 = vrot.lane.b32.xlu0 %v274, 48
      %v662 = vpop.permute.xlu0 %661
      %663 = vrot.lane.b32.xlu0 %v275, 48
      %v664 = vpop.permute.xlu0 %663
      %665 = vrot.lane.b32.xlu0 %v277, 48
      %v666 = vpop.permute.xlu0 %665
      %667 = vrot.lane.b32.xlu0 %v278, 48
      %v668 = vpop.permute.xlu0 %667
      %669 = vrot.lane.b32.xlu0 %v280, 48
      %v670 = vpop.permute.xlu0 %669
      %671 = vrot.lane.b32.xlu0 %v281, 48
      %v672 = vpop.permute.xlu0 %671
      %673 = vrot.lane.b32.xlu0 %v283, 48
      %v674 = vpop.permute.xlu0 %673
      %675 = vrot.lane.b32.xlu0 %v284, 48
      %v676 = vpop.permute.xlu0 %675
      %677 = vrot.lane.b32.xlu0 %v286, 48
      %v678 = vpop.permute.xlu0 %677
      %679 = vrot.lane.b32.xlu0 %v287, 48
      %v680 = vpop.permute.xlu0 %679
      %681 = vrot.lane.b32.xlu0 %v289, 48
      %v682 = vpop.permute.xlu0 %681
      %683 = vrot.lane.b32.xlu0 %v290, 48
      %v684 = vpop.permute.xlu0 %683
      %v702 = vrot.slane %v289, 1
      %v703 = vrot.slane %v290, 1
      %v704 = vsel %vm316, %v702, %v703
      %v705 = vrot.slane %v291, 1
      %v706 = vsel %vm316, %v703, %v705
      %707 = vrot.lane.b32.xlu0 %v329, 56
      %v708 = vpop.permute.xlu0 %707
      %709 = vrot.lane.b32.xlu0 %v331, 56
      %v710 = vpop.permute.xlu0 %709
      %711 = vrot.lane.b32.xlu0 %v334, 56
      %v712 = vpop.permute.xlu0 %711
      %713 = vrot.lane.b32.xlu0 %v336, 56
      %v714 = vpop.permute.xlu0 %713
      %715 = vrot.lane.b32.xlu0 %v339, 56
      %v716 = vpop.permute.xlu0 %715
      %717 = vrot.lane.b32.xlu0 %v341, 56
      %v718 = vpop.permute.xlu0 %717
      %719 = vrot.lane.b32.xlu0 %v344, 56
      %v720 = vpop.permute.xlu0 %719
      %721 = vrot.lane.b32.xlu0 %v346, 56
      %v722 = vpop.permute.xlu0 %721
      %723 = vrot.lane.b32.xlu0 %v349, 56
      %v724 = vpop.permute.xlu0 %723
      %725 = vrot.lane.b32.xlu0 %v351, 56
      %v726 = vpop.permute.xlu0 %725
      %727 = vrot.lane.b32.xlu0 %v354, 56
      %v728 = vpop.permute.xlu0 %727
      %729 = vrot.lane.b32.xlu0 %v356, 56
      %v730 = vpop.permute.xlu0 %729
      %731 = vrot.lane.b32.xlu0 %v547, 56
      %v732 = vpop.permute.xlu0 %731
      %733 = vrot.lane.b32.xlu0 %v549, 56
      %v734 = vpop.permute.xlu0 %733
      %735 = vrot.lane.b32.xlu0 %v704, 56
      %v736 = vpop.permute.xlu0 %735
      %737 = vrot.lane.b32.xlu0 %v706, 56
      %v738 = vpop.permute.xlu0 %737
      %v755 = vrot.slane %v289, 2
      %v756 = vrot.slane %v290, 2
      %v757 = vsel %vm405, %v755, %v756
      %v758 = vrot.slane %v291, 2
      %v759 = vsel %vm405, %v756, %v758
      %760 = vrot.lane.b32.xlu0 %v418, 64
      %v761 = vpop.permute.xlu0 %760
      %762 = vrot.lane.b32.xlu0 %v420, 64
      %v763 = vpop.permute.xlu0 %762
      %764 = vrot.lane.b32.xlu0 %v423, 64
      %v765 = vpop.permute.xlu0 %764
      %766 = vrot.lane.b32.xlu0 %v425, 64
      %v767 = vpop.permute.xlu0 %766
      %768 = vrot.lane.b32.xlu0 %v428, 64
      %v769 = vpop.permute.xlu0 %768
      %770 = vrot.lane.b32.xlu0 %v430, 64
      %v771 = vpop.permute.xlu0 %770
      %772 = vrot.lane.b32.xlu0 %v433, 64
      %v773 = vpop.permute.xlu0 %772
      %774 = vrot.lane.b32.xlu0 %v435, 64
      %v775 = vpop.permute.xlu0 %774
      %776 = vrot.lane.b32.xlu0 %v438, 64
      %v777 = vpop.permute.xlu0 %776
      %778 = vrot.lane.b32.xlu0 %v440, 64
      %v779 = vpop.permute.xlu0 %778
      %780 = vrot.lane.b32.xlu0 %v443, 64
      %v781 = vpop.permute.xlu0 %780
      %782 = vrot.lane.b32.xlu0 %v445, 64
      %v783 = vpop.permute.xlu0 %782
      %784 = vrot.lane.b32.xlu0 %v600, 64
      %v785 = vpop.permute.xlu0 %784
      %786 = vrot.lane.b32.xlu0 %v602, 64
      %v787 = vpop.permute.xlu0 %786
      %788 = vrot.lane.b32.xlu0 %v757, 64
      %v789 = vpop.permute.xlu0 %788
      %790 = vrot.lane.b32.xlu0 %v759, 64
      %v791 = vpop.permute.xlu0 %790
      %vm808 = vcmask 64512
      %v809 = vsel %vm808, %v262, %v358
      %v810 = vsel %vm808, %v263, %v360
      %v811 = vsel %vm808, %v265, %v362
      %v812 = vsel %vm808, %v266, %v364
      %v813 = vsel %vm808, %v268, %v366
      %v814 = vsel %vm808, %v269, %v368
      %v815 = vsel %vm808, %v271, %v370
      %v816 = vsel %vm808, %v272, %v372
      %v817 = vsel %vm808, %v274, %v374
      %v818 = vsel %vm808, %v275, %v376
      %v819 = vsel %vm808, %v277, %v378
      %v820 = vsel %vm808, %v278, %v380
      %v821 = vsel %vm808, %v280, %v382
      %v822 = vsel %vm808, %v281, %v384
      %v823 = vsel %vm808, %v283, %v386
      %v824 = vsel %vm808, %v284, %v388
      %vm825 = vcmask 130048
      %v826 = vsel %vm825, %v809, %v447
      %v827 = vsel %vm825, %v810, %v449
      %v828 = vsel %vm825, %v811, %v451
      %v829 = vsel %vm825, %v812, %v453
      %v830 = vsel %vm825, %v813, %v455
      %v831 = vsel %vm825, %v814, %v457
      %v832 = vsel %vm825, %v815, %v459
      %v833 = vsel %vm825, %v816, %v461
      %v834 = vsel %vm825, %v817, %v463
      %v835 = vsel %vm825, %v818, %v465
      %v836 = vsel %vm825, %v819, %v467
      %v837 = vsel %vm825, %v820, %v469
      %v838 = vsel %vm825, %v821, %v471
      %v839 = vsel %vm825, %v822, %v473
      %v840 = vsel %vm825, %v823, %v475
      %v841 = vsel %vm825, %v824, %v477
      %vm842 = vcmask 195584
      %v843 = vsel %vm842, %v826, %v497
      %v844 = vsel %vm842, %v827, %v499
      %v845 = vsel %vm842, %v828, %v501
      %v846 = vsel %vm842, %v829, %v503
      %v847 = vsel %vm842, %v830, %v505
      %v848 = vsel %vm842, %v831, %v507
      %v849 = vsel %vm842, %v832, %v509
      %v850 = vsel %vm842, %v833, %v511
      %v851 = vsel %vm842, %v834, %v513
      %v852 = vsel %vm842, %v835, %v515
      %v853 = vsel %vm842, %v836, %v517
      %v854 = vsel %vm842, %v837, %v519
      %v855 = vsel %vm842, %v838, %v521
      %v856 = vsel %vm842, %v839, %v523
      %v857 = vsel %vm842, %v840, %v525
      %v858 = vsel %vm842, %v841, %v527
      %vm859 = vcmask 261120
      %v860 = vsel %vm859, %v843, %v551
      %v861 = vsel %vm859, %v844, %v553
      %v862 = vsel %vm859, %v845, %v555
      %v863 = vsel %vm859, %v846, %v557
      %v864 = vsel %vm859, %v847, %v559
      %v865 = vsel %vm859, %v848, %v561
      %v866 = vsel %vm859, %v849, %v563
      %v867 = vsel %vm859, %v850, %v565
      %v868 = vsel %vm859, %v851, %v567
      %v869 = vsel %vm859, %v852, %v569
      %v870 = vsel %vm859, %v853, %v571
      %v871 = vsel %vm859, %v854, %v573
      %v872 = vsel %vm859, %v855, %v575
      %v873 = vsel %vm859, %v856, %v577
      %v874 = vsel %vm859, %v857, %v579
      %v875 = vsel %vm859, %v858, %v581
      %vm876 = vcmask 326656
      %v877 = vsel %vm876, %v860, %v604
      %v878 = vsel %vm876, %v861, %v606
      %v879 = vsel %vm876, %v862, %v608
      %v880 = vsel %vm876, %v863, %v610
      %v881 = vsel %vm876, %v864, %v612
      %v882 = vsel %vm876, %v865, %v614
      %v883 = vsel %vm876, %v866, %v616
      %v884 = vsel %vm876, %v867, %v618
      %v885 = vsel %vm876, %v868, %v620
      %v886 = vsel %vm876, %v869, %v622
      %v887 = vsel %vm876, %v870, %v624
      %v888 = vsel %vm876, %v871, %v626
      %v889 = vsel %vm876, %v872, %v628
      %v890 = vsel %vm876, %v873, %v630
      %v891 = vsel %vm876, %v874, %v632
      %v892 = vsel %vm876, %v875, %v634
      %vm893 = vcmask 392192
      %v894 = vsel %vm893, %v877, %v654
      %v895 = vsel %vm893, %v878, %v656
      %v896 = vsel %vm893, %v879, %v658
      %v897 = vsel %vm893, %v880, %v660
      %v898 = vsel %vm893, %v881, %v662
      %v899 = vsel %vm893, %v882, %v664
      %v900 = vsel %vm893, %v883, %v666
      %v901 = vsel %vm893, %v884, %v668
      %v902 = vsel %vm893, %v885, %v670
      %v903 = vsel %vm893, %v886, %v672
      %v904 = vsel %vm893, %v887, %v674
      %v905 = vsel %vm893, %v888, %v676
      %v906 = vsel %vm893, %v889, %v678
      %v907 = vsel %vm893, %v890, %v680
      %v908 = vsel %vm893, %v891, %v682
      %v909 = vsel %vm893, %v892, %v684
      %vm910 = vcmask 457728
      %v911 = vsel %vm910, %v894, %v708
      %v912 = vsel %vm910, %v895, %v710
      %v913 = vsel %vm910, %v896, %v712
      %v914 = vsel %vm910, %v897, %v714
      %v915 = vsel %vm910, %v898, %v716
      %v916 = vsel %vm910, %v899, %v718
      %v917 = vsel %vm910, %v900, %v720
      %v918 = vsel %vm910, %v901, %v722
      %v919 = vsel %vm910, %v902, %v724
      %v920 = vsel %vm910, %v903, %v726
      %v921 = vsel %vm910, %v904, %v728
      %v922 = vsel %vm910, %v905, %v730
      %v923 = vsel %vm910, %v906, %v732
      %v924 = vsel %vm910, %v907, %v734
      %v925 = vsel %vm910, %v908, %v736
      %v926 = vsel %vm910, %v909, %v738
      %vm927 = vcmask 523264
      %v928 = vsel %vm927, %v911, %v761
      %v929 = vsel %vm927, %v912, %v763
      %v930 = vsel %vm927, %v913, %v765
      %v931 = vsel %vm927, %v914, %v767
      %v932 = vsel %vm927, %v915, %v769
      %v933 = vsel %vm927, %v916, %v771
      %v934 = vsel %vm927, %v917, %v773
      %v935 = vsel %vm927, %v918, %v775
      %v936 = vsel %vm927, %v919, %v777
      %v937 = vsel %vm927, %v920, %v779
      %v938 = vsel %vm927, %v921, %v781
      %v939 = vsel %vm927, %v922, %v783
      %v940 = vsel %vm927, %v923, %v785
      %v941 = vsel %vm927, %v924, %v787
      %v942 = vsel %vm927, %v925, %v789
      %v943 = vsel %vm927, %v926, %v791
      %v944 = vpack.c.bf16 %v929, %v928
      %v945 = vpack.c.bf16 %v931, %v930
      %v946 = vpack.c.bf16 %v933, %v932
      %v947 = vpack.c.bf16 %v935, %v934
      %v948 = vpack.c.bf16 %v937, %v936
      %v949 = vpack.c.bf16 %v939, %v938
      %v950 = vpack.c.bf16 %v941, %v940
      %v951 = vpack.c.bf16 %v943, %v942
      %v952 = vld [vmem:[%s1] sm:$0xf]
      %v953 = vld [vmem:[%s1 + $0x4] sm:$0xf]
      %v954 = vld [vmem:[%s1 + $0x8] sm:$0xf]
      %v955 = vld [vmem:[%s1 + $0xc] sm:$0xf]
      %v956 = vld [vmem:[%s1 + $0x10] sm:$0xf]
      %v957 = vld [vmem:[%s1 + $0x14] sm:$0xf]
      %v958 = vld [vmem:[%s1 + $0x18] sm:$0xf]
      %v959 = vld [vmem:[%s1 + $0x1c] sm:$0xf]
      %v960 = vld [vmem:[%s1 + $0x20] sm:$0xf]
      %v970 = vunpack.c.l.b16 %v952
      %v971 = vunpack.c.l.b16 %v953
      %v972 = vunpack.c.l.b16 %v954
      %v973 = vunpack.c.l.b16 %v955
      %v974 = vunpack.c.l.b16 %v956
      %v975 = vunpack.c.l.b16 %v957
      %v976 = vunpack.c.l.b16 %v958
      %v977 = vunpack.c.l.b16 %v959
      %v978 = vunpack.c.l.b16 %v960
      %v979 = vpack.c.b16 %v971, %v970
      %v980 = vpack.c.b16 %v973, %v972
      %v981 = vpack.c.b16 %v975, %v974
      %v982 = vpack.c.b16 %v977, %v976
      %v983 = vpack.c.b16 %v978, %v978
      %vm988 = vcmask 588800
      %v990 = vsel %vm988, %v944, 0
      %v993 = vsel %vm988, %v945, 0
      %v996 = vsel %vm988, %v946, 0
      %v999 = vsel %vm988, %v947, 0
      %v1002 = vsel %vm988, %v948, 0
      %v1005 = vsel %vm988, %v949, 0
      %v1008 = vsel %vm988, %v950, 0
      %v1011 = vsel %vm988, %v951, 0
      %vm1013 = vcmask 1043456
      %v1015 = vsel %vm1013, %v983, 0
      %1017 = vmatprep.subr.bf16.mxu0 0
      %1018 = vmatpush1.bf16.msra.mxu0 0
      %1019 = vmatprep.subr.bf16.mxu0 0
      %1020 = vmatpush1.bf16.msra.mxu0 0
      %1021 = vmatprep.subr.bf16.mxu0 0
      %1022 = vmatpush1.bf16.msra.mxu0 0
      %1023 = vmatprep.subr.bf16.mxu0 0
      %1024 = vmatpush1.bf16.msra.mxu0 %v1015
      %1025 = vmatprep.subr.bf16.mxu0 0
      %1026 = vmatpush1.bf16.msra.mxu0 %v982
      %1027 = vmatprep.subr.bf16.mxu0 0
      %1028 = vmatpush1.bf16.msra.mxu0 %v981
      %1029 = vmatprep.subr.bf16.mxu0 0
      %1030 = vmatpush1.bf16.msra.mxu0 %v980
      %1031 = vmatprep.subr.bf16.mxu0 0
      %1032 = vmatpush1.bf16.msra.mxu0 %v979
      %1033 = vmatprep.subr.bf16.mxu0 0
      %1034 = vmatpush2.bf16.msra.mxu0 0
      %1035 = vmatprep.subr.bf16.mxu0 0
      %1036 = vmatpush2.bf16.msra.mxu0 0
      %1037 = vmatprep.subr.bf16.mxu0 0
      %1038 = vmatpush2.bf16.msra.mxu0 0
      %1039 = vmatprep.subr.bf16.mxu0 0
      %1040 = vmatpush2.bf16.msra.mxu0 0
      %1041 = vmatprep.subr.bf16.mxu0 0
      %1042 = vmatpush2.bf16.msra.mxu0 0
      %1043 = vmatprep.subr.bf16.mxu0 0
      %1044 = vmatpush2.bf16.msra.mxu0 0
      %1045 = vmatprep.subr.bf16.mxu0 0
      %1046 = vmatpush2.bf16.msra.mxu0 0
      %1047 = vmatprep.subr.bf16.mxu0 0
      %1048 = vmatpush2.bf16.msra.mxu0 0
      %1049 = vmatprep.mubr.bf16.mxu0 0
      %1050 = vmatmul.mubr.bf16.gmra.mxu0 %v990
      %v1051 = vpop.f32.mrf.mxu0
      %v1052 = vadd.f32 0.0, %v1051
      %v1053 = vpop.f32.mrf.mxu0
      %v1054 = vpop.f32.mrf.mxu0
      %v1055 = vadd.f32 0.0, %v1054
      %v1056 = vpop.f32.mrf.mxu0
      %1057 = vmatprep.mubr.bf16.mxu0 0
      %1058 = vmatmul.mubr.bf16.gmra.mxu0 %v993
      %v1059 = vpop.f32.mrf.mxu0
      %v1060 = vadd.f32 0.0, %v1059
      %v1061 = vpop.f32.mrf.mxu0
      %v1062 = vpop.f32.mrf.mxu0
      %v1063 = vadd.f32 0.0, %v1062
      %v1064 = vpop.f32.mrf.mxu0
      %1065 = vmatprep.mubr.bf16.mxu0 0
      %1066 = vmatmul.mubr.bf16.gmra.mxu0 %v996
      %v1067 = vpop.f32.mrf.mxu0
      %v1068 = vadd.f32 0.0, %v1067
      %v1069 = vpop.f32.mrf.mxu0
      %v1070 = vpop.f32.mrf.mxu0
      %v1071 = vadd.f32 0.0, %v1070
      %v1072 = vpop.f32.mrf.mxu0
      %1073 = vmatprep.mubr.bf16.mxu0 0
      %1074 = vmatmul.mubr.bf16.gmra.mxu0 %v999
      %v1075 = vpop.f32.mrf.mxu0
      %v1076 = vadd.f32 0.0, %v1075
      %v1077 = vpop.f32.mrf.mxu0
      %v1078 = vpop.f32.mrf.mxu0
      %v1079 = vadd.f32 0.0, %v1078
      %v1080 = vpop.f32.mrf.mxu0
      %1081 = vmatprep.mubr.bf16.mxu0 0
      %1082 = vmatmul.mubr.bf16.gmra.mxu0 %v1002
      %v1083 = vpop.f32.mrf.mxu0
      %v1084 = vadd.f32 0.0, %v1083
      %v1085 = vpop.f32.mrf.mxu0
      %v1086 = vpop.f32.mrf.mxu0
      %v1087 = vadd.f32 0.0, %v1086
      %v1088 = vpop.f32.mrf.mxu0
      %1089 = vmatprep.mubr.bf16.mxu0 0
      %1090 = vmatmul.mubr.bf16.gmra.mxu0 %v1005
      %v1091 = vpop.f32.mrf.mxu0
      %v1092 = vadd.f32 0.0, %v1091
      %v1093 = vpop.f32.mrf.mxu0
      %v1094 = vpop.f32.mrf.mxu0
      %v1095 = vadd.f32 0.0, %v1094
      %v1096 = vpop.f32.mrf.mxu0
      %1097 = vmatprep.mubr.bf16.mxu0 0
      %1098 = vmatmul.mubr.bf16.gmra.mxu0 %v1008
      %v1099 = vpop.f32.mrf.mxu0
      %v1100 = vadd.f32 0.0, %v1099
      %v1101 = vpop.f32.mrf.mxu0
      %v1102 = vpop.f32.mrf.mxu0
      %v1103 = vadd.f32 0.0, %v1102
      %v1104 = vpop.f32.mrf.mxu0
      %1105 = vmatprep.mubr.bf16.mxu0 0
      %1106 = vmatmul.mubr.bf16.gmra.mxu0 %v1011
      %v1107 = vpop.f32.mrf.mxu0
      %v1108 = vadd.f32 0.0, %v1107
      %v1109 = vpop.f32.mrf.mxu0
      %v1110 = vpop.f32.mrf.mxu0
      %v1111 = vadd.f32 0.0, %v1110
      %v1112 = vpop.f32.mrf.mxu0
      %1113 = vdwg.mxu0
      %v1114 = vxor.u32 %v1052, 2147483648
      %v1115 = vxor.u32 %v1055, 2147483648
      %v1116 = vxor.u32 %v1060, 2147483648
      %v1117 = vxor.u32 %v1063, 2147483648
      %v1118 = vxor.u32 %v1068, 2147483648
      %v1119 = vxor.u32 %v1071, 2147483648
      %v1120 = vxor.u32 %v1076, 2147483648
      %v1121 = vxor.u32 %v1079, 2147483648
      %v1122 = vxor.u32 %v1084, 2147483648
      %v1123 = vxor.u32 %v1087, 2147483648
      %v1124 = vxor.u32 %v1092, 2147483648
      %v1125 = vxor.u32 %v1095, 2147483648
      %v1126 = vxor.u32 %v1100, 2147483648
      %v1127 = vxor.u32 %v1103, 2147483648
      %v1128 = vxor.u32 %v1108, 2147483648
      %v1129 = vxor.u32 %v1111, 2147483648
      %v1130 = vmul.f32 %v1114, 1.442695
      %v1131 = vpow.pop %v1130
      %v1132 = vmul.f32 %v1115, 1.442695
      %v1133 = vpow.pop %v1132
      %v1134 = vmul.f32 %v1116, 1.442695
      %v1135 = vpow.pop %v1134
      %v1136 = vmul.f32 %v1117, 1.442695
      %v1137 = vpow.pop %v1136
      %v1138 = vmul.f32 %v1118, 1.442695
      %v1139 = vpow.pop %v1138
      %v1140 = vmul.f32 %v1119, 1.442695
      %v1141 = vpow.pop %v1140
      %v1142 = vmul.f32 %v1120, 1.442695
      %v1143 = vpow.pop %v1142
      %v1144 = vmul.f32 %v1121, 1.442695
      %v1145 = vpow.pop %v1144
      %v1146 = vmul.f32 %v1122, 1.442695
      %v1147 = vpow.pop %v1146
      %v1148 = vmul.f32 %v1123, 1.442695
      %v1149 = vpow.pop %v1148
      %v1150 = vmul.f32 %v1124, 1.442695
      %v1151 = vpow.pop %v1150
      %v1152 = vmul.f32 %v1125, 1.442695
      %v1153 = vpow.pop %v1152
      %v1154 = vmul.f32 %v1126, 1.442695
      %v1155 = vpow.pop %v1154
      %v1156 = vmul.f32 %v1127, 1.442695
      %v1157 = vpow.pop %v1156
      %v1158 = vmul.f32 %v1128, 1.442695
      %v1159 = vpow.pop %v1158
      %v1160 = vmul.f32 %v1129, 1.442695
      %v1161 = vpow.pop %v1160
      %v1162 = vadd.f32 %v1131, 1.0
      %v1163 = vadd.f32 %v1133, 1.0
      %v1164 = vadd.f32 %v1135, 1.0
      %v1165 = vadd.f32 %v1137, 1.0
      %v1166 = vadd.f32 %v1139, 1.0
      %v1167 = vadd.f32 %v1141, 1.0
      %v1168 = vadd.f32 %v1143, 1.0
      %v1169 = vadd.f32 %v1145, 1.0
      %v1170 = vadd.f32 %v1147, 1.0
      %v1171 = vadd.f32 %v1149, 1.0
      %v1172 = vadd.f32 %v1151, 1.0
      %v1173 = vadd.f32 %v1153, 1.0
      %v1174 = vadd.f32 %v1155, 1.0
      %v1175 = vadd.f32 %v1157, 1.0
      %v1176 = vadd.f32 %v1159, 1.0
      %v1177 = vadd.f32 %v1161, 1.0
      %v1178 = vrcp.pop %v1162
      %v1179 = vmul.f32 1.0, %v1178
      %v1180 = vrcp.pop %v1163
      %v1181 = vmul.f32 1.0, %v1180
      %v1182 = vrcp.pop %v1164
      %v1183 = vmul.f32 1.0, %v1182
      %v1184 = vrcp.pop %v1165
      %v1185 = vmul.f32 1.0, %v1184
      %v1186 = vrcp.pop %v1166
      %v1187 = vmul.f32 1.0, %v1186
      %v1188 = vrcp.pop %v1167
      %v1189 = vmul.f32 1.0, %v1188
      %v1190 = vrcp.pop %v1168
      %v1191 = vmul.f32 1.0, %v1190
      %v1192 = vrcp.pop %v1169
      %v1193 = vmul.f32 1.0, %v1192
      %v1194 = vrcp.pop %v1170
      %v1195 = vmul.f32 1.0, %v1194
      %v1196 = vrcp.pop %v1171
      %v1197 = vmul.f32 1.0, %v1196
      %v1198 = vrcp.pop %v1172
      %v1199 = vmul.f32 1.0, %v1198
      %v1200 = vrcp.pop %v1173
      %v1201 = vmul.f32 1.0, %v1200
      %v1202 = vrcp.pop %v1174
      %v1203 = vmul.f32 1.0, %v1202
      %v1204 = vrcp.pop %v1175
      %v1205 = vmul.f32 1.0, %v1204
      %v1206 = vrcp.pop %v1176
      %v1207 = vmul.f32 1.0, %v1206
      %v1208 = vrcp.pop %v1177
      %v1209 = vmul.f32 1.0, %v1208
      %1226 = vrot.lane.b32.xlu0 %v1179, 124
      %v1227 = vpop.permute.xlu0 %1226
      %1228 = vrot.lane.b32.xlu0 %v1181, 124
      %v1229 = vpop.permute.xlu0 %1228
      %1230 = vrot.lane.b32.xlu0 %v1183, 124
      %v1231 = vpop.permute.xlu0 %1230
      %1232 = vrot.lane.b32.xlu0 %v1185, 124
      %v1233 = vpop.permute.xlu0 %1232
      %1234 = vrot.lane.b32.xlu0 %v1187, 124
      %v1235 = vpop.permute.xlu0 %1234
      %1236 = vrot.lane.b32.xlu0 %v1189, 124
      %v1237 = vpop.permute.xlu0 %1236
      %1238 = vrot.lane.b32.xlu0 %v1191, 124
      %v1239 = vpop.permute.xlu0 %1238
      %1240 = vrot.lane.b32.xlu0 %v1193, 124
      %v1241 = vpop.permute.xlu0 %1240
      %1242 = vrot.lane.b32.xlu0 %v1195, 124
      %v1243 = vpop.permute.xlu0 %1242
      %1244 = vrot.lane.b32.xlu0 %v1197, 124
      %v1245 = vpop.permute.xlu0 %1244
      %1246 = vrot.lane.b32.xlu0 %v1199, 124
      %v1247 = vpop.permute.xlu0 %1246
      %1248 = vrot.lane.b32.xlu0 %v1201, 124
      %v1249 = vpop.permute.xlu0 %1248
      %1250 = vrot.lane.b32.xlu0 %v1203, 124
      %v1251 = vpop.permute.xlu0 %1250
      %1252 = vrot.lane.b32.xlu0 %v1205, 124
      %v1253 = vpop.permute.xlu0 %1252
      %1254 = vrot.lane.b32.xlu0 %v1207, 124
      %v1255 = vpop.permute.xlu0 %1254
      %1256 = vrot.lane.b32.xlu0 %v1209, 124
      %v1257 = vpop.permute.xlu0 %1256
      %v1274 = vmul.f32 %v1052, %v1227
      %v1275 = vmul.f32 %v1055, %v1229
      %v1276 = vmul.f32 %v1060, %v1231
      %v1277 = vmul.f32 %v1063, %v1233
      %v1278 = vmul.f32 %v1068, %v1235
      %v1279 = vmul.f32 %v1071, %v1237
      %v1280 = vmul.f32 %v1076, %v1239
      %v1281 = vmul.f32 %v1079, %v1241
      %v1282 = vmul.f32 %v1084, %v1243
      %v1283 = vmul.f32 %v1087, %v1245
      %v1284 = vmul.f32 %v1092, %v1247
      %v1285 = vmul.f32 %v1095, %v1249
      %v1286 = vmul.f32 %v1100, %v1251
      %v1287 = vmul.f32 %v1103, %v1253
      %v1288 = vmul.f32 %v1108, %v1255
      %v1289 = vmul.f32 %v1111, %v1257
      %vm1290 = vcmask 31744
      %1291 = vst.msk [vmem:[%s221] sm:$0xff] %vm1290, %v1274
      %1292 = vst.msk [vmem:[%s221 + $0x8] sm:$0xff] %vm1290, %v1275
      %1293 = vst.msk [vmem:[%s221 + $0x10] sm:$0xff] %vm1290, %v1276
      %1294 = vst.msk [vmem:[%s221 + $0x18] sm:$0xff] %vm1290, %v1277
      %1295 = vst.msk [vmem:[%s221 + $0x20] sm:$0xff] %vm1290, %v1278
      %1296 = vst.msk [vmem:[%s221 + $0x28] sm:$0xff] %vm1290, %v1279
      %1297 = vst.msk [vmem:[%s221 + $0x30] sm:$0xff] %vm1290, %v1280
      %1298 = vst.msk [vmem:[%s221 + $0x38] sm:$0xff] %vm1290, %v1281
      %1299 = vst.msk [vmem:[%s221 + $0x40] sm:$0xff] %vm1290, %v1282
      %1300 = vst.msk [vmem:[%s221 + $0x48] sm:$0xff] %vm1290, %v1283
      %1301 = vst.msk [vmem:[%s221 + $0x50] sm:$0xff] %vm1290, %v1284
      %1302 = vst.msk [vmem:[%s221 + $0x58] sm:$0xff] %vm1290, %v1285
      %1303 = vst.msk [vmem:[%s221 + $0x60] sm:$0xff] %vm1290, %v1286
      %1304 = vst.msk [vmem:[%s221 + $0x68] sm:$0xff] %vm1290, %v1287
      %1305 = vst.msk [vmem:[%s221 + $0x70] sm:$0xff] %vm1290, %v1288
      %1306 = vst.msk [vmem:[%s221 + $0x78] sm:$0xff] %vm1290, %v1289
      %v1307 = vsel %vm1290, %v1274, 0.0
      %v1308 = vsel %vm1290, %v1275, 0.0
      %v1309 = vadd.f32 %v1307, %v1308
      %v1310 = vsel %vm1290, %v1276, 0.0
      %v1311 = vadd.f32 %v1309, %v1310
      %v1312 = vsel %vm1290, %v1277, 0.0
      %v1313 = vadd.f32 %v1311, %v1312
      %v1314 = vsel %vm1290, %v1278, 0.0
      %v1315 = vadd.f32 %v1313, %v1314
      %v1316 = vsel %vm1290, %v1279, 0.0
      %v1317 = vadd.f32 %v1315, %v1316
      %v1318 = vsel %vm1290, %v1280, 0.0
      %v1319 = vadd.f32 %v1317, %v1318
      %v1320 = vsel %vm1290, %v1281, 0.0
      %v1321 = vadd.f32 %v1319, %v1320
      %v1322 = vsel %vm1290, %v1282, 0.0
      %v1323 = vadd.f32 %v1321, %v1322
      %v1324 = vsel %vm1290, %v1283, 0.0
      %v1325 = vadd.f32 %v1323, %v1324
      %v1326 = vsel %vm1290, %v1284, 0.0
      %v1327 = vadd.f32 %v1325, %v1326
      %v1328 = vsel %vm1290, %v1285, 0.0
      %v1329 = vadd.f32 %v1327, %v1328
      %v1330 = vsel %vm1290, %v1286, 0.0
      %v1331 = vadd.f32 %v1329, %v1330
      %v1332 = vsel %vm1290, %v1287, 0.0
      %v1333 = vadd.f32 %v1331, %v1332
      %v1334 = vsel %vm1290, %v1288, 0.0
      %v1335 = vadd.f32 %v1333, %v1334
      %v1336 = vsel %vm1290, %v1289, 0.0
      %v1337 = vadd.f32 %v1335, %v1336
      %v1338 = vrot.slane %v1337, 4
      %v1339 = vadd.f32 %v1337, %v1338
      %v1340 = vrot.slane %v1339, 2
      %v1341 = vadd.f32 %v1339, %v1340
      %v1342 = vrot.slane %v1341, 1
      %v1343 = vadd.f32 %v1341, %v1342
      %v1344 = vmul.f32 %v1274, %v1274
      %v1345 = vmul.f32 %v1275, %v1275
      %v1346 = vmul.f32 %v1276, %v1276
      %v1347 = vmul.f32 %v1277, %v1277
      %v1348 = vmul.f32 %v1278, %v1278
      %v1349 = vmul.f32 %v1279, %v1279
      %v1350 = vmul.f32 %v1280, %v1280
      %v1351 = vmul.f32 %v1281, %v1281
      %v1352 = vmul.f32 %v1282, %v1282
      %v1353 = vmul.f32 %v1283, %v1283
      %v1354 = vmul.f32 %v1284, %v1284
      %v1355 = vmul.f32 %v1285, %v1285
      %v1356 = vmul.f32 %v1286, %v1286
      %v1357 = vmul.f32 %v1287, %v1287
      %v1358 = vmul.f32 %v1288, %v1288
      %v1359 = vmul.f32 %v1289, %v1289
      %v1360 = vsel %vm1290, %v1344, 0.0
      %v1361 = vsel %vm1290, %v1345, 0.0
      %v1362 = vadd.f32 %v1360, %v1361
      %v1363 = vsel %vm1290, %v1346, 0.0
      %v1364 = vadd.f32 %v1362, %v1363
      %v1365 = vsel %vm1290, %v1347, 0.0
      %v1366 = vadd.f32 %v1364, %v1365
      %v1367 = vsel %vm1290, %v1348, 0.0
      %v1368 = vadd.f32 %v1366, %v1367
      %v1369 = vsel %vm1290, %v1349, 0.0
      %v1370 = vadd.f32 %v1368, %v1369
      %v1371 = vsel %vm1290, %v1350, 0.0
      %v1372 = vadd.f32 %v1370, %v1371
      %v1373 = vsel %vm1290, %v1351, 0.0
      %v1374 = vadd.f32 %v1372, %v1373
      %v1375 = vsel %vm1290, %v1352, 0.0
      %v1376 = vadd.f32 %v1374, %v1375
      %v1377 = vsel %vm1290, %v1353, 0.0
      %v1378 = vadd.f32 %v1376, %v1377
      %v1379 = vsel %vm1290, %v1354, 0.0
      %v1380 = vadd.f32 %v1378, %v1379
      %v1381 = vsel %vm1290, %v1355, 0.0
      %v1382 = vadd.f32 %v1380, %v1381
      %v1383 = vsel %vm1290, %v1356, 0.0
      %v1384 = vadd.f32 %v1382, %v1383
      %v1385 = vsel %vm1290, %v1357, 0.0
      %v1386 = vadd.f32 %v1384, %v1385
      %v1387 = vsel %vm1290, %v1358, 0.0
      %v1388 = vadd.f32 %v1386, %v1387
      %v1389 = vsel %vm1290, %v1359, 0.0
      %v1390 = vadd.f32 %v1388, %v1389
      %v1391 = vrot.slane %v1390, 4
      %v1392 = vadd.f32 %v1390, %v1391
      %v1393 = vrot.slane %v1392, 2
      %v1394 = vadd.f32 %v1392, %v1393
      %v1395 = vrot.slane %v1394, 1
      %v1396 = vadd.f32 %v1394, %v1395
      %vm1397 = vcmask 1040384
      %v1398 = vsel %vm1397, %v1343, %v1396
      %vm1399 = vcmask 25600
      %1400 = vst.msk [vmem:[%s230] sm:$0x3] %vm1399, %v1398
      %s1401 = smul.u32 8, %s20
      %p1402 = scmp.lt.s32.totalorder %s19, 1
      %s1403 = scalar_select %p1402, %s19, 1
      %p1404 = scmp.lt.s32.totalorder %s1401, 15
      %s1405 = scalar_select %p1404, %s1401, 15
      %s1406 = smul.addr %s1405, 2
      %s1407 = smul.addr %s1403, 32
      %s1408 = sadd.s32 %s1406, %s1407
      %s1409 = smul.addr %s1408, 8
      %s1410 = scalar_lea.vmem %s2, %s1409
      %p1411 = scmp.lt.s32.totalorder %s19, 1
      %s1412 = scalar_select %p1411, %s19, 1
      %p1413 = scmp.lt.s32.totalorder %s20, 1
      %s1414 = scalar_select %p1413, %s20, 1
      %s1415 = smul.addr %s1412, 2
      %s1416 = sadd.s32 %s1414, %s1415
      %s1417 = smul.addr %s1416, 2
      %s1418 = scalar_lea.vmem %s3, %s1417
      // Predicated region
      $region29: #{resblock_forward.8} parent=27 // pred_check
        %p1419 = pneg %p96
      $region30: #{resblock_forward.8} parent=27 // pred_check_branch
        %1421 = sbr.rel (%p1419) target = $region32
      $region31: #{resblock_forward.8} parent=27 // pred_region
        %s1422 = smul.u32 8, %s20
      $region32: #{resblock_forward.8} parent=27 // pred_fallthru
        _
      // Predicated region
      $region33: #{resblock_forward.8} parent=27 // pred_check
        %p1423 = pneg %p124
      $region34: #{resblock_forward.8} parent=27 // pred_check_branch
        %1425 = sbr.rel (%p1423) target = $region36
      $region35: #{resblock_forward.8} parent=27 // pred_region
        _
      $region36: #{resblock_forward.8} parent=27 // pred_fallthru
        _
    $region28: #{resblock_forward.8} parent=5 // pred_fallthru
      _
    %p1426 = scmp.le.s32.totalorder 2, %s10
    // Predicated region
    $region37: #{resblock_forward.8} parent=5 // pred_check
      %p1427 = pneg %p1426
    $region38: #{resblock_forward.8} parent=5 // pred_check_branch
      %1429 = sbr.rel (%p1427) target = $region40
    $region39: #{resblock_forward.8} parent=5 // pred_region
      %s1430 = ssub.s32 %s10, 2
      // Predicated region
      $region41: #{resblock_forward.8} parent=39 // pred_check
        %p1431 = pneg %p102
      $region42: #{resblock_forward.8} parent=39 // pred_check_branch
        %1433 = sbr.rel (%p1431) target = $region44
      $region43: #{resblock_forward.8} parent=39 // pred_region
        %s1434 = smul.u32 8, %s22
        %p1435 = scmp.lt.s32.totalorder %s21, 1
        %s1436 = scalar_select %p1435, %s21, 1
        %p1437 = scmp.lt.s32.totalorder %s1434, 15
        %s1438 = scalar_select %p1437, %s1434, 15
        %s1439 = smul.addr %s1438, 2
        %s1440 = smul.addr %s1436, 32
        %s1441 = sadd.s32 %s1439, %s1440
        %s1442 = smul.addr %s1441, 8
        %s1443 = scalar_lea.vmem %s2, %s1442
      $region44: #{resblock_forward.8} parent=39 // pred_fallthru
        _
      // Predicated region
      $region45: #{resblock_forward.8} parent=39 // pred_check
        %p1444 = pneg %p130
      $region46: #{resblock_forward.8} parent=39 // pred_check_branch
        %1446 = sbr.rel (%p1444) target = $region48
      $region47: #{resblock_forward.8} parent=39 // pred_region
        %p1447 = scmp.lt.s32.totalorder %s21, 1
        %s1448 = scalar_select %p1447, %s21, 1
        %p1449 = scmp.lt.s32.totalorder %s22, 1
        %s1450 = scalar_select %p1449, %s22, 1
        %s1451 = smul.addr %s1448, 2
        %s1452 = sadd.s32 %s1450, %s1451
        %s1453 = smul.addr %s1452, 2
        %s1454 = scalar_lea.vmem %s3, %s1453
      $region48: #{resblock_forward.8} parent=39 // pred_fallthru
        _
    $region40: #{resblock_forward.8} parent=5 // pred_fallthru
      _
  $region6: #{resblock_forward.8} parent=0 // loop_footer
    %s14 = sadd.s32 1, %s10
  $region7: #{resblock_forward.8} parent=0 // loop_footer_branch
    %9 = sbr.rel target = $region3
  $region8: #{resblock_forward.8} parent=0 // loop_exit
    _

// kernel: resblock_forward.11
$region0: #{resblock_forward.11}
  #allocation0 [shape = 'u32[]', space=smem, size = 0x4, offset = 0x4, fixed_abs, tag = 'smem constant byte address 0x4 - core index']
  #allocation1 [shape = 'u32[144,128]{1,0:T(1,128)}', space=vmem, size = 0x12000, scoped, tag = 'internal scratch']
  %s0 = inlined_call_operand.vmem [shape: f32[2,16,16,4], index: 0, kind: input, shape index: {}]
  %s1 = inlined_call_operand.vmem [shape: f32[1,4], index: 1, kind: input, shape index: {}]
  %s2 = inlined_call_operand.vmem [shape: f32[1,4], index: 2, kind: input, shape index: {}]
  %s3 = inlined_call_operand.vmem [shape: f32[2,16,16,4], index: 3, kind: input, shape index: {}, may-alias: {3,4}]
  %s4 = inlined_call_operand.vmem [shape: f32[2,16,16,4], index: 4, kind: output, shape index: {}, may-alias: {3,4}]
  %s5 = sld [smem:[#allocation0]]
  $region49: #{resblock_forward.11} parent=0
    _
  %s7 = ssub.s32 1, %s5
  %s8 = scalar_select 0, %s7, %s5
  loop: start=0, step=1, limit=6
  $region2: #{resblock_forward.11} parent=0 // loop_pre_header
    _
  $region3: #{resblock_forward.11} parent=0 // loop_header
    %s10 = sphi 0, %s14
    %p11 = scmp.ge.s32.totalorder %s10, 6
    %s17 = sphi 0, %s29
    %s18 = sphi 0, %s25
    %s19 = sphi 0, %s17
    %s20 = sphi 0, %s18
    %s21 = sphi 0, %s19
    %s22 = sphi 0, %s20
    %s34 = sphi 0, %s36
    %s37 = sphi 0, %s34
    %s38 = sphi 0, %s37
    %s54 = sphi 0, %s38
    %s58 = sphi 0, %s58
    %s60 = sphi 0, %s58
    %s61 = sphi 0, %s60
    %s75 = sphi 0, %s61
    %s79 = sphi 0, %s79
    %s81 = sphi 0, %s79
    %s82 = sphi 0, %s81
    %s96 = sphi 0, %s82
    %s104 = sphi 0, %s106
    %s107 = sphi 0, %s104
    %s108 = sphi 0, %s107
    %s124 = sphi 0, %s108
    %s132 = sphi 0, %s134
    %s135 = sphi 0, %s132
    %s136 = sphi 0, %s135
    %s152 = sphi 0, %s136
  $region4: #{resblock_forward.11} parent=0 // loop_header_branch
    %13 = sbr.rel (%p11) target = $region8
  $region5: #{resblock_forward.11} parent=0 // loop_body
    %s15 = ssub.s32 %s10, 1
    %s16 = ssub.s32 %s10, 2
    %s23 = sadd.s32 1, %s18
    %p24 = scmp.ge.s32.totalorder %s23, 2
    %s25 = scalar_select %p24, 0, %s23
    %s26 = sadd.s32 1, %s17
    %s27 = scalar_select %p24, %s26, %s17
    %p28 = scmp.ge.s32.totalorder %s27, 2
    %s29 = scalar_select %p28, 0, %s27
    %s30 = ssub.s32 %s17, %s29
    %s31 = ssub.s32 %s18, %s25
    %s32 = sor.u32 %s30, %s31
    %p33 = scmp.eq.s32.totalorder %s32, 0
    %s35 = sadd.s32 %s34, 1
    %s36 = scalar_select %p33, %s34, %s35
    %p39 = pneg %p33
    %p40 = scmp.eq.s32.totalorder %s10, 3
    %p41 = por %p39, %p40
    %p42 = scmp.ne.s32.totalorder %s34, %s37
    %p43 = scmp.eq.s32.totalorder %s10, 0
    %p44 = por %p42, %p43
    %p45 = scmp.ne.s32.totalorder %s34, %s37
    %p46 = scmp.eq.s32.totalorder %s15, 3
    %p47 = por %p45, %p46
    %p48 = scmp.ne.s32.totalorder %s37, %s38
    %p49 = scmp.eq.s32.totalorder %s15, 0
    %p50 = por %p48, %p49
    %p51 = scmp.ne.s32.totalorder %s37, %s38
    %p52 = scmp.eq.s32.totalorder %s16, 3
    %p53 = por %p51, %p52
    %p55 = scmp.ne.s32.totalorder %s38, %s54
    %p56 = scmp.eq.s32.totalorder %s16, 0
    %p57 = por %p55, %p56
    %s59 = sadd.s32 %s58, 1
    %p62 = scmp.eq.s32.totalorder %s10, 3
    %p63 = scmp.ne.s32.totalorder %s58, %s60
    %p64 = scmp.eq.s32.totalorder %s10, 0
    %p65 = por %p63, %p64
    %p66 = scmp.ne.s32.totalorder %s58, %s60
    %p67 = scmp.eq.s32.totalorder %s15, 3
    %p68 = por %p66, %p67
    %p69 = scmp.ne.s32.totalorder %s60, %s61
    %p70 = scmp.eq.s32.totalorder %s15, 0
    %p71 = por %p69, %p70
    %p72 = scmp.ne.s32.totalorder %s60, %s61
    %p73 = scmp.eq.s32.totalorder %s16, 3
    %p74 = por %p72, %p73
    %p76 = scmp.ne.s32.totalorder %s61, %s75
    %p77 = scmp.eq.s32.totalorder %s16, 0
    %p78 = por %p76, %p77
    %s80 = sadd.s32 %s79, 1
    %p83 = scmp.eq.s32.totalorder %s10, 3
    %p84 = scmp.ne.s32.totalorder %s79, %s81
    %p85 = scmp.eq.s32.totalorder %s10, 0
    %p86 = por %p84, %p85
    %p87 = scmp.ne.s32.totalorder %s79, %s81
    %p88 = scmp.eq.s32.totalorder %s15, 3
    %p89 = por %p87, %p88
    %p90 = scmp.ne.s32.totalorder %s81, %s82
    %p91 = scmp.eq.s32.totalorder %s15, 0
    %p92 = por %p90, %p91
    %p93 = scmp.ne.s32.totalorder %s81, %s82
    %p94 = scmp.eq.s32.totalorder %s16, 3
    %p95 = por %p93, %p94
    %p97 = scmp.ne.s32.totalorder %s82, %s96
    %p98 = scmp.eq.s32.totalorder %s16, 0
    %p99 = por %p97, %p98
    %s100 = ssub.s32 %s17, %s29
    %s101 = ssub.s32 %s18, %s25
    %s102 = sor.u32 %s100, %s101
    %p103 = scmp.eq.s32.totalorder %s102, 0
    %s105 = sadd.s32 %s104, 1
    %s106 = scalar_select %p103, %s104, %s105
    %p109 = pneg %p103
    %p110 = scmp.eq.s32.totalorder %s10, 3
    %p111 = por %p109, %p110
    %p112 = scmp.ne.s32.totalorder %s104, %s107
    %p113 = scmp.eq.s32.totalorder %s10, 0
    %p114 = por %p112, %p113
    %p115 = scmp.ne.s32.totalorder %s104, %s107
    %p116 = scmp.eq.s32.totalorder %s15, 3
    %p117 = por %p115, %p116
    %p118 = scmp.ne.s32.totalorder %s107, %s108
    %p119 = scmp.eq.s32.totalorder %s15, 0
    %p120 = por %p118, %p119
    %p121 = scmp.ne.s32.totalorder %s107, %s108
    %p122 = scmp.eq.s32.totalorder %s16, 3
    %p123 = por %p121, %p122
    %p125 = scmp.ne.s32.totalorder %s108, %s124
    %p126 = scmp.eq.s32.totalorder %s16, 0
    %p127 = por %p125, %p126
    %s128 = ssub.s32 %s17, %s29
    %s129 = ssub.s32 %s18, %s25
    %s130 = sor.u32 %s128, %s129
    %p131 = scmp.eq.s32.totalorder %s130, 0
    %s133 = sadd.s32 %s132, 1
    %s134 = scalar_select %p131, %s132, %s133
    %p137 = pneg %p131
    %p138 = scmp.eq.s32.totalorder %s10, 3
    %p139 = por %p137, %p138
    %p140 = scmp.ne.s32.totalorder %s132, %s135
    %p141 = scmp.eq.s32.totalorder %s10, 0
    %p142 = por %p140, %p141
    %p143 = scmp.ne.s32.totalorder %s132, %s135
    %p144 = scmp.eq.s32.totalorder %s15, 3
    %p145 = por %p143, %p144
    %p146 = scmp.ne.s32.totalorder %s135, %s136
    %p147 = scmp.eq.s32.totalorder %s15, 0
    %p148 = por %p146, %p147
    %p149 = scmp.ne.s32.totalorder %s135, %s136
    %p150 = scmp.eq.s32.totalorder %s16, 3
    %p151 = por %p149, %p150
    %p153 = scmp.ne.s32.totalorder %s136, %s152
    %p154 = scmp.eq.s32.totalorder %s16, 0
    %p155 = por %p153, %p154
    %p156 = scmp.le.s32.totalorder 1, %s10
    %p157 = scmp.lt.s32.totalorder %s10, 5
    %p158 = pnand %p156, %p157
    %p159 = pneg %p158
    // Predicated region
    $region9: #{resblock_forward.11} parent=5 // pred_check
      _
    $region10: #{resblock_forward.11} parent=5 // pred_check_branch
      %161 = sbr.rel (%p158) target = $region12
    $region11: #{resblock_forward.11} parent=5 // pred_region
      %s162 = ssub.s32 %s10, 1
      // Predicated region
      $region13: #{resblock_forward.11} parent=11 // pred_check
        %p163 = pneg %p71
      $region14: #{resblock_forward.11} parent=11 // pred_check_branch
        %165 = sbr.rel (%p163) target = $region16
      $region15: #{resblock_forward.11} parent=11 // pred_region
        _
      $region16: #{resblock_forward.11} parent=11 // pred_fallthru
        _
      // Predicated region
      $region17: #{resblock_forward.11} parent=11 // pred_check
        %p166 = pneg %p92
      $region18: #{resblock_forward.11} parent=11 // pred_check_branch
        %168 = sbr.rel (%p166) target = $region20
      $region19: #{resblock_forward.11} parent=11 // pred_region
        _
      $region20: #{resblock_forward.11} parent=11 // pred_fallthru
        _
    $region12: #{resblock_forward.11} parent=5 // pred_fallthru
      _
    %p169 = scmp.lt.s32.totalorder %s10, 4
    // Predicated region
    $region21: #{resblock_forward.11} parent=5 // pred_check
      %p170 = pneg %p169
    $region22: #{resblock_forward.11} parent=5 // pred_check_branch
      %172 = sbr.rel (%p170) target = $region24
    $region23: #{resblock_forward.11} parent=5 // pred_region
      // Predicated region
      $region25: #{resblock_forward.11} parent=23 // pred_check
        %p173 = pneg %p44
      $region26: #{resblock_forward.11} parent=23 // pred_check_branch
        %175 = sbr.rel (%p173) target = $region28
      $region27: #{resblock_forward.11} parent=23 // pred_region
        %s176 = smul.u32 8, %s18
        %p177 = scmp.lt.s32.totalorder %s17, 1
        %s178 = scalar_select %p177, %s17, 1
        %p179 = scmp.lt.s32.totalorder %s176, 15
        %s180 = scalar_select %p179, %s176, 15
        %s181 = smul.addr %s180, 2
        %s182 = smul.addr %s178, 32
        %s183 = sadd.s32 %s181, %s182
        %s184 = smul.addr %s183, 8
        %s185 = scalar_lea.vmem %s0, %s184
        %s186 = smul.u32 8, %s18
      $region28: #{resblock_forward.11} parent=23 // pred_fallthru
        _
      // Predicated region
      $region29: #{resblock_forward.11} parent=23 // pred_check
        %p187 = pneg %p114
      $region30: #{resblock_forward.11} parent=23 // pred_check_branch
        %189 = sbr.rel (%p187) target = $region32
      $region31: #{resblock_forward.11} parent=23 // pred_region
        %s190 = smul.u32 8, %s18
        %p191 = scmp.lt.s32.totalorder %s17, 1
        %s192 = scalar_select %p191, %s17, 1
        %p193 = scmp.lt.s32.totalorder %s190, 15
        %s194 = scalar_select %p193, %s190, 15
        %s195 = smul.addr %s194, 2
        %s196 = smul.addr %s192, 32
        %s197 = sadd.s32 %s195, %s196
        %s198 = smul.addr %s197, 8
        %s199 = scalar_lea.vmem %s3, %s198
        %s200 = smul.u32 8, %s18
      $region32: #{resblock_forward.11} parent=23 // pred_fallthru
        _
    $region24: #{resblock_forward.11} parent=5 // pred_fallthru
      _
    %p201 = scmp.le.s32.totalorder 1, %s10
    %p202 = scmp.lt.s32.totalorder %s10, 5
    %p203 = pnand %p201, %p202
    %p204 = pneg %p203
    // Predicated region
    $region33: #{resblock_forward.11} parent=5 // pred_check
      _
    $region34: #{resblock_forward.11} parent=5 // pred_check_branch
      %206 = sbr.rel (%p203) target = $region36
    $region35: #{resblock_forward.11} parent=5 // pred_region
      %s207 = ssub.s32 %s10, 1
      %s208 = smul.u32 8, %s20
      %p209 = scmp.lt.s32.totalorder %s19, 1
      %s210 = scalar_select %p209, %s19, 1
      %p211 = scmp.lt.s32.totalorder %s208, 15
      %s212 = scalar_select %p211, %s208, 15
      %s213 = smul.addr %s212, 2
      %s214 = smul.addr %s210, 32
      %s215 = sadd.s32 %s213, %s214
      %s216 = smul.addr %s215, 8
      %s217 = scalar_lea.vmem %s0, %s216
      %p218 = pneg %p50
      %p219 = pneg %p47
      %p220 = pneg %p71
      %p221 = pneg %p68
      %p222 = pneg %p92
      %p223 = pneg %p89
      %s224 = smul.u32 8, %s20
      %p225 = scmp.lt.s32.totalorder %s19, 1
      %s226 = scalar_select %p225, %s19, 1
      %p227 = scmp.lt.s32.totalorder %s224, 15
      %s228 = scalar_select %p227, %s224, 15
      %s229 = smul.addr %s228, 2
      %s230 = smul.addr %s226, 32
      %s231 = sadd.s32 %s229, %s230
      %s232 = smul.addr %s231, 8
      %s233 = scalar_lea.vmem %s3, %s232
      %p234 = pneg %p120
      %p235 = pneg %p117
      %p236 = pneg %p148
      %p237 = pneg %p145
      %s238 = smul.u32 8, %s20
      %p239 = scmp.lt.s32.totalorder %s19, 1
      %s240 = scalar_select %p239, %s19, 1
      %p241 = scmp.lt.s32.totalorder %s238, 15
      %s242 = scalar_select %p241, %s238, 15
      %s243 = smul.addr %s242, 2
      %s244 = smul.addr %s240, 32
      %s245 = sadd.s32 %s243, %s244
      %s246 = smul.addr %s245, 8
      %s247 = scalar_lea.vmem %s4, %s246
      %s248 = smul.u32 8, %s20
      %p249 = scmp.lt.s32.totalorder %s19, 1
      %s250 = scalar_select %p249, %s19, 1
      %p251 = scmp.lt.s32.totalorder %s248, 15
      %s252 = scalar_select %p251, %s248, 15
      %s253 = smul.addr %s252, 2
      %s254 = smul.addr %s250, 32
      %s255 = sadd.s32 %s253, %s254
      %s256 = smul.addr %s255, 8
      %s257 = scalar_lea.vmem %s0, %s256
      %s258 = smul.u32 8, %s20
      %s259 = smul.u32 8, %s20
      %p260 = scmp.lt.s32.totalorder %s19, 1
      %s261 = scalar_select %p260, %s19, 1
      %p262 = scmp.lt.s32.totalorder %s259, 15
      %s263 = scalar_select %p262, %s259, 15
      %s264 = smul.addr %s263, 2
      %s265 = smul.addr %s261, 32
      %s266 = sadd.s32 %s264, %s265
      %s267 = smul.addr %s266, 8
      %s268 = scalar_lea.vmem %s3, %s267
      %s269 = smul.u32 8, %s20
      %s270 = smul.u32 8, %s20
      %p271 = scmp.lt.s32.totalorder %s19, 1
      %s272 = scalar_select %p271, %s19, 1
      %p273 = scmp.lt.s32.totalorder %s270, 15
      %s274 = scalar_select %p273, %s270, 15
      %s275 = smul.addr %s274, 2
      %s276 = smul.addr %s272, 32
      %s277 = sadd.s32 %s275, %s276
      %s278 = smul.addr %s277, 8
      %s279 = scalar_lea.vmem %s4, %s278
      %s280 = smul.u32 8, %s20
      %v281 = vld [vmem:[%s257] sm:$0xff]
      %v282 = vld [vmem:[%s257 + $0x8] sm:$0xff]
      %v283 = vld [vmem:[%s257 + $0x10] sm:$0xff]
      %v284 = vld [vmem:[%s257 + $0x18] sm:$0xff]
      %v285 = vld [vmem:[%s257 + $0x20] sm:$0xff]
      %v286 = vld [vmem:[%s257 + $0x28] sm:$0xff]
      %v287 = vld [vmem:[%s257 + $0x30] sm:$0xff]
      %v288 = vld [vmem:[%s257 + $0x38] sm:$0xff]
      %v289 = vld [vmem:[%s257 + $0x40] sm:$0xff]
      %v290 = vld [vmem:[%s257 + $0x48] sm:$0xff]
      %v291 = vld [vmem:[%s257 + $0x50] sm:$0xff]
      %v292 = vld [vmem:[%s257 + $0x58] sm:$0xff]
      %v293 = vld [vmem:[%s257 + $0x60] sm:$0xff]
      %v294 = vld [vmem:[%s257 + $0x68] sm:$0xff]
      %v295 = vld [vmem:[%s257 + $0x70] sm:$0xff]
      %v296 = vld [vmem:[%s257 + $0x78] sm:$0xff]
      %v297 = vld [vmem:[%s268] sm:$0xff]
      %v298 = vld [vmem:[%s268 + $0x8] sm:$0xff]
      %v299 = vld [vmem:[%s268 + $0x10] sm:$0xff]
      %v300 = vld [vmem:[%s268 + $0x18] sm:$0xff]
      %v301 = vld [vmem:[%s268 + $0x20] sm:$0xff]
      %v302 = vld [vmem:[%s268 + $0x28] sm:$0xff]
      %v303 = vld [vmem:[%s268 + $0x30] sm:$0xff]
      %v304 = vld [vmem:[%s268 + $0x38] sm:$0xff]
      %v305 = vld [vmem:[%s268 + $0x40] sm:$0xff]
      %v306 = vld [vmem:[%s268 + $0x48] sm:$0xff]
      %v307 = vld [vmem:[%s268 + $0x50] sm:$0xff]
      %v308 = vld [vmem:[%s268 + $0x58] sm:$0xff]
      %v309 = vld [vmem:[%s268 + $0x60] sm:$0xff]
      %v310 = vld [vmem:[%s268 + $0x68] sm:$0xff]
      %v311 = vld [vmem:[%s268 + $0x70] sm:$0xff]
      %v312 = vld [vmem:[%s268 + $0x78] sm:$0xff]
      %v313 = vld [vmem:[%s1] sm:$0x1]
      %v315 = vlaneseq
      %v316 = vshrl.u32 %v315, 7
      %v317 = vsub.s32 0, %v316
      %v318 = vrot.slane %v313, %v317
      %v320 = vmul.f32 %v281, %v318
      %v321 = vmul.f32 %v282, %v318
      %v322 = vmul.f32 %v283, %v318
      %v323 = vmul.f32 %v284, %v318
      %v324 = vmul.f32 %v285, %v318
      %v325 = vmul.f32 %v286, %v318
      %v326 = vmul.f32 %v287, %v318
      %v327 = vmul.f32 %v288, %v318
      %v328 = vmul.f32 %v289, %v318
      %v329 = vmul.f32 %v290, %v318
      %v330 = vmul.f32 %v291, %v318
      %v331 = vmul.f32 %v292, %v318
      %v332 = vmul.f32 %v293, %v318
      %v333 = vmul.f32 %v294, %v318
      %v334 = vmul.f32 %v295, %v318
      %v335 = vmul.f32 %v296, %v318
      %v336 = vadd.f32 %v297, %v320
      %v337 = vadd.f32 %v298, %v321
      %v338 = vadd.f32 %v299, %v322
      %v339 = vadd.f32 %v300, %v323
      %v340 = vadd.f32 %v301, %v324
      %v341 = vadd.f32 %v302, %v325
      %v342 = vadd.f32 %v303, %v326
      %v343 = vadd.f32 %v304, %v327
      %v344 = vadd.f32 %v305, %v328
      %v345 = vadd.f32 %v306, %v329
      %v346 = vadd.f32 %v307, %v330
      %v347 = vadd.f32 %v308, %v331
      %v348 = vadd.f32 %v309, %v332
      %v349 = vadd.f32 %v310, %v333
      %v350 = vadd.f32 %v311, %v334
      %v351 = vadd.f32 %v312, %v335
      %v352 = vld [vmem:[%s2] sm:$0x1]
      %v354 = vlaneseq
      %v355 = vshrl.u32 %v354, 7
      %v356 = vsub.s32 0, %v355
      %v357 = vrot.slane %v352, %v356
      %v359 = vadd.f32 %v336, %v357
      %v360 = vadd.f32 %v337, %v357
      %v361 = vadd.f32 %v338, %v357
      %v362 = vadd.f32 %v339, %v357
      %v363 = vadd.f32 %v340, %v357
      %v364 = vadd.f32 %v341, %v357
      %v365 = vadd.f32 %v342, %v357
      %v366 = vadd.f32 %v343, %v357
      %v367 = vadd.f32 %v344, %v357
      %v368 = vadd.f32 %v345, %v357
      %v369 = vadd.f32 %v346, %v357
      %v370 = vadd.f32 %v347, %v357
      %v371 = vadd.f32 %v348, %v357
      %v372 = vadd.f32 %v349, %v357
      %v373 = vadd.f32 %v350, %v357
      %v374 = vadd.f32 %v351, %v357
      %vm375 = vcmask 31744
      %376 = vst.msk [vmem:[%s279] sm:$0xff] %vm375, %v359
      %377 = vst.msk [vmem:[%s279 + $0x8] sm:$0xff] %vm375, %v360
      %378 = vst.msk [vmem:[%s279 + $0x10] sm:$0xff] %vm375, %v361
      %379 = vst.msk [vmem:[%s279 + $0x18] sm:$0xff] %vm375, %v362
      %380 = vst.msk [vmem:[%s279 + $0x20] sm:$0xff] %vm375, %v363
      %381 = vst.msk [vmem:[%s279 + $0x28] sm:$0xff] %vm375, %v364
      %382 = vst.msk [vmem:[%s279 + $0x30] sm:$0xff] %vm375, %v365
      %383 = vst.msk [vmem:[%s279 + $0x38] sm:$0xff] %vm375, %v366
      %384 = vst.msk [vmem:[%s279 + $0x40] sm:$0xff] %vm375, %v367
      %385 = vst.msk [vmem:[%s279 + $0x48] sm:$0xff] %vm375, %v368
      %386 = vst.msk [vmem:[%s279 + $0x50] sm:$0xff] %vm375, %v369
      %387 = vst.msk [vmem:[%s279 + $0x58] sm:$0xff] %vm375, %v370
      %388 = vst.msk [vmem:[%s279 + $0x60] sm:$0xff] %vm375, %v371
      %389 = vst.msk [vmem:[%s279 + $0x68] sm:$0xff] %vm375, %v372
      %390 = vst.msk [vmem:[%s279 + $0x70] sm:$0xff] %vm375, %v373
      %391 = vst.msk [vmem:[%s279 + $0x78] sm:$0xff] %vm375, %v374
      %s392 = smul.u32 8, %s20
      %p393 = scmp.lt.s32.totalorder %s19, 1
      %s394 = scalar_select %p393, %s19, 1
      %p395 = scmp.lt.s32.totalorder %s392, 15
      %s396 = scalar_select %p395, %s392, 15
      %s397 = smul.addr %s396, 2
      %s398 = smul.addr %s394, 32
      %s399 = sadd.s32 %s397, %s398
      %s400 = smul.addr %s399, 8
      %s401 = scalar_lea.vmem %s4, %s400
      // Predicated region
      $region37: #{resblock_forward.11} parent=35 // pred_check
        %p402 = pneg %p145
      $region38: #{resblock_forward.11} parent=35 // pred_check_branch
        %404 = sbr.rel (%p402) target = $region40
      $region39: #{resblock_forward.11} parent=35 // pred_region
        %s405 = smul.u32 8, %s20
      $region40: #{resblock_forward.11} parent=35 // pred_fallthru
        _
    $region36: #{resblock_forward.11} parent=5 // pred_fallthru
      _
    %p406 = scmp.le.s32.totalorder 2, %s10
    // Predicated region
    $region41: #{resblock_forward.11} parent=5 // pred_check
      %p407 = pneg %p406
    $region42: #{resblock_forward.11} parent=5 // pred_check_branch
      %409 = sbr.rel (%p407) target = $region44
    $region43: #{resblock_forward.11} parent=5 // pred_region
      %s410 = ssub.s32 %s10, 2
      // Predicated region
      $region45: #{resblock_forward.11} parent=43 // pred_check
        %p411 = pneg %p151
      $region46: #{resblock_forward.11} parent=43 // pred_check_branch
        %413 = sbr.rel (%p411) target = $region48
      $region47: #{resblock_forward.11} parent=43 // pred_region
        %s414 = smul.u32 8, %s22
        %p415 = scmp.lt.s32.totalorder %s21, 1
        %s416 = scalar_select %p415, %s21, 1
        %p417 = scmp.lt.s32.totalorder %s414, 15
        %s418 = scalar_select %p417, %s414, 15
        %s419 = smul.addr %s418, 2
        %s420 = smul.addr %s416, 32
        %s421 = sadd.s32 %s419, %s420
        %s422 = smul.addr %s421, 8
        %s423 = scalar_lea.vmem %s4, %s422
      $region48: #{resblock_forward.11} parent=43 // pred_fallthru
        _
    $region44: #{resblock_forward.11} parent=5 // pred_fallthru
      _
  $region6: #{resblock_forward.11} parent=0 // loop_footer
    %s14 = sadd.s32 1, %s10
  $region7: #{resblock_forward.11} parent=0 // loop_footer_branch
    %9 = sbr.rel target = $region3
  $region8: #{resblock_forward.11} parent=0 // loop_exit
    _

// kernel: resblock_forward.10
$region0: #{resblock_forward.10}
  #allocation0 [shape = 'u32[]', space=smem, size = 0x4, offset = 0x4, fixed_abs, tag = 'smem constant byte address 0x4 - core index']
  #allocation1 [shape = 'u32[144,128]{1,0:T(1,128)}', space=vmem, size = 0x12000, scoped, tag = 'internal scratch']
  %s0 = inlined_call_operand.vmem [shape: bf16[2,2,10,18,4], index: 0, kind: input, shape index: {}]
  %s1 = inlined_call_operand.vmem [shape: bf16[36,4], index: 1, kind: input, shape index: {}]
  %s2 = inlined_call_operand.vmem [shape: f32[2,16,16,4], index: 2, kind: output, shape index: {0}]
  %s3 = inlined_call_operand.vmem [shape: f32[2,2,2,4], index: 3, kind: output, shape index: {1}]
  %4 = xla_tuple %s2, %s3
  %s5 = sld [smem:[#allocation0]]
  $region49: #{resblock_forward.10} parent=0
    _
  %s7 = ssub.s32 1, %s5
  %s8 = scalar_select 0, %s7, %s5
  loop: start=0, step=1, limit=6
  $region2: #{resblock_forward.10} parent=0 // loop_pre_header
    _
  $region3: #{resblock_forward.10} parent=0 // loop_header
    %s10 = sphi 0, %s14
    %p11 = scmp.ge.s32.totalorder %s10, 6
    %s17 = sphi 0, %s29
    %s18 = sphi 0, %s25
    %s19 = sphi 0, %s17
    %s20 = sphi 0, %s18
    %s21 = sphi 0, %s19
    %s22 = sphi 0, %s20
    %s34 = sphi 0, %s36
    %s37 = sphi 0, %s34
    %s38 = sphi 0, %s37
    %s54 = sphi 0, %s38
    %s58 = sphi 0, %s58
    %s60 = sphi 0, %s58
    %s61 = sphi 0, %s60
    %s75 = sphi 0, %s61
    %s83 = sphi 0, %s85
    %s86 = sphi 0, %s83
    %s87 = sphi 0, %s86
    %s103 = sphi 0, %s87
    %s111 = sphi 0, %s113
    %s114 = sphi 0, %s111
    %s115 = sphi 0, %s114
    %s131 = sphi 0, %s115
  $region4: #{resblock_forward.10} parent=0 // loop_header_branch
    %13 = sbr.rel (%p11) target = $region8
  $region5: #{resblock_forward.10} parent=0 // loop_body
    %s15 = ssub.s32 %s10, 1
    %s16 = ssub.s32 %s10, 2
    %s23 = sadd.s32 1, %s18
    %p24 = scmp.ge.s32.totalorder %s23, 2
    %s25 = scalar_select %p24, 0, %s23
    %s26 = sadd.s32 1, %s17
    %s27 = scalar_select %p24, %s26, %s17
    %p28 = scmp.ge.s32.totalorder %s27, 2
    %s29 = scalar_select %p28, 0, %s27
    %s30 = ssub.s32 %s17, %s29
    %s31 = ssub.s32 %s18, %s25
    %s32 = sor.u32 %s30, %s31
    %p33 = scmp.eq.s32.totalorder %s32, 0
    %s35 = sadd.s32 %s34, 1
    %s36 = scalar_select %p33, %s34, %s35
    %p39 = pneg %p33
    %p40 = scmp.eq.s32.totalorder %s10, 3
    %p41 = por %p39, %p40
    %p42 = scmp.ne.s32.totalorder %s34, %s37
    %p43 = scmp.eq.s32.totalorder %s10, 0
    %p44 = por %p42, %p43
    %p45 = scmp.ne.s32.totalorder %s34, %s37
    %p46 = scmp.eq.s32.totalorder %s15, 3
    %p47 = por %p45, %p46
    %p48 = scmp.ne.s32.totalorder %s37, %s38
    %p49 = scmp.eq.s32.totalorder %s15, 0
    %p50 = por %p48, %p49
    %p51 = scmp.ne.s32.totalorder %s37, %s38
    %p52 = scmp.eq.s32.totalorder %s16, 3
    %p53 = por %p51, %p52
    %p55 = scmp.ne.s32.totalorder %s38, %s54
    %p56 = scmp.eq.s32.totalorder %s16, 0
    %p57 = por %p55, %p56
    %s59 = sadd.s32 %s58, 1
    %p62 = scmp.eq.s32.totalorder %s10, 3
    %p63 = scmp.ne.s32.totalorder %s58, %s60
    %p64 = scmp.eq.s32.totalorder %s10, 0
    %p65 = por %p63, %p64
    %p66 = scmp.ne.s32.totalorder %s58, %s60
    %p67 = scmp.eq.s32.totalorder %s15, 3
    %p68 = por %p66, %p67
    %p69 = scmp.ne.s32.totalorder %s60, %s61
    %p70 = scmp.eq.s32.totalorder %s15, 0
    %p71 = por %p69, %p70
    %p72 = scmp.ne.s32.totalorder %s60, %s61
    %p73 = scmp.eq.s32.totalorder %s16, 3
    %p74 = por %p72, %p73
    %p76 = scmp.ne.s32.totalorder %s61, %s75
    %p77 = scmp.eq.s32.totalorder %s16, 0
    %p78 = por %p76, %p77
    %s79 = ssub.s32 %s17, %s29
    %s80 = ssub.s32 %s18, %s25
    %s81 = sor.u32 %s79, %s80
    %p82 = scmp.eq.s32.totalorder %s81, 0
    %s84 = sadd.s32 %s83, 1
    %s85 = scalar_select %p82, %s83, %s84
    %p88 = pneg %p82
    %p89 = scmp.eq.s32.totalorder %s10, 3
    %p90 = por %p88, %p89
    %p91 = scmp.ne.s32.totalorder %s83, %s86
    %p92 = scmp.eq.s32.totalorder %s10, 0
    %p93 = por %p91, %p92
    %p94 = scmp.ne.s32.totalorder %s83, %s86
    %p95 = scmp.eq.s32.totalorder %s15, 3
    %p96 = por %p94, %p95
    %p97 = scmp.ne.s32.totalorder %s86, %s87
    %p98 = scmp.eq.s32.totalorder %s15, 0
    %p99 = por %p97, %p98
    %p100 = scmp.ne.s32.totalorder %s86, %s87
    %p101 = scmp.eq.s32.totalorder %s16, 3
    %p102 = por %p100, %p101
    %p104 = scmp.ne.s32.totalorder %s87, %s103
    %p105 = scmp.eq.s32.totalorder %s16, 0
    %p106 = por %p104, %p105
    %s107 = ssub.s32 %s17, %s29
    %s108 = ssub.s32 %s18, %s25
    %s109 = sor.u32 %s107, %s108
    %p110 = scmp.eq.s32.totalorder %s109, 0
    %s112 = sadd.s32 %s111, 1
    %s113 = scalar_select %p110, %s111, %s112
    %p116 = pneg %p110
    %p117 = scmp.eq.s32.totalorder %s10, 3
    %p118 = por %p116, %p117
    %p119 = scmp.ne.s32.totalorder %s111, %s114
    %p120 = scmp.eq.s32.totalorder %s10, 0
    %p121 = por %p119, %p120
    %p122 = scmp.ne.s32.totalorder %s111, %s114
    %p123 = scmp.eq.s32.totalorder %s15, 3
    %p124 = por %p122, %p123
    %p125 = scmp.ne.s32.totalorder %s114, %s115
    %p126 = scmp.eq.s32.totalorder %s15, 0
    %p127 = por %p125, %p126
    %p128 = scmp.ne.s32.totalorder %s114, %s115
    %p129 = scmp.eq.s32.totalorder %s16, 3
    %p130 = por %p128, %p129
    %p132 = scmp.ne.s32.totalorder %s115, %s131
    %p133 = scmp.eq.s32.totalorder %s16, 0
    %p134 = por %p132, %p133
    %p135 = scmp.le.s32.totalorder 1, %s10
    %p136 = scmp.lt.s32.totalorder %s10, 5
    %p137 = pnand %p135, %p136
    %p138 = pneg %p137
    // Predicated region
    $region9: #{resblock_forward.10} parent=5 // pred_check
      _
    $region10: #{resblock_forward.10} parent=5 // pred_check_branch
      %140 = sbr.rel (%p137) target = $region12
    $region11: #{resblock_forward.10} parent=5 // pred_region
      %s141 = ssub.s32 %s10, 1
      // Predicated region
      $region13: #{resblock_forward.10} parent=11 // pred_check
        %p142 = pneg %p71
      $region14: #{resblock_forward.10} parent=11 // pred_check_branch
        %144 = sbr.rel (%p142) target = $region16
      $region15: #{resblock_forward.10} parent=11 // pred_region
        _
      $region16: #{resblock_forward.10} parent=11 // pred_fallthru
        _
    $region12: #{resblock_forward.10} parent=5 // pred_fallthru
      _
    %p145 = scmp.lt.s32.totalorder %s10, 4
    // Predicated region
    $region17: #{resblock_forward.10} parent=5 // pred_check
      %p146 = pneg %p145
    $region18: #{resblock_forward.10} parent=5 // pred_check_branch
      %148 = sbr.rel (%p146) target = $region20
    $region19: #{resblock_forward.10} parent=5 // pred_region
      // Predicated region
      $region21: #{resblock_forward.10} parent=19 // pred_check
        %p149 = pneg %p44
      $region22: #{resblock_forward.10} parent=19 // pred_check_branch
        %151 = sbr.rel (%p149) target = $region24
      $region23: #{resblock_forward.10} parent=19 // pred_region
        %p152 = scmp.lt.s32.totalorder %s17, 1
        %s153 = scalar_select %p152, %s17, 1
        %p154 = scmp.lt.s32.totalorder %s18, 1
        %s155 = scalar_select %p154, %s18, 1
        %s156 = smul.addr %s155, 30
        %s157 = smul.addr %s153, 60
        %s158 = sadd.s32 %s156, %s157
        %s159 = smul.addr %s158, 4
        %s160 = scalar_lea.vmem %s0, %s159
      $region24: #{resblock_forward.10} parent=19 // pred_fallthru
        _
    $region20: #{resblock_forward.10} parent=5 // pred_fallthru
      _
    %p161 = scmp.le.s32.totalorder 1, %s10
    %p162 = scmp.lt.s32.totalorder %s10, 5
    %p163 = pnand %p161, %p162
    %p164 = pneg %p163
    // Predicated region
    $region25: #{resblock_forward.10} parent=5 // pred_check
      _
    $region26: #{resblock_forward.10} parent=5 // pred_check_branch
      %166 = sbr.rel (%p163) target = $region28
    $region27: #{resblock_forward.10} parent=5 // pred_region
      %s167 = ssub.s32 %s10, 1
      %p168 = scmp.lt.s32.totalorder %s19, 1
      %s169 = scalar_select %p168, %s19, 1
      %p170 = scmp.lt.s32.totalorder %s20, 1
      %s171 = scalar_select %p170, %s20, 1
      %s172 = smul.addr %s171, 30
      %s173 = smul.addr %s169, 60
      %s174 = sadd.s32 %s172, %s173
      %s175 = smul.addr %s174, 4
      %s176 = scalar_lea.vmem %s0, %s175
      %p177 = pneg %p50
      %p178 = pneg %p47
      %p179 = pneg %p71
      %p180 = pneg %p68
      %p181 = pneg %p99
      %p182 = pneg %p96
      %s183 = smul.u32 8, %s20
      %p184 = scmp.lt.s32.totalorder %s19, 1
      %s185 = scalar_select %p184, %s19, 1
      %p186 = scmp.lt.s32.totalorder %s183, 15
      %s187 = scalar_select %p186, %s183, 15
      %s188 = smul.addr %s187, 2
      %s189 = smul.addr %s185, 32
      %s190 = sadd.s32 %s188, %s189
      %s191 = smul.addr %s190, 8
      %s192 = scalar_lea.vmem %s2, %s191
      %p193 = pneg %p127
      %p194 = pneg %p124
      %p195 = scmp.lt.s32.totalorder %s19, 1
      %s196 = scalar_select %p195, %s19, 1
      %p197 = scmp.lt.s32.totalorder %s20, 1
      %s198 = scalar_select %p197, %s20, 1
      %s199 = smul.addr %s196, 2
      %s200 = sadd.s32 %s198, %s199
      %s201 = smul.addr %s200, 2
      %s202 = scalar_lea.vmem %s3, %s201
      %p203 = scmp.lt.s32.totalorder %s19, 1
      %s204 = scalar_select %p203, %s19, 1
      %p205 = scmp.lt.s32.totalorder %s20, 1
      %s206 = scalar_select %p205, %s20, 1
      %s207 = smul.addr %s206, 30
      %s208 = smul.addr %s204, 60
      %s209 = sadd.s32 %s207, %s208
      %s210 = smul.addr %s209, 4
      %s211 = scalar_lea.vmem %s0, %s210
      %s212 = smul.u32 8, %s20
      %p213 = scmp.lt.s32.totalorder %s19, 1
      %s214 = scalar_select %p213, %s19, 1
      %p215 = scmp.lt.s32.totalorder %s212, 15
      %s216 = scalar_select %p215, %s212, 15
      %s217 = smul.addr %s216, 2
      %s218 = smul.addr %s214, 32
      %s219 = sadd.s32 %s217, %s218
      %s220 = smul.addr %s219, 8
      %s221 = scalar_lea.vmem %s2, %s220
      %s222 = smul.u32 8, %s20
      %p223 = scmp.lt.s32.totalorder %s19, 1
      %s224 = scalar_select %p223, %s19, 1
      %p225 = scmp.lt.s32.totalorder %s20, 1
      %s226 = scalar_select %p225, %s20, 1
      %s227 = smul.addr %s224, 2
      %s228 = sadd.s32 %s226, %s227
      %s229 = smul.addr %s228, 2
      %s230 = scalar_lea.vmem %s3, %s229
      %v232 = vld [vmem:[%s211] sm:$0xf]
      %v233 = vld [vmem:[%s211 + $0x4] sm:$0xf]
      %v234 = vld [vmem:[%s211 + $0x8] sm:$0x1]
      %v235 = vld [vmem:[%s211 + $0xc] sm:$0xf]
      %v236 = vld [vmem:[%s211 + $0x10] sm:$0xf]
      %v237 = vld [vmem:[%s211 + $0x14] sm:$0x1]
      %v238 = vld [vmem:[%s211 + $0x18] sm:$0xf]
      %v239 = vld [vmem:[%s211 + $0x1c] sm:$0xf]
      %v240 = vld [vmem:[%s211 + $0x20] sm:$0x1]
      %v241 = vld [vmem:[%s211 + $0x24] sm:$0xf]
      %v242 = vld [vmem:[%s211 + $0x28] sm:$0xf]
      %v243 = vld [vmem:[%s211 + $0x2c] sm:$0x1]
      %v244 = vld [vmem:[%s211 + $0x30] sm:$0xf]
      %v245 = vld [vmem:[%s211 + $0x34] sm:$0xf]
      %v246 = vld [vmem:[%s211 + $0x38] sm:$0x1]
      %v247 = vld [vmem:[%s211 + $0x3c] sm:$0xf]
      %v248 = vld [vmem:[%s211 + $0x40] sm:$0xf]
      %v249 = vld [vmem:[%s211 + $0x44] sm:$0x1]
      %v250 = vld [vmem:[%s211 + $0x48] sm:$0xf]
      %v251 = vld [vmem:[%s211 + $0x4c] sm:$0xf]
      %v252 = vld [vmem:[%s211 + $0x50] sm:$0x1]
      %v253 = vld [vmem:[%s211 + $0x54] sm:$0xf]
      %v254 = vld [vmem:[%s211 + $0x58] sm:$0xf]
      %v255 = vld [vmem:[%s211 + $0x5c] sm:$0x1]
      %v256 = vld [vmem:[%s211 + $0x60] sm:$0xf]
      %v257 = vld [vmem:[%s211 + $0x64] sm:$0xf]
      %v258 = vld [vmem:[%s211 + $0x68] sm:$0x1]
      %v259 = vld [vmem:[%s211 + $0x6c] sm:$0xf]
      %v260 = vld [vmem:[%s211 + $0x70] sm:$0xf]
      %v261 = vld [vmem:[%s211 + $0x74] sm:$0x1]
      %v262 = vunpack.c.l.bf16 %v232
      %v263 = vunpack.c.l.bf16 %v233
      %v264 = vunpack.c.l.bf16 %v234
      %v265 = vunpack.c.l.bf16 %v235
      %v266 = vunpack.c.l.bf16 %v236
      %v267 = vunpack.c.l.bf16 %v237
      %v268 = vunpack.c.l.bf16 %v238
      %v269 = vunpack.c.l.bf16 %v239
      %v270 = vunpack.c.l.bf16 %v240
      %v271 = vunpack.c.l.bf16 %v241
      %v272 = vunpack.c.l.bf16 %v242
      %v273 = vunpack.c.l.bf16 %v243
      %v274 = vunpack.c.l.bf16 %v244
      %v275 = vunpack.c.l.bf16 %v245
      %v276 = vunpack.c.l.bf16 %v246
      %v277 = vunpack.c.l.bf16 %v247
      %v278 = vunpack.c.l.bf16 %v248
      %v279 = vunpack.c.l.bf16 %v249
      %v280 = vunpack.c.l.bf16 %v250
      %v281 = vunpack.c.l.bf16 %v251
      %v282 = vunpack.c.l.bf16 %v252
      %v283 = vunpack.c.l.bf16 %v253
      %v284 = vunpack.c.l.bf16 %v254
      %v285 = vunpack.c.l.bf16 %v255
      %v286 = vunpack.c.l.bf16 %v256
      %v287 = vunpack.c.l.bf16 %v257
      %v288 = vunpack.c.l.bf16 %v258
      %v289 = vunpack.c.l.bf16 %v259
      %v290 = vunpack.c.l.bf16 %v260
      %v291 = vunpack.c.l.bf16 %v261
      %vm316 = vcmask 1046528
      %v317 = vrot.slane %v262, 1
      %v318 = vrot.slane %v263, 1
      %v319 = vsel %vm316, %v317, %v318
      %v320 = vrot.slane %v264, 1
      %v321 = vsel %vm316, %v318, %v320
      %v322 = vrot.slane %v265, 1
      %v323 = vrot.slane %v266, 1
      %v324 = vsel %vm316, %v322, %v323
      %v325 = vrot.slane %v267, 1
      %v326 = vsel %vm316, %v323, %v325
      %v327 = vrot.slane %v268, 1
      %v328 = vrot.slane %v269, 1
      %v329 = vsel %vm316, %v327, %v328
      %v330 = vrot.slane %v270, 1
      %v331 = vsel %vm316, %v328, %v330
      %v332 = vrot.slane %v271, 1
      %v333 = vrot.slane %v272, 1
      %v334 = vsel %vm316, %v332, %v333
      %v335 = vrot.slane %v273, 1
      %v336 = vsel %vm316, %v333, %v335
      %v337 = vrot.slane %v274, 1
      %v338 = vrot.slane %v275, 1
      %v339 = vsel %vm316, %v337, %v338
      %v340 = vrot.slane %v276, 1
      %v341 = vsel %vm316, %v338, %v340
      %v342 = vrot.slane %v277, 1
      %v343 = vrot.slane %v278, 1
      %v344 = vsel %vm316, %v342, %v343
      %v345 = vrot.slane %v279, 1
      %v346 = vsel %vm316, %v343, %v345
      %v347 = vrot.slane %v280, 1
      %v348 = vrot.slane %v281, 1
      %v349 = vsel %vm316, %v347, %v348
      %v350 = vrot.slane %v282, 1
      %v351 = vsel %vm316, %v348, %v350
      %v352 = vrot.slane %v283, 1
      %v353 = vrot.slane %v284, 1
      %v354 = vsel %vm316, %v352, %v353
      %v355 = vrot.slane %v285, 1
      %v356 = vsel %vm316, %v353, %v355
      %357 = vrot.lane.b32.xlu0 %v319, 4
      %v358 = vpop.permute.xlu0 %357
      %359 = vrot.lane.b32.xlu0 %v321, 4
      %v360 = vpop.permute.xlu0 %359
      %361 = vrot.lane.b32.xlu0 %v324, 4
      %v362 = vpop.permute.xlu0 %361
      %363 = vrot.lane.b32.xlu0 %v326, 4
      %v364 = vpop.permute.xlu0 %363
      %365 = vrot.lane.b32.xlu0 %v329, 4
      %v366 = vpop.permute.xlu0 %365
      %367 = vrot.lane.b32.xlu0 %v331, 4
      %v368 = vpop.permute.xlu0 %367
      %369 = vrot.lane.b32.xlu0 %v334, 4
      %v370 = vpop.permute.xlu0 %369
      %371 = vrot.lane.b32.xlu0 %v336, 4
      %v372 = vpop.permute.xlu0 %371
      %373 = vrot.lane.b32.xlu0 %v339, 4
      %v374 = vpop.permute.xlu0 %373
      %375 = vrot.lane.b32.xlu0 %v341, 4
      %v376 = vpop.permute.xlu0 %375
      %377 = vrot.lane.b32.xlu0 %v344, 4
      %v378 = vpop.permute.xlu0 %377
      %379 = vrot.lane.b32.xlu0 %v346, 4
      %v380 = vpop.permute.xlu0 %379
      %381 = vrot.lane.b32.xlu0 %v349, 4
      %v382 = vpop.permute.xlu0 %381
      %383 = vrot.lane.b32.xlu0 %v351, 4
      %v384 = vpop.permute.xlu0 %383
      %385 = vrot.lane.b32.xlu0 %v354, 4
      %v386 = vpop.permute.xlu0 %385
      %387 = vrot.lane.b32.xlu0 %v356, 4
      %v388 = vpop.permute.xlu0 %387
      %vm405 = vcmask 1045504
      %v406 = vrot.slane %v262, 2
      %v407 = vrot.slane %v263, 2
      %v408 = vsel %vm405, %v406, %v407
      %v409 = vrot.slane %v264, 2
      %v410 = vsel %vm405, %v407, %v409
      %v411 = vrot.slane %v265, 2
      %v412 = vrot.slane %v266, 2
      %v413 = vsel %vm405, %v411, %v412
      %v414 = vrot.slane %v267, 2
      %v415 = vsel %vm405, %v412, %v414
      %v416 = vrot.slane %v268, 2
      %v417 = vrot.slane %v269, 2
      %v418 = vsel %vm405, %v416, %v417
      %v419 = vrot.slane %v270, 2
      %v420 = vsel %vm405, %v417, %v419
      %v421 = vrot.slane %v271, 2
      %v422 = vrot.slane %v272, 2
      %v423 = vsel %vm405, %v421, %v422
      %v424 = vrot.slane %v273, 2
      %v425 = vsel %vm405, %v422, %v424
      %v426 = vrot.slane %v274, 2
      %v427 = vrot.slane %v275, 2
      %v428 = vsel %vm405, %v426, %v427
      %v429 = vrot.slane %v276, 2
      %v430 = vsel %vm405, %v427, %v429
      %v431 = vrot.slane %v277, 2
      %v432 = vrot.slane %v278, 2
      %v433 = vsel %vm405, %v431, %v432
      %v434 = vrot.slane %v279, 2
      %v435 = vsel %vm405, %v432, %v434
      %v436 = vrot.slane %v280, 2
      %v437 = vrot.slane %v281, 2
      %v438 = vsel %vm405, %v436, %v437
      %v439 = vrot.slane %v282, 2
      %v440 = vsel %vm405, %v437, %v439
      %v441 = vrot.slane %v283, 2
      %v442 = vrot.slane %v284, 2
      %v443 = vsel %vm405, %v441, %v442
      %v444 = vrot.slane %v285, 2
      %v445 = vsel %vm405, %v442, %v444
      %446 = vrot.lane.b32.xlu0 %v408, 8
      %v447 = vpop.permute.xlu0 %446
      %448 = vrot.lane.b32.xlu0 %v410, 8
      %v449 = vpop.permute.xlu0 %448
      %450 = vrot.lane.b32.xlu0 %v413, 8
      %v451 = vpop.permute.xlu0 %450
      %452 = vrot.lane.b32.xlu0 %v415, 8
      %v453 = vpop.permute.xlu0 %452
      %454 = vrot.lane.b32.xlu0 %v418, 8
      %v455 = vpop.permute.xlu0 %454
      %456 = vrot.lane.b32.xlu0 %v420, 8
      %v457 = vpop.permute.xlu0 %456
      %458 = vrot.lane.b32.xlu0 %v423, 8
      %v459 = vpop.permute.xlu0 %458
      %460 = vrot.lane.b32.xlu0 %v425, 8
      %v461 = vpop.permute.xlu0 %460
      %462 = vrot.lane.b32.xlu0 %v428, 8
      %v463 = vpop.permute.xlu0 %462
      %464 = vrot.lane.b32.xlu0 %v430, 8
      %v465 = vpop.permute.xlu0 %464
      %466 = vrot.lane.b32.xlu0 %v433, 8
      %v467 = vpop.permute.xlu0 %466
      %468 = vrot.lane.b32.xlu0 %v435, 8
      %v469 = vpop.permute.xlu0 %468
      %470 = vrot.lane.b32.xlu0 %v438, 8
      %v471 = vpop.permute.xlu0 %470
      %472 = vrot.lane.b32.xlu0 %v440, 8
      %v473 = vpop.permute.xlu0 %472
      %474 = vrot.lane.b32.xlu0 %v443, 8
      %v475 = vpop.permute.xlu0 %474
      %476 = vrot.lane.b32.xlu0 %v445, 8
      %v477 = vpop.permute.xlu0 %476
      %496 = vrot.lane.b32.xlu0 %v265, 12
      %v497 = vpop.permute.xlu0 %496
      %498 = vrot.lane.b32.xlu0 %v266, 12
      %v499 = vpop.permute.xlu0 %498
      %500 = vrot.lane.b32.xlu0 %v268, 12
      %v501 = vpop.permute.xlu0 %500
      %502 = vrot.lane.b32.xlu0 %v269, 12
      %v503 = vpop.permute.xlu0 %502
      %504 = vrot.lane.b32.xlu0 %v271, 12
      %v505 = vpop.permute.xlu0 %504
      %506 = vrot.lane.b32.xlu0 %v272, 12
      %v507 = vpop.permute.xlu0 %506
      %508 = vrot.lane.b32.xlu0 %v274, 12
      %v509 = vpop.permute.xlu0 %508
      %510 = vrot.lane.b32.xlu0 %v275, 12
      %v511 = vpop.permute.xlu0 %510
      %512 = vrot.lane.b32.xlu0 %v277, 12
      %v513 = vpop.permute.xlu0 %512
      %514 = vrot.lane.b32.xlu0 %v278, 12
      %v515 = vpop.permute.xlu0 %514
      %516 = vrot.lane.b32.xlu0 %v280, 12
      %v517 = vpop.permute.xlu0 %516
      %518 = vrot.lane.b32.xlu0 %v281, 12
      %v519 = vpop.permute.xlu0 %518
      %520 = vrot.lane.b32.xlu0 %v283, 12
      %v521 = vpop.permute.xlu0 %520
      %522 = vrot.lane.b32.xlu0 %v284, 12
      %v523 = vpop.permute.xlu0 %522
      %524 = vrot.lane.b32.xlu0 %v286, 12
      %v525 = vpop.permute.xlu0 %524
      %526 = vrot.lane.b32.xlu0 %v287, 12
      %v527 = vpop.permute.xlu0 %526
      %v545 = vrot.slane %v286, 1
      %v546 = vrot.slane %v287, 1
      %v547 = vsel %vm316, %v545, %v546
      %v548 = vrot.slane %v288, 1
      %v549 = vsel %vm316, %v546, %v548
      %550 = vrot.lane.b32.xlu0 %v324, 16
      %v551 = vpop.permute.xlu0 %550
      %552 = vrot.lane.b32.xlu0 %v326, 16
      %v553 = vpop.permute.xlu0 %552
      %554 = vrot.lane.b32.xlu0 %v329, 16
      %v555 = vpop.permute.xlu0 %554
      %556 = vrot.lane.b32.xlu0 %v331, 16
      %v557 = vpop.permute.xlu0 %556
      %558 = vrot.lane.b32.xlu0 %v334, 16
      %v559 = vpop.permute.xlu0 %558
      %560 = vrot.lane.b32.xlu0 %v336, 16
      %v561 = vpop.permute.xlu0 %560
      %562 = vrot.lane.b32.xlu0 %v339, 16
      %v563 = vpop.permute.xlu0 %562
      %564 = vrot.lane.b32.xlu0 %v341, 16
      %v565 = vpop.permute.xlu0 %564
      %566 = vrot.lane.b32.xlu0 %v344, 16
      %v567 = vpop.permute.xlu0 %566
      %568 = vrot.lane.b32.xlu0 %v346, 16
      %v569 = vpop.permute.xlu0 %568
      %570 = vrot.lane.b32.xlu0 %v349, 16
      %v571 = vpop.permute.xlu0 %570
      %572 = vrot.lane.b32.xlu0 %v351, 16
      %v573 = vpop.permute.xlu0 %572
      %574 = vrot.lane.b32.xlu0 %v354, 16
      %v575 = vpop.permute.xlu0 %574
      %576 = vrot.lane.b32.xlu0 %v356, 16
      %v577 = vpop.permute.xlu0 %576
      %578 = vrot.lane.b32.xlu0 %v547, 16
      %v579 = vpop.permute.xlu0 %578
      %580 = vrot.lane.b32.xlu0 %v549, 16
      %v581 = vpop.permute.xlu0 %580
      %v598 = vrot.slane %v286, 2
      %v599 = vrot.slane %v287, 2
      %v600 = vsel %vm405, %v598, %v599
      %v601 = vrot.slane %v288, 2
      %v602 = vsel %vm405, %v599, %v601
      %603 = vrot.lane.b32.xlu0 %v413, 20
      %v604 = vpop.permute.xlu0 %603
      %605 = vrot.lane.b32.xlu0 %v415, 20
      %v606 = vpop.permute.xlu0 %605
      %607 = vrot.lane.b32.xlu0 %v418, 20
      %v608 = vpop.permute.xlu0 %607
      %609 = vrot.lane.b32.xlu0 %v420, 20
      %v610 = vpop.permute.xlu0 %609
      %611 = vrot.lane.b32.xlu0 %v423, 20
      %v612 = vpop.permute.xlu0 %611
      %613 = vrot.lane.b32.xlu0 %v425, 20
      %v614 = vpop.permute.xlu0 %613
      %615 = vrot.lane.b32.xlu0 %v428, 20
      %v616 = vpop.permute.xlu0 %615
      %617 = vrot.lane.b32.xlu0 %v430, 20
      %v618 = vpop.permute.xlu0 %617
      %619 = vrot.lane.b32.xlu0 %v433, 20
      %v620 = vpop.permute.xlu0 %619
      %621 = vrot.lane.b32.xlu0 %v435, 20
      %v622 = vpop.permute.xlu0 %621
      %623 = vrot.lane.b32.xlu0 %v438, 20
      %v624 = vpop.permute.xlu0 %623
      %625 = vrot.lane.b32.xlu0 %v440, 20
      %v626 = vpop.permute.xlu0 %625
      %627 = vrot.lane.b32.xlu0 %v443, 20
      %v628 = vpop.permute.xlu0 %627
      %629 = vrot.lane.b32.xlu0 %v445, 20
      %v630 = vpop.permute.xlu0 %629
      %631 = vrot.lane.b32.xlu0 %v600, 20
      %v632 = vpop.permute.xlu0 %631
      %633 = vrot.lane.b32.xlu0 %v602, 20
      %v634 = vpop.permute.xlu0 %633
      %653 = vrot.lane.b32.xlu0 %v268, 24
      %v654 = vpop.permute.xlu0 %653
      %655 = vrot.lane.b32.xlu0 %v269, 24
      %v656 = vpop.permute.xlu0 %655
      %657 = vrot.lane.b32.xlu0 %v271, 24
      %v658 = vpop.permute.xlu0 %657
      %659 = vrot.lane.b32.xlu0 %v272, 24
      %v660 = vpop.permute.xlu0 %659
      %661 = vrot.lane.b32.xlu0 %v274, 24
      %v662 = vpop.permute.xlu0 %661
      %663 = vrot.lane.b32.xlu0 %v275, 24
      %v664 = vpop.permute.xlu0 %663
      %665 = vrot.lane.b32.xlu0 %v277, 24
      %v666 = vpop.permute.xlu0 %665
      %667 = vrot.lane.b32.xlu0 %v278, 24
      %v668 = vpop.permute.xlu0 %667
      %669 = vrot.lane.b32.xlu0 %v280, 24
      %v670 = vpop.permute.xlu0 %669
      %671 = vrot.lane.b32.xlu0 %v281, 24
      %v672 = vpop.permute.xlu0 %671
      %673 = vrot.lane.b32.xlu0 %v283, 24
      %v674 = vpop.permute.xlu0 %673
      %675 = vrot.lane.b32.xlu0 %v284, 24
      %v676 = vpop.permute.xlu0 %675
      %677 = vrot.lane.b32.xlu0 %v286, 24
      %v678 = vpop.permute.xlu0 %677
      %679 = vrot.lane.b32.xlu0 %v287, 24
      %v680 = vpop.permute.xlu0 %679
      %681 = vrot.lane.b32.xlu0 %v289, 24
      %v682 = vpop.permute.xlu0 %681
      %683 = vrot.lane.b32.xlu0 %v290, 24
      %v684 = vpop.permute.xlu0 %683
      %v702 = vrot.slane %v289, 1
      %v703 = vrot.slane %v290, 1
      %v704 = vsel %vm316, %v702, %v703
      %v705 = vrot.slane %v291, 1
      %v706 = vsel %vm316, %v703, %v705
      %707 = vrot.lane.b32.xlu0 %v329, 28
      %v708 = vpop.permute.xlu0 %707
      %709 = vrot.lane.b32.xlu0 %v331, 28
      %v710 = vpop.permute.xlu0 %709
      %711 = vrot.lane.b32.xlu0 %v334, 28
      %v712 = vpop.permute.xlu0 %711
      %713 = vrot.lane.b32.xlu0 %v336, 28
      %v714 = vpop.permute.xlu0 %713
      %715 = vrot.lane.b32.xlu0 %v339, 28
      %v716 = vpop.permute.xlu0 %715
      %717 = vrot.lane.b32.xlu0 %v341, 28
      %v718 = vpop.permute.xlu0 %717
      %719 = vrot.lane.b32.xlu0 %v344, 28
      %v720 = vpop.permute.xlu0 %719
      %721 = vrot.lane.b32.xlu0 %v346, 28
      %v722 = vpop.permute.xlu0 %721
      %723 = vrot.lane.b32.xlu0 %v349, 28
      %v724 = vpop.permute.xlu0 %723
      %725 = vrot.lane.b32.xlu0 %v351, 28
      %v726 = vpop.permute.xlu0 %725
      %727 = vrot.lane.b32.xlu0 %v354, 28
      %v728 = vpop.permute.xlu0 %727
      %729 = vrot.lane.b32.xlu0 %v356, 28
      %v730 = vpop.permute.xlu0 %729
      %731 = vrot.lane.b32.xlu0 %v547, 28
      %v732 = vpop.permute.xlu0 %731
      %733 = vrot.lane.b32.xlu0 %v549, 28
      %v734 = vpop.permute.xlu0 %733
      %735 = vrot.lane.b32.xlu0 %v704, 28
      %v736 = vpop.permute.xlu0 %735
      %737 = vrot.lane.b32.xlu0 %v706, 28
      %v738 = vpop.permute.xlu0 %737
      %v755 = vrot.slane %v289, 2
      %v756 = vrot.slane %v290, 2
      %v757 = vsel %vm405, %v755, %v756
      %v758 = vrot.slane %v291, 2
      %v759 = vsel %vm405, %v756, %v758
      %760 = vrot.lane.b32.xlu0 %v418, 32
      %v761 = vpop.permute.xlu0 %760
      %762 = vrot.lane.b32.xlu0 %v420, 32
      %v763 = vpop.permute.xlu0 %762
      %764 = vrot.lane.b32.xlu0 %v423, 32
      %v765 = vpop.permute.xlu0 %764
      %766 = vrot.lane.b32.xlu0 %v425, 32
      %v767 = vpop.permute.xlu0 %766
      %768 = vrot.lane.b32.xlu0 %v428, 32
      %v769 = vpop.permute.xlu0 %768
      %770 = vrot.lane.b32.xlu0 %v430, 32
      %v771 = vpop.permute.xlu0 %770
      %772 = vrot.lane.b32.xlu0 %v433, 32
      %v773 = vpop.permute.xlu0 %772
      %774 = vrot.lane.b32.xlu0 %v435, 32
      %v775 = vpop.permute.xlu0 %774
      %776 = vrot.lane.b32.xlu0 %v438, 32
      %v777 = vpop.permute.xlu0 %776
      %778 = vrot.lane.b32.xlu0 %v440, 32
      %v779 = vpop.permute.xlu0 %778
      %780 = vrot.lane.b32.xlu0 %v443, 32
      %v781 = vpop.permute.xlu0 %780
      %782 = vrot.lane.b32.xlu0 %v445, 32
      %v783 = vpop.permute.xlu0 %782
      %784 = vrot.lane.b32.xlu0 %v600, 32
      %v785 = vpop.permute.xlu0 %784
      %786 = vrot.lane.b32.xlu0 %v602, 32
      %v787 = vpop.permute.xlu0 %786
      %788 = vrot.lane.b32.xlu0 %v757, 32
      %v789 = vpop.permute.xlu0 %788
      %790 = vrot.lane.b32.xlu0 %v759, 32
      %v791 = vpop.permute.xlu0 %790
      %vm808 = vcmask 31744
      %v809 = vsel %vm808, %v262, %v358
      %v810 = vsel %vm808, %v263, %v360
      %v811 = vsel %vm808, %v265, %v362
      %v812 = vsel %vm808, %v266, %v364
      %v813 = vsel %vm808, %v268, %v366
      %v814 = vsel %vm808, %v269, %v368
      %v815 = vsel %vm808, %v271, %v370
      %v816 = vsel %vm808, %v272, %v372
      %v817 = vsel %vm808, %v274, %v374
      %v818 = vsel %vm808, %v275, %v376
      %v819 = vsel %vm808, %v277, %v378
      %v820 = vsel %vm808, %v278, %v380
      %v821 = vsel %vm808, %v280, %v382
      %v822 = vsel %vm808, %v281, %v384
      %v823 = vsel %vm808, %v283, %v386
      %v824 = vsel %vm808, %v284, %v388
      %vm825 = vcmask 64512
      %v826 = vsel %vm825, %v809, %v447
      %v827 = vsel %vm825, %v810, %v449
      %v828 = vsel %vm825, %v811, %v451
      %v829 = vsel %vm825, %v812, %v453
      %v830 = vsel %vm825, %v813, %v455
      %v831 = vsel %vm825, %v814, %v457
      %v832 = vsel %vm825, %v815, %v459
      %v833 = vsel %vm825, %v816, %v461
      %v834 = vsel %vm825, %v817, %v463
      %v835 = vsel %vm825, %v818, %v465
      %v836 = vsel %vm825, %v819, %v467
      %v837 = vsel %vm825, %v820, %v469
      %v838 = vsel %vm825, %v821, %v471
      %v839 = vsel %vm825, %v822, %v473
      %v840 = vsel %vm825, %v823, %v475
      %v841 = vsel %vm825, %v824, %v477
      %vm842 = vcmask 97280
      %v843 = vsel %vm842, %v826, %v497
      %v844 = vsel %vm842, %v827, %v499
      %v845 = vsel %vm842, %v828, %v501
      %v846 = vsel %vm842, %v829, %v503
      %v847 = vsel %vm842, %v830, %v505
      %v848 = vsel %vm842, %v831, %v507
      %v849 = vsel %vm842, %v832, %v509
      %v850 = vsel %vm842, %v833, %v511
      %v851 = vsel %vm842, %v834, %v513
      %v852 = vsel %vm842, %v835, %v515
      %v853 = vsel %vm842, %v836, %v517
      %v854 = vsel %vm842, %v837, %v519
      %v855 = vsel %vm842, %v838, %v521
      %v856 = vsel %vm842, %v839, %v523
      %v857 = vsel %vm842, %v840, %v525
      %v858 = vsel %vm842, %v841, %v527
      %vm859 = vcmask 130048
      %v860 = vsel %vm859, %v843, %v551
      %v861 = vsel %vm859, %v844, %v553
      %v862 = vsel %vm859, %v845, %v555
      %v863 = vsel %vm859, %v846, %v557
      %v864 = vsel %vm859, %v847, %v559
      %v865 = vsel %vm859, %v848, %v561
      %v866 = vsel %vm859, %v849, %v563
      %v867 = vsel %vm859, %v850, %v565
      %v868 = vsel %vm859, %v851, %v567
      %v869 = vsel %vm859, %v852, %v569
      %v870 = vsel %vm859, %v853, %v571
      %v871 = vsel %vm859, %v854, %v573
      %v872 = vsel %vm859, %v855, %v575
      %v873 = vsel %vm859, %v856, %v577
      %v874 = vsel %vm859, %v857, %v579
      %v875 = vsel %vm859, %v858, %v581
      %vm876 = vcmask 162816
      %v877 = vsel %vm876, %v860, %v604
      %v878 = vsel %vm876, %v861, %v606
      %v879 = vsel %vm876, %v862, %v608
      %v880 = vsel %vm876, %v863, %v610
      %v881 = vsel %vm876, %v864, %v612
      %v882 = vsel %vm876, %v865, %v614
      %v883 = vsel %vm876, %v866, %v616
      %v884 = vsel %vm876, %v867, %v618
      %v885 = vsel %vm876, %v868, %v620
      %v886 = vsel %vm876, %v869, %v622
      %v887 = vsel %vm876, %v870, %v624
      %v888 = vsel %vm876, %v871, %v626
      %v889 = vsel %vm876, %v872, %v628
      %v890 = vsel %vm876, %v873, %v630
      %v891 = vsel %vm876, %v874, %v632
      %v892 = vsel %vm876, %v875, %v634
      %vm893 = vcmask 195584
      %v894 = vsel %vm893, %v877, %v654
      %v895 = vsel %vm893, %v878, %v656
      %v896 = vsel %vm893, %v879, %v658
      %v897 = vsel %vm893, %v880, %v660
      %v898 = vsel %vm893, %v881, %v662
      %v899 = vsel %vm893, %v882, %v664
      %v900 = vsel %vm893, %v883, %v666
      %v901 = vsel %vm893, %v884, %v668
      %v902 = vsel %vm893, %v885, %v670
      %v903 = vsel %vm893, %v886, %v672
      %v904 = vsel %vm893, %v887, %v674
      %v905 = vsel %vm893, %v888, %v676
      %v906 = vsel %vm893, %v889, %v678
      %v907 = vsel %vm893, %v890, %v680
      %v908 = vsel %vm893, %v891, %v682
      %v909 = vsel %vm893, %v892, %v684
      %vm910 = vcmask 228352
      %v911 = vsel %vm910, %v894, %v708
      %v912 = vsel %vm910, %v895, %v710
      %v913 = vsel %vm910, %v896, %v712
      %v914 = vsel %vm910, %v897, %v714
      %v915 = vsel %vm910, %v898, %v716
      %v916 = vsel %vm910, %v899, %v718
      %v917 = vsel %vm910, %v900, %v720
      %v918 = vsel %vm910, %v901, %v722
      %v919 = vsel %vm910, %v902, %v724
      %v920 = vsel %vm910, %v903, %v726
      %v921 = vsel %vm910, %v904, %v728
      %v922 = vsel %vm910, %v905, %v730
      %v923 = vsel %vm910, %v906, %v732
      %v924 = vsel %vm910, %v907, %v734
      %v925 = vsel %vm910, %v908, %v736
      %v926 = vsel %vm910, %v909, %v738
      %vm927 = vcmask 261120
      %v928 = vsel %vm927, %v911, %v761
      %v929 = vsel %vm927, %v912, %v763
      %v930 = vsel %vm927, %v913, %v765
      %v931 = vsel %vm927, %v914, %v767
      %v932 = vsel %vm927, %v915, %v769
      %v933 = vsel %vm927, %v916, %v771
      %v934 = vsel %vm927, %v917, %v773
      %v935 = vsel %vm927, %v918, %v775
      %v936 = vsel %vm927, %v919, %v777
      %v937 = vsel %vm927, %v920, %v779
      %v938 = vsel %vm927, %v921, %v781
      %v939 = vsel %vm927, %v922, %v783
      %v940 = vsel %vm927, %v923, %v785
      %v941 = vsel %vm927, %v924, %v787
      %v942 = vsel %vm927, %v925, %v789
      %v943 = vsel %vm927, %v926, %v791
      %v944 = vpack.c.bf16 %v929, %v928
      %v945 = vpack.c.bf16 %v931, %v930
      %v946 = vpack.c.bf16 %v933, %v932
      %v947 = vpack.c.bf16 %v935, %v934
      %v948 = vpack.c.bf16 %v937, %v936
      %v949 = vpack.c.bf16 %v939, %v938
      %v950 = vpack.c.bf16 %v941, %v940
      %v951 = vpack.c.bf16 %v943, %v942
      %v952 = vld [vmem:[%s1] sm:$0xf]
      %v953 = vld [vmem:[%s1 + $0x4] sm:$0xf]
      %v954 = vld [vmem:[%s1 + $0x8] sm:$0xf]
      %v955 = vld [vmem:[%s1 + $0xc] sm:$0xf]
      %v956 = vld [vmem:[%s1 + $0x10] sm:$0x3]
      %v962 = vunpack.c.l.b16 %v952
      %v963 = vunpack.c.l.b16 %v953
      %v964 = vunpack.c.l.b16 %v954
      %v965 = vunpack.c.l.b16 %v955
      %v966 = vunpack.c.l.b16 %v956
      %v967 = vpack.c.b16 %v963, %v962
      %v968 = vpack.c.b16 %v965, %v964
      %v969 = vpack.c.b16 %v966, %v966
      %vm972 = vcmask 293888
      %v974 = vsel %vm972, %v944, 0
      %v977 = vsel %vm972, %v945, 0
      %v980 = vsel %vm972, %v946, 0
      %v983 = vsel %vm972, %v947, 0
      %v986 = vsel %vm972, %v948, 0
      %v989 = vsel %vm972, %v949, 0
      %v992 = vsel %vm972, %v950, 0
      %v995 = vsel %vm972, %v951, 0
      %vm997 = vcmask 1041408
      %v999 = vsel %vm997, %v969, 0
      %1001 = vmatprep.subr.bf16.mxu0 0
      %1002 = vmatpush1.bf16.msra.mxu0 0
      %1003 = vmatprep.subr.bf16.mxu0 0
      %1004 = vmatpush1.bf16.msra.mxu0 0
      %1005 = vmatprep.subr.bf16.mxu0 0
      %1006 = vmatpush1.bf16.msra.mxu0 0
      %1007 = vmatprep.subr.bf16.mxu0 0
      %1008 = vmatpush1.bf16.msra.mxu0 0
      %1009 = vmatprep.subr.bf16.mxu0 0
      %1010 = vmatpush1.bf16.msra.mxu0 0
      %1011 = vmatprep.subr.bf16.mxu0 0
      %1012 = vmatpush1.bf16.msra.mxu0 %v999
      %1013 = vmatprep.subr.bf16.mxu0 0
      %1014 = vmatpush1.bf16.msra.mxu0 %v968
      %1015 = vmatprep.subr.bf16.mxu0 0
      %1016 = vmatpush1.bf16.msra.mxu0 %v967
      %1017 = vmatprep.subr.bf16.mxu0 0
      %1018 = vmatpush2.bf16.msra.mxu0 0
      %1019 = vmatprep.subr.bf16.mxu0 0
      %1020 = vmatpush2.bf16.msra.mxu0 0
      %1021 = vmatprep.subr.bf16.mxu0 0
      %1022 = vmatpush2.bf16.msra.mxu0 0
      %1023 = vmatprep.subr.bf16.mxu0 0
      %1024 = vmatpush2.bf16.msra.mxu0 0
      %1025 = vmatprep.subr.bf16.mxu0 0
      %1026 = vmatpush2.bf16.msra.mxu0 0
      %1027 = vmatprep.subr.bf16.mxu0 0
      %1028 = vmatpush2.bf16.msra.mxu0 0
      %1029 = vmatprep.subr.bf16.mxu0 0
      %1030 = vmatpush2.bf16.msra.mxu0 0
      %1031 = vmatprep.subr.bf16.mxu0 0
      %1032 = vmatpush2.bf16.msra.mxu0 0
      %1033 = vmatprep.mubr.bf16.mxu0 0
      %1034 = vmatmul.mubr.bf16.gmra.mxu0 %v974
      %v1035 = vpop.f32.mrf.mxu0
      %v1036 = vadd.f32 0.0, %v1035
      %v1037 = vpop.f32.mrf.mxu0
      %v1038 = vpop.f32.mrf.mxu0
      %v1039 = vadd.f32 0.0, %v1038
      %v1040 = vpop.f32.mrf.mxu0
      %1041 = vmatprep.mubr.bf16.mxu0 0
      %1042 = vmatmul.mubr.bf16.gmra.mxu0 %v977
      %v1043 = vpop.f32.mrf.mxu0
      %v1044 = vadd.f32 0.0, %v1043
      %v1045 = vpop.f32.mrf.mxu0
      %v1046 = vpop.f32.mrf.mxu0
      %v1047 = vadd.f32 0.0, %v1046
      %v1048 = vpop.f32.mrf.mxu0
      %1049 = vmatprep.mubr.bf16.mxu0 0
      %1050 = vmatmul.mubr.bf16.gmra.mxu0 %v980
      %v1051 = vpop.f32.mrf.mxu0
      %v1052 = vadd.f32 0.0, %v1051
      %v1053 = vpop.f32.mrf.mxu0
      %v1054 = vpop.f32.mrf.mxu0
      %v1055 = vadd.f32 0.0, %v1054
      %v1056 = vpop.f32.mrf.mxu0
      %1057 = vmatprep.mubr.bf16.mxu0 0
      %1058 = vmatmul.mubr.bf16.gmra.mxu0 %v983
      %v1059 = vpop.f32.mrf.mxu0
      %v1060 = vadd.f32 0.0, %v1059
      %v1061 = vpop.f32.mrf.mxu0
      %v1062 = vpop.f32.mrf.mxu0
      %v1063 = vadd.f32 0.0, %v1062
      %v1064 = vpop.f32.mrf.mxu0
      %1065 = vmatprep.mubr.bf16.mxu0 0
      %1066 = vmatmul.mubr.bf16.gmra.mxu0 %v986
      %v1067 = vpop.f32.mrf.mxu0
      %v1068 = vadd.f32 0.0, %v1067
      %v1069 = vpop.f32.mrf.mxu0
      %v1070 = vpop.f32.mrf.mxu0
      %v1071 = vadd.f32 0.0, %v1070
      %v1072 = vpop.f32.mrf.mxu0
      %1073 = vmatprep.mubr.bf16.mxu0 0
      %1074 = vmatmul.mubr.bf16.gmra.mxu0 %v989
      %v1075 = vpop.f32.mrf.mxu0
      %v1076 = vadd.f32 0.0, %v1075
      %v1077 = vpop.f32.mrf.mxu0
      %v1078 = vpop.f32.mrf.mxu0
      %v1079 = vadd.f32 0.0, %v1078
      %v1080 = vpop.f32.mrf.mxu0
      %1081 = vmatprep.mubr.bf16.mxu0 0
      %1082 = vmatmul.mubr.bf16.gmra.mxu0 %v992
      %v1083 = vpop.f32.mrf.mxu0
      %v1084 = vadd.f32 0.0, %v1083
      %v1085 = vpop.f32.mrf.mxu0
      %v1086 = vpop.f32.mrf.mxu0
      %v1087 = vadd.f32 0.0, %v1086
      %v1088 = vpop.f32.mrf.mxu0
      %1089 = vmatprep.mubr.bf16.mxu0 0
      %1090 = vmatmul.mubr.bf16.gmra.mxu0 %v995
      %v1091 = vpop.f32.mrf.mxu0
      %v1092 = vadd.f32 0.0, %v1091
      %v1093 = vpop.f32.mrf.mxu0
      %v1094 = vpop.f32.mrf.mxu0
      %v1095 = vadd.f32 0.0, %v1094
      %v1096 = vpop.f32.mrf.mxu0
      %1097 = vdwg.mxu0
      %vm1098 = vcmp.gt.f32.partialorder %v1036, 0.0
      %vm1099 = vcmp.gt.f32.partialorder %v1039, 0.0
      %vm1100 = vcmp.gt.f32.partialorder %v1044, 0.0
      %vm1101 = vcmp.gt.f32.partialorder %v1047, 0.0
      %vm1102 = vcmp.gt.f32.partialorder %v1052, 0.0
      %vm1103 = vcmp.gt.f32.partialorder %v1055, 0.0
      %vm1104 = vcmp.gt.f32.partialorder %v1060, 0.0
      %vm1105 = vcmp.gt.f32.partialorder %v1063, 0.0
      %vm1106 = vcmp.gt.f32.partialorder %v1068, 0.0
      %vm1107 = vcmp.gt.f32.partialorder %v1071, 0.0
      %vm1108 = vcmp.gt.f32.partialorder %v1076, 0.0
      %vm1109 = vcmp.gt.f32.partialorder %v1079, 0.0
      %vm1110 = vcmp.gt.f32.partialorder %v1084, 0.0
      %vm1111 = vcmp.gt.f32.partialorder %v1087, 0.0
      %vm1112 = vcmp.gt.f32.partialorder %v1092, 0.0
      %vm1113 = vcmp.gt.f32.partialorder %v1095, 0.0
      %v1114 = vmul.f32 %v1036, 0.2
      %v1115 = vmul.f32 %v1039, 0.2
      %v1116 = vmul.f32 %v1044, 0.2
      %v1117 = vmul.f32 %v1047, 0.2
      %v1118 = vmul.f32 %v1052, 0.2
      %v1119 = vmul.f32 %v1055, 0.2
      %v1120 = vmul.f32 %v1060, 0.2
      %v1121 = vmul.f32 %v1063, 0.2
      %v1122 = vmul.f32 %v1068, 0.2
      %v1123 = vmul.f32 %v1071, 0.2
      %v1124 = vmul.f32 %v1076, 0.2
      %v1125 = vmul.f32 %v1079, 0.2
      %v1126 = vmul.f32 %v1084, 0.2
      %v1127 = vmul.f32 %v1087, 0.2
      %v1128 = vmul.f32 %v1092, 0.2
      %v1129 = vmul.f32 %v1095, 0.2
      %v1130 = vsel %vm1098, %v1036, %v1114
      %v1131 = vsel %vm1099, %v1039, %v1115
      %v1132 = vsel %vm1100, %v1044, %v1116
      %v1133 = vsel %vm1101, %v1047, %v1117
      %v1134 = vsel %vm1102, %v1052, %v1118
      %v1135 = vsel %vm1103, %v1055, %v1119
      %v1136 = vsel %vm1104, %v1060, %v1120
      %v1137 = vsel %vm1105, %v1063, %v1121
      %v1138 = vsel %vm1106, %v1068, %v1122
      %v1139 = vsel %vm1107, %v1071, %v1123
      %v1140 = vsel %vm1108, %v1076, %v1124
      %v1141 = vsel %vm1109, %v1079, %v1125
      %v1142 = vsel %vm1110, %v1084, %v1126
      %v1143 = vsel %vm1111, %v1087, %v1127
      %v1144 = vsel %vm1112, %v1092, %v1128
      %v1145 = vsel %vm1113, %v1095, %v1129
      %1146 = vst.msk [vmem:[%s221] sm:$0xff] %vm808, %v1130
      %1147 = vst.msk [vmem:[%s221 + $0x8] sm:$0xff] %vm808, %v1131
      %1148 = vst.msk [vmem:[%s221 + $0x10] sm:$0xff] %vm808, %v1132
      %1149 = vst.msk [vmem:[%s221 + $0x18] sm:$0xff] %vm808, %v1133
      %1150 = vst.msk [vmem:[%s221 + $0x20] sm:$0xff] %vm808, %v1134
      %1151 = vst.msk [vmem:[%s221 + $0x28] sm:$0xff] %vm808, %v1135
      %1152 = vst.msk [vmem:[%s221 + $0x30] sm:$0xff] %vm808, %v1136
      %1153 = vst.msk [vmem:[%s221 + $0x38] sm:$0xff] %vm808, %v1137
      %1154 = vst.msk [vmem:[%s221 + $0x40] sm:$0xff] %vm808, %v1138
      %1155 = vst.msk [vmem:[%s221 + $0x48] sm:$0xff] %vm808, %v1139
      %1156 = vst.msk [vmem:[%s221 + $0x50] sm:$0xff] %vm808, %v1140
      %1157 = vst.msk [vmem:[%s221 + $0x58] sm:$0xff] %vm808, %v1141
      %1158 = vst.msk [vmem:[%s221 + $0x60] sm:$0xff] %vm808, %v1142
      %1159 = vst.msk [vmem:[%s221 + $0x68] sm:$0xff] %vm808, %v1143
      %1160 = vst.msk [vmem:[%s221 + $0x70] sm:$0xff] %vm808, %v1144
      %1161 = vst.msk [vmem:[%s221 + $0x78] sm:$0xff] %vm808, %v1145
      %v1162 = vsel %vm808, %v1130, 0.0
      %v1163 = vsel %vm808, %v1131, 0.0
      %v1164 = vadd.f32 %v1162, %v1163
      %v1165 = vsel %vm808, %v1132, 0.0
      %v1166 = vadd.f32 %v1164, %v1165
      %v1167 = vsel %vm808, %v1133, 0.0
      %v1168 = vadd.f32 %v1166, %v1167
      %v1169 = vsel %vm808, %v1134, 0.0
      %v1170 = vadd.f32 %v1168, %v1169
      %v1171 = vsel %vm808, %v1135, 0.0
      %v1172 = vadd.f32 %v1170, %v1171
      %v1173 = vsel %vm808, %v1136, 0.0
      %v1174 = vadd.f32 %v1172, %v1173
      %v1175 = vsel %vm808, %v1137, 0.0
      %v1176 = vadd.f32 %v1174, %v1175
      %v1177 = vsel %vm808, %v1138, 0.0
      %v1178 = vadd.f32 %v1176, %v1177
      %v1179 = vsel %vm808, %v1139, 0.0
      %v1180 = vadd.f32 %v1178, %v1179
      %v1181 = vsel %vm808, %v1140, 0.0
      %v1182 = vadd.f32 %v1180, %v1181
      %v1183 = vsel %vm808, %v1141, 0.0
      %v1184 = vadd.f32 %v1182, %v1183
      %v1185 = vsel %vm808, %v1142, 0.0
      %v1186 = vadd.f32 %v1184, %v1185
      %v1187 = vsel %vm808, %v1143, 0.0
      %v1188 = vadd.f32 %v1186, %v1187
      %v1189 = vsel %vm808, %v1144, 0.0
      %v1190 = vadd.f32 %v1188, %v1189
      %v1191 = vsel %vm808, %v1145, 0.0
      %v1192 = vadd.f32 %v1190, %v1191
      %v1193 = vrot.slane %v1192, 4
      %v1194 = vadd.f32 %v1192, %v1193
      %v1195 = vrot.slane %v1194, 2
      %v1196 = vadd.f32 %v1194, %v1195
      %v1197 = vrot.slane %v1196, 1
      %v1198 = vadd.f32 %v1196, %v1197
      %v1199 = vmul.f32 %v1130, %v1130
      %v1200 = vmul.f32 %v1131, %v1131
      %v1201 = vmul.f32 %v1132, %v1132
      %v1202 = vmul.f32 %v1133, %v1133
      %v1203 = vmul.f32 %v1134, %v1134
      %v1204 = vmul.f32 %v1135, %v1135
      %v1205 = vmul.f32 %v1136, %v1136
      %v1206 = vmul.f32 %v1137, %v1137
      %v1207 = vmul.f32 %v1138, %v1138
      %v1208 = vmul.f32 %v1139, %v1139
      %v1209 = vmul.f32 %v1140, %v1140
      %v1210 = vmul.f32 %v1141, %v1141
      %v1211 = vmul.f32 %v1142, %v1142
      %v1212 = vmul.f32 %v1143, %v1143
      %v1213 = vmul.f32 %v1144, %v1144
      %v1214 = vmul.f32 %v1145, %v1145
      %v1215 = vsel %vm808, %v1199, 0.0
      %v1216 = vsel %vm808, %v1200, 0.0
      %v1217 = vadd.f32 %v1215, %v1216
      %v1218 = vsel %vm808, %v1201, 0.0
      %v1219 = vadd.f32 %v1217, %v1218
      %v1220 = vsel %vm808, %v1202, 0.0
      %v1221 = vadd.f32 %v1219, %v1220
      %v1222 = vsel %vm808, %v1203, 0.0
      %v1223 = vadd.f32 %v1221, %v1222
      %v1224 = vsel %vm808, %v1204, 0.0
      %v1225 = vadd.f32 %v1223, %v1224
      %v1226 = vsel %vm808, %v1205, 0.0
      %v1227 = vadd.f32 %v1225, %v1226
      %v1228 = vsel %vm808, %v1206, 0.0
      %v1229 = vadd.f32 %v1227, %v1228
      %v1230 = vsel %vm808, %v1207, 0.0
      %v1231 = vadd.f32 %v1229, %v1230
      %v1232 = vsel %vm808, %v1208, 0.0
      %v1233 = vadd.f32 %v1231, %v1232
      %v1234 = vsel %vm808, %v1209, 0.0
      %v1235 = vadd.f32 %v1233, %v1234
      %v1236 = vsel %vm808, %v1210, 0.0
      %v1237 = vadd.f32 %v1235, %v1236
      %v1238 = vsel %vm808, %v1211, 0.0
      %v1239 = vadd.f32 %v1237, %v1238
      %v1240 = vsel %vm808, %v1212, 0.0
      %v1241 = vadd.f32 %v1239, %v1240
      %v1242 = vsel %vm808, %v1213, 0.0
      %v1243 = vadd.f32 %v1241, %v1242
      %v1244 = vsel %vm808, %v1214, 0.0
      %v1245 = vadd.f32 %v1243, %v1244
      %v1246 = vrot.slane %v1245, 4
      %v1247 = vadd.f32 %v1245, %v1246
      %v1248 = vrot.slane %v1247, 2
      %v1249 = vadd.f32 %v1247, %v1248
      %v1250 = vrot.slane %v1249, 1
      %v1251 = vadd.f32 %v1249, %v1250
      %vm1252 = vcmask 1040384
      %v1253 = vsel %vm1252, %v1198, %v1251
      %vm1254 = vcmask 25600
      %1255 = vst.msk [vmem:[%s230] sm:$0x3] %vm1254, %v1253
      %s1256 = smul.u32 8, %s20
      %p1257 = scmp.lt.s32.totalorder %s19, 1
      %s1258 = scalar_select %p1257, %s19, 1
      %p1259 = scmp.lt.s32.totalorder %s1256, 15
      %s1260 = scalar_select %p1259, %s1256, 15
      %s1261 = smul.addr %s1260, 2
      %s1262 = smul.addr %s1258, 32
      %s1263 = sadd.s32 %s1261, %s1262
      %s1264 = smul.addr %s1263, 8
      %s1265 = scalar_lea.vmem %s2, %s1264
      %p1266 = scmp.lt.s32.totalorder %s19, 1
      %s1267 = scalar_select %p1266, %s19, 1
      %p1268 = scmp.lt.s32.totalorder %s20, 1
      %s1269 = scalar_select %p1268, %s20, 1
      %s1270 = smul.addr %s1267, 2
      %s1271 = sadd.s32 %s1269, %s1270
      %s1272 = smul.addr %s1271, 2
      %s1273 = scalar_lea.vmem %s3, %s1272
      // Predicated region
      $region29: #{resblock_forward.10} parent=27 // pred_check
        %p1274 = pneg %p96
      $region30: #{resblock_forward.10} parent=27 // pred_check_branch
        %1276 = sbr.rel (%p1274) target = $region32
      $region31: #{resblock_forward.10} parent=27 // pred_region
        %s1277 = smul.u32 8, %s20
      $region32: #{resblock_forward.10} parent=27 // pred_fallthru
        _
      // Predicated region
      $region33: #{resblock_forward.10} parent=27 // pred_check
        %p1278 = pneg %p124
      $region34: #{resblock_forward.10} parent=27 // pred_check_branch
        %1280 = sbr.rel (%p1278) target = $region36
      $region35: #{resblock_forward.10} parent=27 // pred_region
        _
      $region36: #{resblock_forward.10} parent=27 // pred_fallthru
        _
    $region28: #{resblock_forward.10} parent=5 // pred_fallthru
      _
    %p1281 = scmp.le.s32.totalorder 2, %s10
    // Predicated region
    $region37: #{resblock_forward.10} parent=5 // pred_check
      %p1282 = pneg %p1281
    $region38: #{resblock_forward.10} parent=5 // pred_check_branch
      %1284 = sbr.rel (%p1282) target = $region40
    $region39: #{resblock_forward.10} parent=5 // pred_region
      %s1285 = ssub.s32 %s10, 2
      // Predicated region
      $region41: #{resblock_forward.10} parent=39 // pred_check
        %p1286 = pneg %p102
      $region42: #{resblock_forward.10} parent=39 // pred_check_branch
        %1288 = sbr.rel (%p1286) target = $region44
      $region43: #{resblock_forward.10} parent=39 // pred_region
        %s1289 = smul.u32 8, %s22
        %p1290 = scmp.lt.s32.totalorder %s21, 1
        %s1291 = scalar_select %p1290, %s21, 1
        %p1292 = scmp.lt.s32.totalorder %s1289, 15
        %s1293 = scalar_select %p1292, %s1289, 15
        %s1294 = smul.addr %s1293, 2
        %s1295 = smul.addr %s1291, 32
        %s1296 = sadd.s32 %s1294, %s1295
        %s1297 = smul.addr %s1296, 8
        %s1298 = scalar_lea.vmem %s2, %s1297
      $region44: #{resblock_forward.10} parent=39 // pred_fallthru
        _
      // Predicated region
      $region45: #{resblock_forward.10} parent=39 // pred_check
        %p1299 = pneg %p130
      $region46: #{resblock_forward.10} parent=39 // pred_check_branch
        %1301 = sbr.rel (%p1299) target = $region48
      $region47: #{resblock_forward.10} parent=39 // pred_region
        %p1302 = scmp.lt.s32.totalorder %s21, 1
        %s1303 = scalar_select %p1302, %s21, 1
        %p1304 = scmp.lt.s32.totalorder %s22, 1
        %s1305 = scalar_select %p1304, %s22, 1
        %s1306 = smul.addr %s1303, 2
        %s1307 = sadd.s32 %s1305, %s1306
        %s1308 = smul.addr %s1307, 2
        %s1309 = scalar_lea.vmem %s3, %s1308
      $region48: #{resblock_forward.10} parent=39 // pred_fallthru
        _
    $region40: #{resblock_forward.10} parent=5 // pred_fallthru
      _
  $region6: #{resblock_forward.10} parent=0 // loop_footer
    %s14 = sadd.s32 1, %s10
  $region7: #{resblock_forward.10} parent=0 // loop_footer_branch
    %9 = sbr.rel target = $region3
  $region8: #{resblock_forward.10} parent=0 // loop_exit
    _

</llo_original>
